<compile_context>
chip_gen: v5e
topology: v5e:2x2
jax: 0.10.0
libtpu: 0.0.40
codegen_flags: <defaults>
</compile_context>

<pallas_src>
import functools

import numpy as np
import jax
import jax.numpy as jnp
from jax import lax
from jax.experimental import pallas as pl
from jax.experimental.pallas import tpu as pltpu


MATMUL_DTYPE = jnp.bfloat16          # MXU operand dtype; accumulation stays f32
VMEM_LIMIT = 32 * 1024 * 1024        # explicit, safe on v5e/v6e/v7x


def _round_up(x, m):
    return (x + m - 1) // m * m


# ----------------------------------------------------------------------------
# Kernel 1: ConvTranspose2d(k=2, s=2) == per-input-pixel matmul
# ----------------------------------------------------------------------------
def _convt_pixel_kernel(x_ref, w_ref, b_ref, o_ref):
    o_ref[...] = (
        jnp.dot(x_ref[...], w_ref[...], preferred_element_type=jnp.float32)
        + b_ref[...]
    ).astype(o_ref.dtype)


def convtranspose2x2(x_rows, w_mat, b_vec):
    m, cin = x_rows.shape
    cout4 = w_mat.shape[1]
    # >=4 grid steps (v7x megacore / pipelining), block rows capped at 512.
    bm = min(512, max(8, _round_up(pl.cdiv(m, 4), 8)))
    m_pad = _round_up(m, bm)
    if m_pad != m:                                   # no silent row drop
        x_rows = jnp.pad(x_rows, ((0, m_pad - m), (0, 0)))
    out = pl.pallas_call(
        _convt_pixel_kernel,
        out_shape=jax.ShapeDtypeStruct((m_pad, cout4), MATMUL_DTYPE),
        grid=(m_pad // bm,),
        in_specs=[pl.BlockSpec((bm, cin), lambda i: (i, 0)),
                  pl.BlockSpec((cin, cout4), lambda i: (0, 0)),
                  pl.BlockSpec((1, cout4), lambda i: (0, 0))],
        out_specs=pl.BlockSpec((bm, cout4), lambda i: (i, 0)),
        compiler_params=pltpu.CompilerParams(
            dimension_semantics=("parallel",),
            vmem_limit_bytes=VMEM_LIMIT),
    )(x_rows.astype(MATMUL_DTYPE), w_mat.astype(MATMUL_DTYPE), b_vec)
    return out[:m] if m_pad != m else out


# ----------------------------------------------------------------------------
# Kernel 2: fused DoubleConv (conv3x3 -> GN -> ReLU) x 2, one sample per step
# ----------------------------------------------------------------------------
def _double_conv_kernel(x_ref, wa_ref, wb_ref, mask_ref,
                        g1_ref, b1_ref, g2_ref, b2_ref,
                        o_ref, pad2_ref, *, wp, nw, valid, groups, eps):
    f32 = jnp.float32
    cmid = pad2_ref.shape[0]
    cout = o_ref.shape[1]
    cg1 = cmid // groups
    cg2 = cout // groups
    mask = mask_ref[...]                              # (1, nw): 1 at real pixels

    # ---- stage 1: 3x3 conv as 9 shifted contiguous lane-slice matmuls ------
    acc = None
    for t in range(9):
        off = (t // 3) * wp + (t % 3)
        part = jnp.dot(wa_ref[t], x_ref[0, :, off:off + nw],
                       preferred_element_type=f32)    # (cmid, nw)
        acc = part if acc is None else acc + part

    # stage-2 padded-input scratch: border + junk lanes must be exactly zero
    pad2_ref[...] = jnp.zeros_like(pad2_ref)

    # ---- stage 1: GroupNorm (centered variance) + ReLU, write x1 to VMEM ---
    inv1 = 1.0 / float(cg1 * valid)
    for g in range(groups):
        sl = slice(g * cg1, (g + 1) * cg1)
        blk = acc[sl]
        mu = jnp.sum(blk * mask) * inv1
        d = blk - mu
        var = jnp.sum(d * d * mask) * inv1
        y = d * lax.rsqrt(var + eps) * g1_ref[sl] + b1_ref[sl]
        y = jnp.maximum(y, 0.0) * mask                # zero the pad columns
        # interior of the zero-padded x1 image starts at lane wp+1
        pad2_ref[sl, wp + 1:wp + 1 + nw] = y.astype(pad2_ref.dtype)

    # ---- stage 2: 3x3 conv on the in-VMEM padded x1 -------------------------
    acc2 = None
    for t in range(9):
        off = (t // 3) * wp + (t % 3)
        part = jnp.dot(wb_ref[t], pad2_ref[:, off:off + nw],
                       preferred_element_type=f32)    # (cout, nw)
        acc2 = part if acc2 is None else acc2 + part

    # ---- stage 2: GroupNorm + ReLU, channel-major (== NCHW) store -----------
    inv2 = 1.0 / float(cg2 * valid)
    for g in range(groups):
        sl = slice(g * cg2, (g + 1) * cg2)
        blk = acc2[sl]
        mu = jnp.sum(blk * mask) * inv2
        d = blk - mu
        var = jnp.sum(d * d * mask) * inv2
        y = d * lax.rsqrt(var + eps) * g2_ref[sl] + b2_ref[sl]
        o_ref[0, sl, :] = jnp.maximum(y, 0.0)


def double_conv_fused(x_flat, wa, wb, g1, b1, g2, b2, groups, h2, w2, eps=1e-5):
    n, cin, lin = x_flat.shape
    cmid = wa.shape[1]
    cout = wb.shape[1]
    assert cmid == cout, "DoubleConv here has mid == out"
    assert cmid % groups == 0
    wp = w2 + 2
    nw = h2 * wp                                      # over-computed row width
    assert lin % 128 == 0 and lin >= nw + 2 * wp + 2
    lpad2 = _round_up(nw + 2 * wp + 2, 128)           # scratch lane width

    # lane k = y*wp + x is a real output pixel iff x < w2
    col = np.arange(nw)
    mask = jnp.asarray(((col % wp) < w2).astype(np.float32)).reshape(1, nw)

    kern = functools.partial(_double_conv_kernel, wp=wp, nw=nw,
                             valid=h2 * w2, groups=groups, eps=eps)
    return pl.pallas_call(
        kern,
        out_shape=jax.ShapeDtypeStruct((n, cout, nw), jnp.float32),
        grid=(n,),
        in_specs=[pl.BlockSpec((1, cin, lin), lambda i: (i, 0, 0)),
                  pl.BlockSpec((9, cmid, cin), lambda i: (0, 0, 0)),
                  pl.BlockSpec((9, cout, cmid), lambda i: (0, 0, 0)),
                  pl.BlockSpec((1, nw), lambda i: (0, 0)),
                  pl.BlockSpec((cmid, 1), lambda i: (0, 0)),
                  pl.BlockSpec((cmid, 1), lambda i: (0, 0)),
                  pl.BlockSpec((cout, 1), lambda i: (0, 0)),
                  pl.BlockSpec((cout, 1), lambda i: (0, 0))],
        out_specs=pl.BlockSpec((1, cout, nw), lambda i: (i, 0, 0)),
        scratch_shapes=[pltpu.VMEM((cmid, lpad2), MATMUL_DTYPE)],
        compiler_params=pltpu.CompilerParams(
            dimension_semantics=("parallel",),
            vmem_limit_bytes=VMEM_LIMIT),
    )(x_flat.astype(MATMUL_DTYPE), wa.astype(MATMUL_DTYPE),
      wb.astype(MATMUL_DTYPE), mask,
      g1.reshape(cmid, 1), b1.reshape(cmid, 1),
      g2.reshape(cout, 1), b2.reshape(cout, 1))


# ----------------------------------------------------------------------------
# Up.forward composition (layout glue stays in plain JAX)
# ----------------------------------------------------------------------------
def up_forward(params, x, guidance, cfg):
    n, cin, h, w = x.shape
    assert cin == cfg["in_channels"]
    cup = cfg["in_channels"] - cfg["guidance_channels"]
    cmid = cfg["out_channels"]
    groups = cmid // 16
    h2, w2 = 2 * h, 2 * w
    hp, wp = h2 + 2, w2 + 2

    # --- self.up: ConvTranspose2d(cin, cup, k=2, s=2) ------------------------
    rows = jnp.transpose(x, (0, 2, 3, 1)).reshape(n * h * w, cin)
    y = convtranspose2x2(rows, params["up_w"], params["up_b"])  # (n*h*w, 4*cup) bf16
    # pixel shuffle straight to NCHW; columns ordered (di, dj, oc)
    y = y.reshape(n, h, w, 2, 2, cup)
    y = jnp.transpose(y, (0, 5, 1, 3, 2, 4)).reshape(n, cup, h2, w2)

    # --- repeat guidance 'B C H W -> (B T) C H W' and concat on channels -----
    if guidance is not None:
        bg = guidance.shape[0]
        assert n % bg == 0, "activation batch must be a multiple of guidance batch"
        g = jnp.repeat(guidance.astype(y.dtype), n // bg, axis=0)
        y = jnp.concatenate([y, g], axis=1)                    # (n, in_ch, h2, w2)

    c_dc = y.shape[1]
    # zero-pad spatial border, flatten channel-major, zero-pad lanes to 128x
    lin = _round_up(hp * wp + 2, 128)
    yp = jnp.pad(y, ((0, 0), (0, 0), (1, 1), (1, 1))).reshape(n, c_dc, hp * wp)
    yp = jnp.pad(yp, ((0, 0), (0, 0), (0, lin - hp * wp)))

    out = double_conv_fused(yp, params["conv1_w"], params["conv2_w"],
                            params["gn1_g"], params["gn1_b"],
                            params["gn2_g"], params["gn2_b"],
                            groups, h2, w2)
    # drop the over-computed pad columns: (n, cout, h2*wp) -> NCHW
    return out.reshape(n, -1, h2, wp)[:, :, :, :w2]


# ----------------------------------------------------------------------------
# deterministic parameter init (shapes mirror the PyTorch __init__)
# ----------------------------------------------------------------------------
def init_params(key, in_channels, out_channels, guidance_channels):
    cup = in_channels - guidance_channels
    mid = out_channels
    ks = jax.random.split(key, 8)

    # ConvTranspose2d weight (torch: (Cin, Cup, 2, 2)) -> (Cin, 4*Cup),
    # column order (di, dj, oc); per-channel bias tiled across the 4 taps.
    w_up = 0.05 * jax.random.normal(ks[0], (in_channels, cup, 2, 2), jnp.float32)
    up_w = jnp.transpose(w_up, (0, 2, 3, 1)).reshape(in_channels, 4 * cup)
    b_up = 0.05 * jax.random.normal(ks[1], (cup,), jnp.float32)
    up_b = jnp.tile(b_up, 4).reshape(1, 4 * cup)

    # Conv2d weights (torch: (Cout, Cin, 3, 3)) -> tap-major (9, Cout, Cin);
    # bias=False in the torch module.
    w1 = 0.05 * jax.random.normal(ks[2], (mid, in_channels, 3, 3), jnp.float32)
    conv1_w = jnp.transpose(w1, (2, 3, 0, 1)).reshape(9, mid, in_channels)
    w2 = 0.05 * jax.random.normal(ks[3], (out_channels, mid, 3, 3), jnp.float32)
    conv2_w = jnp.transpose(w2, (2, 3, 0, 1)).reshape(9, out_channels, mid)

    return dict(up_w=up_w, up_b=up_b, conv1_w=conv1_w, conv2_w=conv2_w,
                gn1_g=1.0 + 0.1 * jax.random.normal(ks[4], (mid,), jnp.float32),
                gn1_b=0.1 * jax.random.normal(ks[5], (mid,), jnp.float32),
                gn2_g=1.0 + 0.1 * jax.random.normal(ks[6], (mid,), jnp.float32),
                gn2_b=0.1 * jax.random.normal(ks[7], (mid,), jnp.float32))


# ----------------------------------------------------------------------------
# pure-JAX reference (same bf16 operand rounding) for a correctness self-check
# ----------------------------------------------------------------------------
def _bf16_round(x):
    return x.astype(jnp.bfloat16).astype(jnp.float32)


def _group_norm_ref(x, groups, gamma, beta, eps=1e-5):
    n, c, h, w = x.shape
    xg = x.reshape(n, groups, c // groups, h, w)
    mu = jnp.mean(xg, axis=(2, 3, 4), keepdims=True)
    var = jnp.mean((xg - mu) ** 2, axis=(2, 3, 4), keepdims=True)
    xn = ((xg - mu) * lax.rsqrt(var + eps)).reshape(n, c, h, w)
    return xn * gamma.reshape(1, c, 1, 1) + beta.reshape(1, c, 1, 1)


def reference_forward(params, x, guidance, cfg):
    n, cin, h, w = x.shape
    cup = cfg["in_channels"] - cfg["guidance_channels"]
    mid = cfg["out_channels"]
    groups = mid // 16
    wt = _bf16_round(params["up_w"]).reshape(cin, 2, 2, cup)
    y6 = jnp.einsum('nkyx,kdec->ncydxe', _bf16_round(x), wt)
    y = y6.reshape(n, cup, 2 * h, 2 * w) \
        + params["up_b"][0, :cup].reshape(1, cup, 1, 1)
    y = _bf16_round(y)
    if guidance is not None:
        g = jnp.repeat(_bf16_round(guidance), n // guidance.shape[0], axis=0)
        y = jnp.concatenate([y, g], axis=1)
    w1 = _bf16_round(jnp.transpose(
        params["conv1_w"].reshape(3, 3, mid, -1), (2, 3, 0, 1)))
    w2 = _bf16_round(jnp.transpose(
        params["conv2_w"].reshape(3, 3, mid, mid), (2, 3, 0, 1)))
    dn = ('NCHW', 'OIHW', 'NCHW')
    x1 = lax.conv_general_dilated(y, w1, (1, 1), ((1, 1), (1, 1)),
                                  dimension_numbers=dn)
    x1 = jnp.maximum(_group_norm_ref(x1, groups, params["gn1_g"],
                                     params["gn1_b"]), 0.0)
    x1 = _bf16_round(x1)
    x2 = lax.conv_general_dilated(x1, w2, (1, 1), ((1, 1), (1, 1)),
                                  dimension_numbers=dn)
    return jnp.maximum(_group_norm_ref(x2, groups, params["gn2_g"],
                                       params["gn2_b"]), 0.0)


# ----------------------------------------------------------------------------
if __name__ == "__main__":
    IN_CH, OUT_CH, GUID_CH = 64, 32, 16        # Up(in, out, guidance)
    BG, T, H, W = 2, 2, 8, 8                   # x batch = BG*T, guidance batch = BG
    N = BG * T
    cfg = dict(in_channels=IN_CH, out_channels=OUT_CH, guidance_channels=GUID_CH)

    root = jax.random.PRNGKey(0)
    kp, kx, kg = jax.random.split(root, 3)
    params = init_params(kp, IN_CH, OUT_CH, GUID_CH)
    x = jax.random.normal(kx, (N, IN_CH, H, W), jnp.float32)
    guidance = jax.random.normal(kg, (BG, GUID_CH, 2 * H, 2 * W), jnp.float32)

    fwd = jax.jit(functools.partial(up_forward, params, cfg=cfg))
    out = jax.block_until_ready(fwd(x, guidance))
    assert out.shape == (N, OUT_CH, 2 * H, 2 * W), out.shape
    assert bool(jnp.all(jnp.isfinite(out)))

    ref = reference_forward(params, x, guidance, cfg)
    np.testing.assert_allclose(np.asarray(out), np.asarray(ref),
                               atol=3e-2, rtol=3e-2)
    print("KERNEL_OK")
</pallas_src>

<mosaic_0001>
module attributes {stable_mosaic.version = 11 : i64} {
  func.func @_convt_pixel_kernel(%arg0: i32, %arg1: memref<64x64xbf16, #tpu.memory_space<vmem>>, %arg2: memref<64x192xbf16, #tpu.memory_space<vmem>>, %arg3: memref<1x192xf32, #tpu.memory_space<vmem>>, %arg4: memref<64x192xbf16, #tpu.memory_space<vmem>>) attributes {dimension_semantics = [#tpu.dimension_semantics<parallel>], iteration_bounds = array<i64: 4>, scalar_prefetch = 0 : i64, scratch_operands = 0 : i64, tpu.core_type = #tpu.core_type<tc>, window_params = [{transform_indices = @transform_0, window_bounds = array<i64: 64, 64>}, {pipeline_mode = #tpu.pipeline_mode<synchronous>, transform_indices = @transform_1, window_bounds = array<i64: 64, 192>}, {pipeline_mode = #tpu.pipeline_mode<synchronous>, transform_indices = @transform_2, window_bounds = array<i64: 1, 192>}, {transform_indices = @transform_3, window_bounds = array<i64: 64, 192>}]} {
    %c0 = arith.constant 0 : index
    %c0_0 = arith.constant 0 : index
    %0 = vector.load %arg1[%c0, %c0_0] : memref<64x64xbf16, #tpu.memory_space<vmem>>, vector<64x64xbf16>
    %c0_1 = arith.constant 0 : index
    %c0_2 = arith.constant 0 : index
    %1 = vector.load %arg2[%c0_1, %c0_2] : memref<64x192xbf16, #tpu.memory_space<vmem>>, vector<64x192xbf16>
    %cst = arith.constant dense<0.000000e+00> : vector<64x192xf32>
    %2 = tpu.matmul %0, %1, %cst {dimension_numbers = #tpu.dot_dimension_numbers<[1], [0], [0], [1], [0, 0, 1, 1], [], []>} : vector<64x64xbf16>, vector<64x192xbf16>, vector<64x192xf32> -> vector<64x192xf32>
    %c0_3 = arith.constant 0 : index
    %c0_4 = arith.constant 0 : index
    %3 = vector.load %arg3[%c0_3, %c0_4] : memref<1x192xf32, #tpu.memory_space<vmem>>, vector<1x192xf32>
    %4 = vector.broadcast %3 : vector<1x192xf32> to vector<64x192xf32>
    %5 = arith.addf %2, %4 : vector<64x192xf32>
    %6 = arith.truncf %5 : vector<64x192xf32> to vector<64x192xbf16>
    %c0_5 = arith.constant 0 : index
    %c0_6 = arith.constant 0 : index
    %7 = vector.load %arg4[%c0_5, %c0_6] : memref<64x192xbf16, #tpu.memory_space<vmem>>, vector<64x192xbf16>
    tpu.vector_store %arg4[%c0_5, %c0_6], %6 {strides = array<i32>} : memref<64x192xbf16, #tpu.memory_space<vmem>>, vector<64x192xbf16>,
    return
  }
  func.func @transform_0(%arg0: i32) -> (i32, i32) {
    %c0_i32 = arith.constant 0 : i32
    %c0_i32_0 = arith.constant 0 : i32
    return %arg0, %c0_i32 : i32, i32
  }
  func.func @transform_1(%arg0: i32) -> (i32, i32) {
    %c0_i32 = arith.constant 0 : i32
    %c0_i32_0 = arith.constant 0 : i32
    %c0_i32_1 = arith.constant 0 : i32
    return %c0_i32, %c0_i32_0 : i32, i32
  }
  func.func @transform_2(%arg0: i32) -> (i32, i32) {
    %c0_i32 = arith.constant 0 : i32
    %c0_i32_0 = arith.constant 0 : i32
    %c0_i32_1 = arith.constant 0 : i32
    return %c0_i32, %c0_i32_0 : i32, i32
  }
  func.func @transform_3(%arg0: i32) -> (i32, i32) {
    %c0_i32 = arith.constant 0 : i32
    %c0_i32_0 = arith.constant 0 : i32
    return %arg0, %c0_i32 : i32, i32
  }
}

module attributes {stable_mosaic.version = 11 : i64} {
  func.func @_double_conv_kernel(%arg0: i32, %arg1: memref<1x64x384xbf16, #tpu.memory_space<vmem>>, %arg2: memref<9x32x64xbf16, #tpu.memory_space<vmem>>, %arg3: memref<9x32x32xbf16, #tpu.memory_space<vmem>>, %arg4: memref<1x288xf32, #tpu.memory_space<vmem>>, %arg5: memref<32x1xf32, #tpu.memory_space<vmem>>, %arg6: memref<32x1xf32, #tpu.memory_space<vmem>>, %arg7: memref<32x1xf32, #tpu.memory_space<vmem>>, %arg8: memref<32x1xf32, #tpu.memory_space<vmem>>, %arg9: memref<1x32x288xf32, #tpu.memory_space<vmem>>, %arg10: memref<32x384xbf16, #tpu.memory_space<vmem>>) attributes {dimension_semantics = [#tpu.dimension_semantics<parallel>], iteration_bounds = array<i64: 4>, scalar_prefetch = 0 : i64, scratch_operands = 1 : i64, tpu.core_type = #tpu.core_type<tc>, window_params = [{transform_indices = @transform_0, window_bounds = array<i64: 1, 64, 384>}, {pipeline_mode = #tpu.pipeline_mode<synchronous>, transform_indices = @transform_1, window_bounds = array<i64: 9, 32, 64>}, {pipeline_mode = #tpu.pipeline_mode<synchronous>, transform_indices = @transform_2, window_bounds = array<i64: 9, 32, 32>}, {pipeline_mode = #tpu.pipeline_mode<synchronous>, transform_indices = @transform_3, window_bounds = array<i64: 1, 288>}, {pipeline_mode = #tpu.pipeline_mode<synchronous>, transform_indices = @transform_4, window_bounds = array<i64: 32, 1>}, {pipeline_mode = #tpu.pipeline_mode<synchronous>, transform_indices = @transform_5, window_bounds = array<i64: 32, 1>}, {pipeline_mode = #tpu.pipeline_mode<synchronous>, transform_indices = @transform_6, window_bounds = array<i64: 32, 1>}, {pipeline_mode = #tpu.pipeline_mode<synchronous>, transform_indices = @transform_7, window_bounds = array<i64: 32, 1>}, {transform_indices = @transform_8, window_bounds = array<i64: 1, 32, 288>}]} {
    %c0 = arith.constant 0 : index
    %c0_0 = arith.constant 0 : index
    %0 = vector.load %arg4[%c0, %c0_0] : memref<1x288xf32, #tpu.memory_space<vmem>>, vector<1x288xf32>
    %c0_1 = arith.constant 0 : index
    %c0_2 = arith.constant 0 : index
    %c0_3 = arith.constant 0 : index
    %1 = vector.load %arg2[%c0_1, %c0_2, %c0_3] : memref<9x32x64xbf16, #tpu.memory_space<vmem>>, vector<1x32x64xbf16>
    %2 = vector.shape_cast %1 : vector<1x32x64xbf16> to vector<32x64xbf16>
    %c0_4 = arith.constant 0 : index
    %c0_5 = arith.constant 0 : index
    %c0_6 = arith.constant 0 : index
    %3 = vector.load %arg1[%c0_4, %c0_5, %c0_6] : memref<1x64x384xbf16, #tpu.memory_space<vmem>>, vector<1x64x288xbf16>
    %4 = vector.shape_cast %3 : vector<1x64x288xbf16> to vector<64x288xbf16>
    %cst = arith.constant dense<0.000000e+00> : vector<32x288xf32>
    %5 = tpu.matmul %2, %4, %cst {dimension_numbers = #tpu.dot_dimension_numbers<[1], [0], [0], [1], [0, 0, 1, 1], [], []>} : vector<32x64xbf16>, vector<64x288xbf16>, vector<32x288xf32> -> vector<32x288xf32>
    %c1 = arith.constant 1 : index
    %c0_7 = arith.constant 0 : index
    %c0_8 = arith.constant 0 : index
    %6 = vector.load %arg2[%c1, %c0_7, %c0_8] : memref<9x32x64xbf16, #tpu.memory_space<vmem>>, vector<1x32x64xbf16>
    %7 = vector.shape_cast %6 : vector<1x32x64xbf16> to vector<32x64xbf16>
    %c0_9 = arith.constant 0 : index
    %c0_10 = arith.constant 0 : index
    %c1_11 = arith.constant 1 : index
    %8 = vector.load %arg1[%c0_9, %c0_10, %c1_11] : memref<1x64x384xbf16, #tpu.memory_space<vmem>>, vector<1x64x288xbf16>
    %9 = vector.shape_cast %8 : vector<1x64x288xbf16> to vector<64x288xbf16>
    %cst_12 = arith.constant dense<0.000000e+00> : vector<32x288xf32>
    %10 = tpu.matmul %7, %9, %cst_12 {dimension_numbers = #tpu.dot_dimension_numbers<[1], [0], [0], [1], [0, 0, 1, 1], [], []>} : vector<32x64xbf16>, vector<64x288xbf16>, vector<32x288xf32> -> vector<32x288xf32>
    %11 = arith.addf %5, %10 : vector<32x288xf32>
    %c2 = arith.constant 2 : index
    %c0_13 = arith.constant 0 : index
    %c0_14 = arith.constant 0 : index
    %12 = vector.load %arg2[%c2, %c0_13, %c0_14] : memref<9x32x64xbf16, #tpu.memory_space<vmem>>, vector<1x32x64xbf16>
    %13 = vector.shape_cast %12 : vector<1x32x64xbf16> to vector<32x64xbf16>
    %c0_15 = arith.constant 0 : index
    %c0_16 = arith.constant 0 : index
    %c2_17 = arith.constant 2 : index
    %14 = vector.load %arg1[%c0_15, %c0_16, %c2_17] : memref<1x64x384xbf16, #tpu.memory_space<vmem>>, vector<1x64x288xbf16>
    %15 = vector.shape_cast %14 : vector<1x64x288xbf16> to vector<64x288xbf16>
    %cst_18 = arith.constant dense<0.000000e+00> : vector<32x288xf32>
    %16 = tpu.matmul %13, %15, %cst_18 {dimension_numbers = #tpu.dot_dimension_numbers<[1], [0], [0], [1], [0, 0, 1, 1], [], []>} : vector<32x64xbf16>, vector<64x288xbf16>, vector<32x288xf32> -> vector<32x288xf32>
    %17 = arith.addf %11, %16 : vector<32x288xf32>
    %c3 = arith.constant 3 : index
    %c0_19 = arith.constant 0 : index
    %c0_20 = arith.constant 0 : index
    %18 = vector.load %arg2[%c3, %c0_19, %c0_20] : memref<9x32x64xbf16, #tpu.memory_space<vmem>>, vector<1x32x64xbf16>
    %19 = vector.shape_cast %18 : vector<1x32x64xbf16> to vector<32x64xbf16>
    %c0_21 = arith.constant 0 : index
    %c0_22 = arith.constant 0 : index
    %c18 = arith.constant 18 : index
    %20 = vector.load %arg1[%c0_21, %c0_22, %c18] : memref<1x64x384xbf16, #tpu.memory_space<vmem>>, vector<1x64x288xbf16>
    %21 = vector.shape_cast %20 : vector<1x64x288xbf16> to vector<64x288xbf16>
    %cst_23 = arith.constant dense<0.000000e+00> : vector<32x288xf32>
    %22 = tpu.matmul %19, %21, %cst_23 {dimension_numbers = #tpu.dot_dimension_numbers<[1], [0], [0], [1], [0, 0, 1, 1], [], []>} : vector<32x64xbf16>, vector<64x288xbf16>, vector<32x288xf32> -> vector<32x288xf32>
    %23 = arith.addf %17, %22 : vector<32x288xf32>
    %c4 = arith.constant 4 : index
    %c0_24 = arith.constant 0 : index
    %c0_25 = arith.constant 0 : index
    %24 = vector.load %arg2[%c4, %c0_24, %c0_25] : memref<9x32x64xbf16, #tpu.memory_space<vmem>>, vector<1x32x64xbf16>
    %25 = vector.shape_cast %24 : vector<1x32x64xbf16> to vector<32x64xbf16>
    %c0_26 = arith.constant 0 : index
    %c0_27 = arith.constant 0 : index
    %c19 = arith.constant 19 : index
    %26 = vector.load %arg1[%c0_26, %c0_27, %c19] : memref<1x64x384xbf16, #tpu.memory_space<vmem>>, vector<1x64x288xbf16>
    %27 = vector.shape_cast %26 : vector<1x64x288xbf16> to vector<64x288xbf16>
    %cst_28 = arith.constant dense<0.000000e+00> : vector<32x288xf32>
    %28 = tpu.matmul %25, %27, %cst_28 {dimension_numbers = #tpu.dot_dimension_numbers<[1], [0], [0], [1], [0, 0, 1, 1], [], []>} : vector<32x64xbf16>, vector<64x288xbf16>, vector<32x288xf32> -> vector<32x288xf32>
    %29 = arith.addf %23, %28 : vector<32x288xf32>
    %c5 = arith.constant 5 : index
    %c0_29 = arith.constant 0 : index
    %c0_30 = arith.constant 0 : index
    %30 = vector.load %arg2[%c5, %c0_29, %c0_30] : memref<9x32x64xbf16, #tpu.memory_space<vmem>>, vector<1x32x64xbf16>
    %31 = vector.shape_cast %30 : vector<1x32x64xbf16> to vector<32x64xbf16>
    %c0_31 = arith.constant 0 : index
    %c0_32 = arith.constant 0 : index
    %c20 = arith.constant 20 : index
    %32 = vector.load %arg1[%c0_31, %c0_32, %c20] : memref<1x64x384xbf16, #tpu.memory_space<vmem>>, vector<1x64x288xbf16>
    %33 = vector.shape_cast %32 : vector<1x64x288xbf16> to vector<64x288xbf16>
    %cst_33 = arith.constant dense<0.000000e+00> : vector<32x288xf32>
    %34 = tpu.matmul %31, %33, %cst_33 {dimension_numbers = #tpu.dot_dimension_numbers<[1], [0], [0], [1], [0, 0, 1, 1], [], []>} : vector<32x64xbf16>, vector<64x288xbf16>, vector<32x288xf32> -> vector<32x288xf32>
    %35 = arith.addf %29, %34 : vector<32x288xf32>
    %c6 = arith.constant 6 : index
    %c0_34 = arith.constant 0 : index
    %c0_35 = arith.constant 0 : index
    %36 = vector.load %arg2[%c6, %c0_34, %c0_35] : memref<9x32x64xbf16, #tpu.memory_space<vmem>>, vector<1x32x64xbf16>
    %37 = vector.shape_cast %36 : vector<1x32x64xbf16> to vector<32x64xbf16>
    %c0_36 = arith.constant 0 : index
    %c0_37 = arith.constant 0 : index
    %c36 = arith.constant 36 : index
    %38 = vector.load %arg1[%c0_36, %c0_37, %c36] : memref<1x64x384xbf16, #tpu.memory_space<vmem>>, vector<1x64x288xbf16>
    %39 = vector.shape_cast %38 : vector<1x64x288xbf16> to vector<64x288xbf16>
    %cst_38 = arith.constant dense<0.000000e+00> : vector<32x288xf32>
    %40 = tpu.matmul %37, %39, %cst_38 {dimension_numbers = #tpu.dot_dimension_numbers<[1], [0], [0], [1], [0, 0, 1, 1], [], []>} : vector<32x64xbf16>, vector<64x288xbf16>, vector<32x288xf32> -> vector<32x288xf32>
    %41 = arith.addf %35, %40 : vector<32x288xf32>
    %c7 = arith.constant 7 : index
    %c0_39 = arith.constant 0 : index
    %c0_40 = arith.constant 0 : index
    %42 = vector.load %arg2[%c7, %c0_39, %c0_40] : memref<9x32x64xbf16, #tpu.memory_space<vmem>>, vector<1x32x64xbf16>
    %43 = vector.shape_cast %42 : vector<1x32x64xbf16> to vector<32x64xbf16>
    %c0_41 = arith.constant 0 : index
    %c0_42 = arith.constant 0 : index
    %c37 = arith.constant 37 : index
    %44 = vector.load %arg1[%c0_41, %c0_42, %c37] : memref<1x64x384xbf16, #tpu.memory_space<vmem>>, vector<1x64x288xbf16>
    %45 = vector.shape_cast %44 : vector<1x64x288xbf16> to vector<64x288xbf16>
    %cst_43 = arith.constant dense<0.000000e+00> : vector<32x288xf32>
    %46 = tpu.matmul %43, %45, %cst_43 {dimension_numbers = #tpu.dot_dimension_numbers<[1], [0], [0], [1], [0, 0, 1, 1], [], []>} : vector<32x64xbf16>, vector<64x288xbf16>, vector<32x288xf32> -> vector<32x288xf32>
    %47 = arith.addf %41, %46 : vector<32x288xf32>
    %c8 = arith.constant 8 : index
    %c0_44 = arith.constant 0 : index
    %c0_45 = arith.constant 0 : index
    %48 = vector.load %arg2[%c8, %c0_44, %c0_45] : memref<9x32x64xbf16, #tpu.memory_space<vmem>>, vector<1x32x64xbf16>
    %49 = vector.shape_cast %48 : vector<1x32x64xbf16> to vector<32x64xbf16>
    %c0_46 = arith.constant 0 : index
    %c0_47 = arith.constant 0 : index
    %c38 = arith.constant 38 : index
    %50 = vector.load %arg1[%c0_46, %c0_47, %c38] : memref<1x64x384xbf16, #tpu.memory_space<vmem>>, vector<1x64x288xbf16>
    %51 = vector.shape_cast %50 : vector<1x64x288xbf16> to vector<64x288xbf16>
    %cst_48 = arith.constant dense<0.000000e+00> : vector<32x288xf32>
    %52 = tpu.matmul %49, %51, %cst_48 {dimension_numbers = #tpu.dot_dimension_numbers<[1], [0], [0], [1], [0, 0, 1, 1], [], []>} : vector<32x64xbf16>, vector<64x288xbf16>, vector<32x288xf32> -> vector<32x288xf32>
    %53 = arith.addf %47, %52 : vector<32x288xf32>
    %cst_49 = arith.constant 0.000000e+00 : bf16
    %54 = vector.broadcast %cst_49 : bf16 to vector<32x384xbf16>
    %c0_50 = arith.constant 0 : index
    %c0_51 = arith.constant 0 : index
    %55 = vector.load %arg10[%c0_50, %c0_51] : memref<32x384xbf16, #tpu.memory_space<vmem>>, vector<32x384xbf16>
    tpu.vector_store %arg10[%c0_50, %c0_51], %54 {strides = array<i32>} : memref<32x384xbf16, #tpu.memory_space<vmem>>, vector<32x384xbf16>,
    %56 = vector.extract_strided_slice %53 {offsets = [0, 0], sizes = [16, 288], strides = [1, 1]} : vector<32x288xf32> to vector<16x288xf32>
    %57 = vector.broadcast %0 : vector<1x288xf32> to vector<16x288xf32>
    %58 = arith.mulf %56, %57 : vector<16x288xf32>
    %59 = vector.shape_cast %58 : vector<16x288xf32> to vector<1x16x288xf32>
    %cst_52 = arith.constant dense<0.000000e+00> : vector<1xf32>
    %60 = vector.multi_reduction <add>, %59, %cst_52 [1, 2] : vector<1x16x288xf32> to vector<1xf32>
    %61 = vector.shape_cast %60 : vector<1xf32> to vector<1x1x1xf32>
    %62 = vector.extract %61[0, 0, 0] : f32 from vector<1x1x1xf32>
    %cst_53 = arith.constant 2.44140625E-4 : f32
    %63 = arith.mulf %62, %cst_53 : f32
    %64 = vector.broadcast %63 : f32 to vector<16x288xf32>
    %65 = arith.subf %56, %64 : vector<16x288xf32>
    %66 = arith.mulf %65, %65 : vector<16x288xf32>
    %67 = vector.broadcast %0 : vector<1x288xf32> to vector<16x288xf32>
    %68 = arith.mulf %66, %67 : vector<16x288xf32>
    %69 = vector.shape_cast %68 : vector<16x288xf32> to vector<1x16x288xf32>
    %cst_54 = arith.constant dense<0.000000e+00> : vector<1xf32>
    %70 = vector.multi_reduction <add>, %69, %cst_54 [1, 2] : vector<1x16x288xf32> to vector<1xf32>
    %71 = vector.shape_cast %70 : vector<1xf32> to vector<1x1x1xf32>
    %72 = vector.extract %71[0, 0, 0] : f32 from vector<1x1x1xf32>
    %cst_55 = arith.constant 2.44140625E-4 : f32
    %73 = arith.mulf %72, %cst_55 : f32
    %cst_56 = arith.constant 9.99999974E-6 : f32
    %74 = arith.addf %73, %cst_56 : f32
    %75 = math.rsqrt %74 : f32
    %76 = vector.broadcast %75 : f32 to vector<16x288xf32>
    %77 = arith.mulf %65, %76 : vector<16x288xf32>
    %c0_57 = arith.constant 0 : index
    %c0_58 = arith.constant 0 : index
    %78 = vector.load %arg5[%c0_57, %c0_58] : memref<32x1xf32, #tpu.memory_space<vmem>>, vector<16x1xf32>
    %79 = vector.broadcast %78 : vector<16x1xf32> to vector<16x288xf32>
    %80 = arith.mulf %77, %79 : vector<16x288xf32>
    %c0_59 = arith.constant 0 : index
    %c0_60 = arith.constant 0 : index
    %81 = vector.load %arg6[%c0_59, %c0_60] : memref<32x1xf32, #tpu.memory_space<vmem>>, vector<16x1xf32>
    %82 = vector.broadcast %81 : vector<16x1xf32> to vector<16x288xf32>
    %83 = arith.addf %80, %82 : vector<16x288xf32>
    %cst_61 = arith.constant 0.000000e+00 : f32
    %84 = vector.broadcast %cst_61 : f32 to vector<16x288xf32>
    %85 = arith.maximumf %83, %84 : vector<16x288xf32>
    %86 = vector.broadcast %0 : vector<1x288xf32> to vector<16x288xf32>
    %87 = arith.mulf %85, %86 : vector<16x288xf32>
    %88 = arith.truncf %87 : vector<16x288xf32> to vector<16x288xbf16>
    %c0_62 = arith.constant 0 : index
    %c19_63 = arith.constant 19 : index
    %89 = vector.load %arg10[%c0_62, %c19_63] : memref<32x384xbf16, #tpu.memory_space<vmem>>, vector<16x288xbf16>
    tpu.vector_store %arg10[%c0_62, %c19_63], %88 {strides = array<i32>} : memref<32x384xbf16, #tpu.memory_space<vmem>>, vector<16x288xbf16>,
    %90 = vector.extract_strided_slice %53 {offsets = [16, 0], sizes = [16, 288], strides = [1, 1]} : vector<32x288xf32> to vector<16x288xf32>
    %91 = vector.broadcast %0 : vector<1x288xf32> to vector<16x288xf32>
    %92 = arith.mulf %90, %91 : vector<16x288xf32>
    %93 = vector.shape_cast %92 : vector<16x288xf32> to vector<1x16x288xf32>
    %cst_64 = arith.constant dense<0.000000e+00> : vector<1xf32>
    %94 = vector.multi_reduction <add>, %93, %cst_64 [1, 2] : vector<1x16x288xf32> to vector<1xf32>
    %95 = vector.shape_cast %94 : vector<1xf32> to vector<1x1x1xf32>
    %96 = vector.extract %95[0, 0, 0] : f32 from vector<1x1x1xf32>
    %cst_65 = arith.constant 2.44140625E-4 : f32
    %97 = arith.mulf %96, %cst_65 : f32
    %98 = vector.broadcast %97 : f32 to vector<16x288xf32>
    %99 = arith.subf %90, %98 : vector<16x288xf32>
    %100 = arith.mulf %99, %99 : vector<16x288xf32>
    %101 = vector.broadcast %0 : vector<1x288xf32> to vector<16x288xf32>
    %102 = arith.mulf %100, %101 : vector<16x288xf32>
    %103 = vector.shape_cast %102 : vector<16x288xf32> to vector<1x16x288xf32>
    %cst_66 = arith.constant dense<0.000000e+00> : vector<1xf32>
    %104 = vector.multi_reduction <add>, %103, %cst_66 [1, 2] : vector<1x16x288xf32> to vector<1xf32>
    %105 = vector.shape_cast %104 : vector<1xf32> to vector<1x1x1xf32>
    %106 = vector.extract %105[0, 0, 0] : f32 from vector<1x1x1xf32>
    %cst_67 = arith.constant 2.44140625E-4 : f32
    %107 = arith.mulf %106, %cst_67 : f32
    %cst_68 = arith.constant 9.99999974E-6 : f32
    %108 = arith.addf %107, %cst_68 : f32
    %109 = math.rsqrt %108 : f32
    %110 = vector.broadcast %109 : f32 to vector<16x288xf32>
    %111 = arith.mulf %99, %110 : vector<16x288xf32>
    %c16 = arith.constant 16 : index
    %c0_69 = arith.constant 0 : index
    %112 = vector.load %arg5[%c16, %c0_69] : memref<32x1xf32, #tpu.memory_space<vmem>>, vector<16x1xf32>
    %113 = vector.broadcast %112 : vector<16x1xf32> to vector<16x288xf32>
    %114 = arith.mulf %111, %113 : vector<16x288xf32>
    %c16_70 = arith.constant 16 : index
    %c0_71 = arith.constant 0 : index
    %115 = vector.load %arg6[%c16_70, %c0_71] : memref<32x1xf32, #tpu.memory_space<vmem>>, vector<16x1xf32>
    %116 = vector.broadcast %115 : vector<16x1xf32> to vector<16x288xf32>
    %117 = arith.addf %114, %116 : vector<16x288xf32>
    %cst_72 = arith.constant 0.000000e+00 : f32
    %118 = vector.broadcast %cst_72 : f32 to vector<16x288xf32>
    %119 = arith.maximumf %117, %118 : vector<16x288xf32>
    %120 = vector.broadcast %0 : vector<1x288xf32> to vector<16x288xf32>
    %121 = arith.mulf %119, %120 : vector<16x288xf32>
    %122 = arith.truncf %121 : vector<16x288xf32> to vector<16x288xbf16>
    %c16_73 = arith.constant 16 : index
    %c19_74 = arith.constant 19 : index
    %123 = vector.load %arg10[%c16_73, %c19_74] : memref<32x384xbf16, #tpu.memory_space<vmem>>, vector<16x288xbf16>
    tpu.vector_store %arg10[%c16_73, %c19_74], %122 {strides = array<i32>} : memref<32x384xbf16, #tpu.memory_space<vmem>>, vector<16x288xbf16>,
    %c0_75 = arith.constant 0 : index
    %c0_76 = arith.constant 0 : index
    %c0_77 = arith.constant 0 : index
    %124 = vector.load %arg3[%c0_75, %c0_76, %c0_77] : memref<9x32x32xbf16, #tpu.memory_space<vmem>>, vector<1x32x32xbf16>
    %125 = vector.shape_cast %124 : vector<1x32x32xbf16> to vector<32x32xbf16>
    %c0_78 = arith.constant 0 : index
    %c0_79 = arith.constant 0 : index
    %126 = vector.load %arg10[%c0_78, %c0_79] : memref<32x384xbf16, #tpu.memory_space<vmem>>, vector<32x288xbf16>
    %cst_80 = arith.constant dense<0.000000e+00> : vector<32x288xf32>
    %127 = tpu.matmul %125, %126, %cst_80 {dimension_numbers = #tpu.dot_dimension_numbers<[1], [0], [0], [1], [0, 0, 1, 1], [], []>} : vector<32x32xbf16>, vector<32x288xbf16>, vector<32x288xf32> -> vector<32x288xf32>
    %c1_81 = arith.constant 1 : index
    %c0_82 = arith.constant 0 : index
    %c0_83 = arith.constant 0 : index
    %128 = vector.load %arg3[%c1_81, %c0_82, %c0_83] : memref<9x32x32xbf16, #tpu.memory_space<vmem>>, vector<1x32x32xbf16>
    %129 = vector.shape_cast %128 : vector<1x32x32xbf16> to vector<32x32xbf16>
    %c0_84 = arith.constant 0 : index
    %c1_85 = arith.constant 1 : index
    %130 = vector.load %arg10[%c0_84, %c1_85] : memref<32x384xbf16, #tpu.memory_space<vmem>>, vector<32x288xbf16>
    %cst_86 = arith.constant dense<0.000000e+00> : vector<32x288xf32>
    %131 = tpu.matmul %129, %130, %cst_86 {dimension_numbers = #tpu.dot_dimension_numbers<[1], [0], [0], [1], [0, 0, 1, 1], [], []>} : vector<32x32xbf16>, vector<32x288xbf16>, vector<32x288xf32> -> vector<32x288xf32>
    %132 = arith.addf %127, %131 : vector<32x288xf32>
    %c2_87 = arith.constant 2 : index
    %c0_88 = arith.constant 0 : index
    %c0_89 = arith.constant 0 : index
    %133 = vector.load %arg3[%c2_87, %c0_88, %c0_89] : memref<9x32x32xbf16, #tpu.memory_space<vmem>>, vector<1x32x32xbf16>
    %134 = vector.shape_cast %133 : vector<1x32x32xbf16> to vector<32x32xbf16>
    %c0_90 = arith.constant 0 : index
    %c2_91 = arith.constant 2 : index
    %135 = vector.load %arg10[%c0_90, %c2_91] : memref<32x384xbf16, #tpu.memory_space<vmem>>, vector<32x288xbf16>
    %cst_92 = arith.constant dense<0.000000e+00> : vector<32x288xf32>
    %136 = tpu.matmul %134, %135, %cst_92 {dimension_numbers = #tpu.dot_dimension_numbers<[1], [0], [0], [1], [0, 0, 1, 1], [], []>} : vector<32x32xbf16>, vector<32x288xbf16>, vector<32x288xf32> -> vector<32x288xf32>
    %137 = arith.addf %132, %136 : vector<32x288xf32>
    %c3_93 = arith.constant 3 : index
    %c0_94 = arith.constant 0 : index
    %c0_95 = arith.constant 0 : index
    %138 = vector.load %arg3[%c3_93, %c0_94, %c0_95] : memref<9x32x32xbf16, #tpu.memory_space<vmem>>, vector<1x32x32xbf16>
    %139 = vector.shape_cast %138 : vector<1x32x32xbf16> to vector<32x32xbf16>
    %c0_96 = arith.constant 0 : index
    %c18_97 = arith.constant 18 : index
    %140 = vector.load %arg10[%c0_96, %c18_97] : memref<32x384xbf16, #tpu.memory_space<vmem>>, vector<32x288xbf16>
    %cst_98 = arith.constant dense<0.000000e+00> : vector<32x288xf32>
    %141 = tpu.matmul %139, %140, %cst_98 {dimension_numbers = #tpu.dot_dimension_numbers<[1], [0], [0], [1], [0, 0, 1, 1], [], []>} : vector<32x32xbf16>, vector<32x288xbf16>, vector<32x288xf32> -> vector<32x288xf32>
    %142 = arith.addf %137, %141 : vector<32x288xf32>
    %c4_99 = arith.constant 4 : index
    %c0_100 = arith.constant 0 : index
    %c0_101 = arith.constant 0 : index
    %143 = vector.load %arg3[%c4_99, %c0_100, %c0_101] : memref<9x32x32xbf16, #tpu.memory_space<vmem>>, vector<1x32x32xbf16>
    %144 = vector.shape_cast %143 : vector<1x32x32xbf16> to vector<32x32xbf16>
    %c0_102 = arith.constant 0 : index
    %c19_103 = arith.constant 19 : index
    %145 = vector.load %arg10[%c0_102, %c19_103] : memref<32x384xbf16, #tpu.memory_space<vmem>>, vector<32x288xbf16>
    %cst_104 = arith.constant dense<0.000000e+00> : vector<32x288xf32>
    %146 = tpu.matmul %144, %145, %cst_104 {dimension_numbers = #tpu.dot_dimension_numbers<[1], [0], [0], [1], [0, 0, 1, 1], [], []>} : vector<32x32xbf16>, vector<32x288xbf16>, vector<32x288xf32> -> vector<32x288xf32>
    %147 = arith.addf %142, %146 : vector<32x288xf32>
    %c5_105 = arith.constant 5 : index
    %c0_106 = arith.constant 0 : index
    %c0_107 = arith.constant 0 : index
    %148 = vector.load %arg3[%c5_105, %c0_106, %c0_107] : memref<9x32x32xbf16, #tpu.memory_space<vmem>>, vector<1x32x32xbf16>
    %149 = vector.shape_cast %148 : vector<1x32x32xbf16> to vector<32x32xbf16>
    %c0_108 = arith.constant 0 : index
    %c20_109 = arith.constant 20 : index
    %150 = vector.load %arg10[%c0_108, %c20_109] : memref<32x384xbf16, #tpu.memory_space<vmem>>, vector<32x288xbf16>
    %cst_110 = arith.constant dense<0.000000e+00> : vector<32x288xf32>
    %151 = tpu.matmul %149, %150, %cst_110 {dimension_numbers = #tpu.dot_dimension_numbers<[1], [0], [0], [1], [0, 0, 1, 1], [], []>} : vector<32x32xbf16>, vector<32x288xbf16>, vector<32x288xf32> -> vector<32x288xf32>
    %152 = arith.addf %147, %151 : vector<32x288xf32>
    %c6_111 = arith.constant 6 : index
    %c0_112 = arith.constant 0 : index
    %c0_113 = arith.constant 0 : index
    %153 = vector.load %arg3[%c6_111, %c0_112, %c0_113] : memref<9x32x32xbf16, #tpu.memory_space<vmem>>, vector<1x32x32xbf16>
    %154 = vector.shape_cast %153 : vector<1x32x32xbf16> to vector<32x32xbf16>
    %c0_114 = arith.constant 0 : index
    %c36_115 = arith.constant 36 : index
    %155 = vector.load %arg10[%c0_114, %c36_115] : memref<32x384xbf16, #tpu.memory_space<vmem>>, vector<32x288xbf16>
    %cst_116 = arith.constant dense<0.000000e+00> : vector<32x288xf32>
    %156 = tpu.matmul %154, %155, %cst_116 {dimension_numbers = #tpu.dot_dimension_numbers<[1], [0], [0], [1], [0, 0, 1, 1], [], []>} : vector<32x32xbf16>, vector<32x288xbf16>, vector<32x288xf32> -> vector<32x288xf32>
    %157 = arith.addf %152, %156 : vector<32x288xf32>
    %c7_117 = arith.constant 7 : index
    %c0_118 = arith.constant 0 : index
    %c0_119 = arith.constant 0 : index
    %158 = vector.load %arg3[%c7_117, %c0_118, %c0_119] : memref<9x32x32xbf16, #tpu.memory_space<vmem>>, vector<1x32x32xbf16>
    %159 = vector.shape_cast %158 : vector<1x32x32xbf16> to vector<32x32xbf16>
    %c0_120 = arith.constant 0 : index
    %c37_121 = arith.constant 37 : index
    %160 = vector.load %arg10[%c0_120, %c37_121] : memref<32x384xbf16, #tpu.memory_space<vmem>>, vector<32x288xbf16>
    %cst_122 = arith.constant dense<0.000000e+00> : vector<32x288xf32>
    %161 = tpu.matmul %159, %160, %cst_122 {dimension_numbers = #tpu.dot_dimension_numbers<[1], [0], [0], [1], [0, 0, 1, 1], [], []>} : vector<32x32xbf16>, vector<32x288xbf16>, vector<32x288xf32> -> vector<32x288xf32>
    %162 = arith.addf %157, %161 : vector<32x288xf32>
    %c8_123 = arith.constant 8 : index
    %c0_124 = arith.constant 0 : index
    %c0_125 = arith.constant 0 : index
    %163 = vector.load %arg3[%c8_123, %c0_124, %c0_125] : memref<9x32x32xbf16, #tpu.memory_space<vmem>>, vector<1x32x32xbf16>
    %164 = vector.shape_cast %163 : vector<1x32x32xbf16> to vector<32x32xbf16>
    %c0_126 = arith.constant 0 : index
    %c38_127 = arith.constant 38 : index
    %165 = vector.load %arg10[%c0_126, %c38_127] : memref<32x384xbf16, #tpu.memory_space<vmem>>, vector<32x288xbf16>
    %cst_128 = arith.constant dense<0.000000e+00> : vector<32x288xf32>
    %166 = tpu.matmul %164, %165, %cst_128 {dimension_numbers = #tpu.dot_dimension_numbers<[1], [0], [0], [1], [0, 0, 1, 1], [], []>} : vector<32x32xbf16>, vector<32x288xbf16>, vector<32x288xf32> -> vector<32x288xf32>
    %167 = arith.addf %162, %166 : vector<32x288xf32>
    %168 = vector.extract_strided_slice %167 {offsets = [0, 0], sizes = [16, 288], strides = [1, 1]} : vector<32x288xf32> to vector<16x288xf32>
    %169 = vector.broadcast %0 : vector<1x288xf32> to vector<16x288xf32>
    %170 = arith.mulf %168, %169 : vector<16x288xf32>
    %171 = vector.shape_cast %170 : vector<16x288xf32> to vector<1x16x288xf32>
    %cst_129 = arith.constant dense<0.000000e+00> : vector<1xf32>
    %172 = vector.multi_reduction <add>, %171, %cst_129 [1, 2] : vector<1x16x288xf32> to vector<1xf32>
    %173 = vector.shape_cast %172 : vector<1xf32> to vector<1x1x1xf32>
    %174 = vector.extract %173[0, 0, 0] : f32 from vector<1x1x1xf32>
    %cst_130 = arith.constant 2.44140625E-4 : f32
    %175 = arith.mulf %174, %cst_130 : f32
    %176 = vector.broadcast %175 : f32 to vector<16x288xf32>
    %177 = arith.subf %168, %176 : vector<16x288xf32>
    %178 = arith.mulf %177, %177 : vector<16x288xf32>
    %179 = vector.broadcast %0 : vector<1x288xf32> to vector<16x288xf32>
    %180 = arith.mulf %178, %179 : vector<16x288xf32>
    %181 = vector.shape_cast %180 : vector<16x288xf32> to vector<1x16x288xf32>
    %cst_131 = arith.constant dense<0.000000e+00> : vector<1xf32>
    %182 = vector.multi_reduction <add>, %181, %cst_131 [1, 2] : vector<1x16x288xf32> to vector<1xf32>
    %183 = vector.shape_cast %182 : vector<1xf32> to vector<1x1x1xf32>
    %184 = vector.extract %183[0, 0, 0] : f32 from vector<1x1x1xf32>
    %cst_132 = arith.constant 2.44140625E-4 : f32
    %185 = arith.mulf %184, %cst_132 : f32
    %cst_133 = arith.constant 9.99999974E-6 : f32
    %186 = arith.addf %185, %cst_133 : f32
    %187 = math.rsqrt %186 : f32
    %188 = vector.broadcast %187 : f32 to vector<16x288xf32>
    %189 = arith.mulf %177, %188 : vector<16x288xf32>
    %c0_134 = arith.constant 0 : index
    %c0_135 = arith.constant 0 : index
    %190 = vector.load %arg7[%c0_134, %c0_135] : memref<32x1xf32, #tpu.memory_space<vmem>>, vector<16x1xf32>
    %191 = vector.broadcast %190 : vector<16x1xf32> to vector<16x288xf32>
    %192 = arith.mulf %189, %191 : vector<16x288xf32>
    %c0_136 = arith.constant 0 : index
    %c0_137 = arith.constant 0 : index
    %193 = vector.load %arg8[%c0_136, %c0_137] : memref<32x1xf32, #tpu.memory_space<vmem>>, vector<16x1xf32>
    %194 = vector.broadcast %193 : vector<16x1xf32> to vector<16x288xf32>
    %195 = arith.addf %192, %194 : vector<16x288xf32>
    %cst_138 = arith.constant 0.000000e+00 : f32
    %196 = vector.broadcast %cst_138 : f32 to vector<16x288xf32>
    %197 = arith.maximumf %195, %196 : vector<16x288xf32>
    %c0_139 = arith.constant 0 : index
    %c0_140 = arith.constant 0 : index
    %c0_141 = arith.constant 0 : index
    %198 = vector.load %arg9[%c0_139, %c0_140, %c0_141] : memref<1x32x288xf32, #tpu.memory_space<vmem>>, vector<1x16x288xf32>
    %199 = vector.shape_cast %198 : vector<1x16x288xf32> to vector<16x288xf32>
    %200 = vector.shape_cast %197 : vector<16x288xf32> to vector<1x16x288xf32>
    tpu.vector_store %arg9[%c0_139, %c0_140, %c0_141], %200 {strides = array<i32>} : memref<1x32x288xf32, #tpu.memory_space<vmem>>, vector<1x16x288xf32>,
    %201 = vector.extract_strided_slice %167 {offsets = [16, 0], sizes = [16, 288], strides = [1, 1]} : vector<32x288xf32> to vector<16x288xf32>
    %202 = vector.broadcast %0 : vector<1x288xf32> to vector<16x288xf32>
    %203 = arith.mulf %201, %202 : vector<16x288xf32>
    %204 = vector.shape_cast %203 : vector<16x288xf32> to vector<1x16x288xf32>
    %cst_142 = arith.constant dense<0.000000e+00> : vector<1xf32>
    %205 = vector.multi_reduction <add>, %204, %cst_142 [1, 2] : vector<1x16x288xf32> to vector<1xf32>
    %206 = vector.shape_cast %205 : vector<1xf32> to vector<1x1x1xf32>
    %207 = vector.extract %206[0, 0, 0] : f32 from vector<1x1x1xf32>
    %cst_143 = arith.constant 2.44140625E-4 : f32
    %208 = arith.mulf %207, %cst_143 : f32
    %209 = vector.broadcast %208 : f32 to vector<16x288xf32>
    %210 = arith.subf %201, %209 : vector<16x288xf32>
    %211 = arith.mulf %210, %210 : vector<16x288xf32>
    %212 = vector.broadcast %0 : vector<1x288xf32> to vector<16x288xf32>
    %213 = arith.mulf %211, %212 : vector<16x288xf32>
    %214 = vector.shape_cast %213 : vector<16x288xf32> to vector<1x16x288xf32>
    %cst_144 = arith.constant dense<0.000000e+00> : vector<1xf32>
    %215 = vector.multi_reduction <add>, %214, %cst_144 [1, 2] : vector<1x16x288xf32> to vector<1xf32>
    %216 = vector.shape_cast %215 : vector<1xf32> to vector<1x1x1xf32>
    %217 = vector.extract %216[0, 0, 0] : f32 from vector<1x1x1xf32>
    %cst_145 = arith.constant 2.44140625E-4 : f32
    %218 = arith.mulf %217, %cst_145 : f32
    %cst_146 = arith.constant 9.99999974E-6 : f32
    %219 = arith.addf %218, %cst_146 : f32
    %220 = math.rsqrt %219 : f32
    %221 = vector.broadcast %220 : f32 to vector<16x288xf32>
    %222 = arith.mulf %210, %221 : vector<16x288xf32>
    %c16_147 = arith.constant 16 : index
    %c0_148 = arith.constant 0 : index
    %223 = vector.load %arg7[%c16_147, %c0_148] : memref<32x1xf32, #tpu.memory_space<vmem>>, vector<16x1xf32>
    %224 = vector.broadcast %223 : vector<16x1xf32> to vector<16x288xf32>
    %225 = arith.mulf %222, %224 : vector<16x288xf32>
    %c16_149 = arith.constant 16 : index
    %c0_150 = arith.constant 0 : index
    %226 = vector.load %arg8[%c16_149, %c0_150] : memref<32x1xf32, #tpu.memory_space<vmem>>, vector<16x1xf32>
    %227 = vector.broadcast %226 : vector<16x1xf32> to vector<16x288xf32>
    %228 = arith.addf %225, %227 : vector<16x288xf32>
    %cst_151 = arith.constant 0.000000e+00 : f32
    %229 = vector.broadcast %cst_151 : f32 to vector<16x288xf32>
    %230 = arith.maximumf %228, %229 : vector<16x288xf32>
    %c0_152 = arith.constant 0 : index
    %c16_153 = arith.constant 16 : index
    %c0_154 = arith.constant 0 : index
    %231 = vector.load %arg9[%c0_152, %c16_153, %c0_154] : memref<1x32x288xf32, #tpu.memory_space<vmem>>, vector<1x16x288xf32>
    %232 = vector.shape_cast %231 : vector<1x16x288xf32> to vector<16x288xf32>
    %233 = vector.shape_cast %230 : vector<16x288xf32> to vector<1x16x288xf32>
    tpu.vector_store %arg9[%c0_152, %c16_153, %c0_154], %233 {strides = array<i32>} : memref<1x32x288xf32, #tpu.memory_space<vmem>>, vector<1x16x288xf32>,
    return
  }
  func.func @transform_0(%arg0: i32) -> (i32, i32, i32) {
    %c0_i32 = arith.constant 0 : i32
    %c0_i32_0 = arith.constant 0 : i32
    %c0_i32_1 = arith.constant 0 : i32
    return %arg0, %c0_i32, %c0_i32_0 : i32, i32, i32
  }
  func.func @transform_1(%arg0: i32) -> (i32, i32, i32) {
    %c0_i32 = arith.constant 0 : i32
    %c0_i32_0 = arith.constant 0 : i32
    %c0_i32_1 = arith.constant 0 : i32
    %c0_i32_2 = arith.constant 0 : i32
    return %c0_i32, %c0_i32_0, %c0_i32_1 : i32, i32, i32
  }
  func.func @transform_2(%arg0: i32) -> (i32, i32, i32) {
    %c0_i32 = arith.constant 0 : i32
    %c0_i32_0 = arith.constant 0 : i32
    %c0_i32_1 = arith.constant 0 : i32
    %c0_i32_2 = arith.constant 0 : i32
    return %c0_i32, %c0_i32_0, %c0_i32_1 : i32, i32, i32
  }
  func.func @transform_3(%arg0: i32) -> (i32, i32) {
    %c0_i32 = arith.constant 0 : i32
    %c0_i32_0 = arith.constant 0 : i32
    %c0_i32_1 = arith.constant 0 : i32
    return %c0_i32, %c0_i32_0 : i32, i32
  }
  func.func @transform_4(%arg0: i32) -> (i32, i32) {
    %c0_i32 = arith.constant 0 : i32
    %c0_i32_0 = arith.constant 0 : i32
    %c0_i32_1 = arith.constant 0 : i32
    return %c0_i32, %c0_i32_0 : i32, i32
  }
  func.func @transform_5(%arg0: i32) -> (i32, i32) {
    %c0_i32 = arith.constant 0 : i32
    %c0_i32_0 = arith.constant 0 : i32
    %c0_i32_1 = arith.constant 0 : i32
    return %c0_i32, %c0_i32_0 : i32, i32
  }
  func.func @transform_6(%arg0: i32) -> (i32, i32) {
    %c0_i32 = arith.constant 0 : i32
    %c0_i32_0 = arith.constant 0 : i32
    %c0_i32_1 = arith.constant 0 : i32
    return %c0_i32, %c0_i32_0 : i32, i32
  }
  func.func @transform_7(%arg0: i32) -> (i32, i32) {
    %c0_i32 = arith.constant 0 : i32
    %c0_i32_0 = arith.constant 0 : i32
    %c0_i32_1 = arith.constant 0 : i32
    return %c0_i32, %c0_i32_0 : i32, i32
  }
  func.func @transform_8(%arg0: i32) -> (i32, i32, i32) {
    %c0_i32 = arith.constant 0 : i32
    %c0_i32_0 = arith.constant 0 : i32
    %c0_i32_1 = arith.constant 0 : i32
    return %arg0, %c0_i32, %c0_i32_0 : i32, i32, i32
  }
}

</mosaic_0001>

<llo_original>
// kernel: up_forward.2
$region0: #{up_forward.2}
  #allocation0 [shape = 'u32[]', space=smem, size = 0x4, offset = 0x4, fixed_abs, tag = 'smem constant byte address 0x4 - core index']
  #allocation1 [shape = 'u32[72,128]{1,0:T(1,128)}', space=vmem, size = 0x9000, scoped, tag = 'internal scratch']
  %s0 = inlined_call_operand.vmem [shape: bf16[256,64], index: 0, kind: input, shape index: {}]
  %s1 = inlined_call_operand.vmem [shape: bf16[64,192], index: 1, kind: input, shape index: {}]
  %s2 = inlined_call_operand.vmem [shape: f32[1,192], index: 2, kind: input, shape index: {}]
  %s3 = inlined_call_operand.vmem [shape: bf16[256,192], index: 3, kind: output, shape index: {}]
  %s4 = sld [smem:[#allocation0]]
  $region45: #{up_forward.2} parent=0
    _
  %s6 = ssub.s32 1, %s4
  %s7 = scalar_select 0, %s6, %s4
  loop: start=0, step=1, limit=6
  $region2: #{up_forward.2} parent=0 // loop_pre_header
    _
  $region3: #{up_forward.2} parent=0 // loop_header
    %s9 = sphi 0, %s13
    %p10 = scmp.ge.s32.totalorder %s9, 6
    %s19 = sphi 0, %s21
    %s22 = sphi 0, %s19
    %s23 = sphi 0, %s22
    %s39 = sphi 0, %s23
    %s43 = sphi 0, %s43
    %s45 = sphi 0, %s43
    %s46 = sphi 0, %s45
    %s60 = sphi 0, %s46
    %s64 = sphi 0, %s64
    %s66 = sphi 0, %s64
    %s67 = sphi 0, %s66
    %s81 = sphi 0, %s67
    %s87 = sphi 0, %s89
    %s90 = sphi 0, %s87
    %s91 = sphi 0, %s90
    %s107 = sphi 0, %s91
  $region4: #{up_forward.2} parent=0 // loop_header_branch
    %12 = sbr.rel (%p10) target = $region8
  $region5: #{up_forward.2} parent=0 // loop_body
    %s14 = ssub.s32 %s9, 1
    %s15 = ssub.s32 %s9, 2
    %s16 = sadd.s32 %s9, 1
    %s17 = ssub.s32 %s9, %s16
    %p18 = scmp.eq.s32.totalorder %s17, 0
    %s20 = sadd.s32 %s19, 1
    %s21 = scalar_select %p18, %s19, %s20
    %p24 = pneg %p18
    %p25 = scmp.eq.s32.totalorder %s9, 3
    %p26 = por %p24, %p25
    %p27 = scmp.ne.s32.totalorder %s19, %s22
    %p28 = scmp.eq.s32.totalorder %s9, 0
    %p29 = por %p27, %p28
    %p30 = scmp.ne.s32.totalorder %s19, %s22
    %p31 = scmp.eq.s32.totalorder %s14, 3
    %p32 = por %p30, %p31
    %p33 = scmp.ne.s32.totalorder %s22, %s23
    %p34 = scmp.eq.s32.totalorder %s14, 0
    %p35 = por %p33, %p34
    %p36 = scmp.ne.s32.totalorder %s22, %s23
    %p37 = scmp.eq.s32.totalorder %s15, 3
    %p38 = por %p36, %p37
    %p40 = scmp.ne.s32.totalorder %s23, %s39
    %p41 = scmp.eq.s32.totalorder %s15, 0
    %p42 = por %p40, %p41
    %s44 = sadd.s32 %s43, 1
    %p47 = scmp.eq.s32.totalorder %s9, 3
    %p48 = scmp.ne.s32.totalorder %s43, %s45
    %p49 = scmp.eq.s32.totalorder %s9, 0
    %p50 = por %p48, %p49
    %p51 = scmp.ne.s32.totalorder %s43, %s45
    %p52 = scmp.eq.s32.totalorder %s14, 3
    %p53 = por %p51, %p52
    %p54 = scmp.ne.s32.totalorder %s45, %s46
    %p55 = scmp.eq.s32.totalorder %s14, 0
    %p56 = por %p54, %p55
    %p57 = scmp.ne.s32.totalorder %s45, %s46
    %p58 = scmp.eq.s32.totalorder %s15, 3
    %p59 = por %p57, %p58
    %p61 = scmp.ne.s32.totalorder %s46, %s60
    %p62 = scmp.eq.s32.totalorder %s15, 0
    %p63 = por %p61, %p62
    %s65 = sadd.s32 %s64, 1
    %p68 = scmp.eq.s32.totalorder %s9, 3
    %p69 = scmp.ne.s32.totalorder %s64, %s66
    %p70 = scmp.eq.s32.totalorder %s9, 0
    %p71 = por %p69, %p70
    %p72 = scmp.ne.s32.totalorder %s64, %s66
    %p73 = scmp.eq.s32.totalorder %s14, 3
    %p74 = por %p72, %p73
    %p75 = scmp.ne.s32.totalorder %s66, %s67
    %p76 = scmp.eq.s32.totalorder %s14, 0
    %p77 = por %p75, %p76
    %p78 = scmp.ne.s32.totalorder %s66, %s67
    %p79 = scmp.eq.s32.totalorder %s15, 3
    %p80 = por %p78, %p79
    %p82 = scmp.ne.s32.totalorder %s67, %s81
    %p83 = scmp.eq.s32.totalorder %s15, 0
    %p84 = por %p82, %p83
    %s85 = ssub.s32 %s9, %s16
    %p86 = scmp.eq.s32.totalorder %s85, 0
    %s88 = sadd.s32 %s87, 1
    %s89 = scalar_select %p86, %s87, %s88
    %p92 = pneg %p86
    %p93 = scmp.eq.s32.totalorder %s9, 3
    %p94 = por %p92, %p93
    %p95 = scmp.ne.s32.totalorder %s87, %s90
    %p96 = scmp.eq.s32.totalorder %s9, 0
    %p97 = por %p95, %p96
    %p98 = scmp.ne.s32.totalorder %s87, %s90
    %p99 = scmp.eq.s32.totalorder %s14, 3
    %p100 = por %p98, %p99
    %p101 = scmp.ne.s32.totalorder %s90, %s91
    %p102 = scmp.eq.s32.totalorder %s14, 0
    %p103 = por %p101, %p102
    %p104 = scmp.ne.s32.totalorder %s90, %s91
    %p105 = scmp.eq.s32.totalorder %s15, 3
    %p106 = por %p104, %p105
    %p108 = scmp.ne.s32.totalorder %s91, %s107
    %p109 = scmp.eq.s32.totalorder %s15, 0
    %p110 = por %p108, %p109
    %p111 = scmp.le.s32.totalorder 1, %s9
    %p112 = scmp.lt.s32.totalorder %s9, 5
    %p113 = pnand %p111, %p112
    %p114 = pneg %p113
    // Predicated region
    $region9: #{up_forward.2} parent=5 // pred_check
      _
    $region10: #{up_forward.2} parent=5 // pred_check_branch
      %116 = sbr.rel (%p113) target = $region12
    $region11: #{up_forward.2} parent=5 // pred_region
      %s117 = ssub.s32 %s9, 1
      // Predicated region
      $region13: #{up_forward.2} parent=11 // pred_check
        %p118 = pneg %p56
      $region14: #{up_forward.2} parent=11 // pred_check_branch
        %120 = sbr.rel (%p118) target = $region16
      $region15: #{up_forward.2} parent=11 // pred_region
        _
      $region16: #{up_forward.2} parent=11 // pred_fallthru
        _
      // Predicated region
      $region17: #{up_forward.2} parent=11 // pred_check
        %p121 = pneg %p77
      $region18: #{up_forward.2} parent=11 // pred_check_branch
        %123 = sbr.rel (%p121) target = $region20
      $region19: #{up_forward.2} parent=11 // pred_region
        _
      $region20: #{up_forward.2} parent=11 // pred_fallthru
        _
    $region12: #{up_forward.2} parent=5 // pred_fallthru
      _
    %p124 = scmp.lt.s32.totalorder %s9, 4
    // Predicated region
    $region21: #{up_forward.2} parent=5 // pred_check
      %p125 = pneg %p124
    $region22: #{up_forward.2} parent=5 // pred_check_branch
      %127 = sbr.rel (%p125) target = $region24
    $region23: #{up_forward.2} parent=5 // pred_region
      // Predicated region
      $region25: #{up_forward.2} parent=23 // pred_check
        %p128 = pneg %p29
      $region26: #{up_forward.2} parent=23 // pred_check_branch
        %130 = sbr.rel (%p128) target = $region28
      $region27: #{up_forward.2} parent=23 // pred_region
        %s131 = smul.u32 8, %s9
        %p132 = scmp.lt.s32.totalorder %s131, 31
        %s133 = scalar_select %p132, %s131, 31
        %s134 = smul.addr %s133, 4
        %s135 = scalar_lea.vmem %s0, %s134
        %s136 = smul.u32 8, %s9
      $region28: #{up_forward.2} parent=23 // pred_fallthru
        _
    $region24: #{up_forward.2} parent=5 // pred_fallthru
      _
    %p137 = scmp.le.s32.totalorder 1, %s9
    %p138 = scmp.lt.s32.totalorder %s9, 5
    %p139 = pnand %p137, %p138
    %p140 = pneg %p139
    // Predicated region
    $region29: #{up_forward.2} parent=5 // pred_check
      _
    $region30: #{up_forward.2} parent=5 // pred_check_branch
      %142 = sbr.rel (%p139) target = $region32
    $region31: #{up_forward.2} parent=5 // pred_region
      %s143 = ssub.s32 %s9, 1
      %s144 = smul.u32 8, %s14
      %p145 = scmp.lt.s32.totalorder %s144, 31
      %s146 = scalar_select %p145, %s144, 31
      %s147 = smul.addr %s146, 4
      %s148 = scalar_lea.vmem %s0, %s147
      %p149 = pneg %p35
      %p150 = pneg %p32
      %p151 = pneg %p56
      %p152 = pneg %p53
      %p153 = pneg %p77
      %p154 = pneg %p74
      %p155 = pneg %p103
      %p156 = pneg %p100
      %s157 = smul.u32 8, %s14
      %p158 = scmp.lt.s32.totalorder %s157, 31
      %s159 = scalar_select %p158, %s157, 31
      %s160 = smul.addr %s159, 2
      %s161 = smul.addr %s160, 4
      %s162 = scalar_lea.vmem %s3, %s161
      %s163 = smul.u32 8, %s14
      %p164 = scmp.lt.s32.totalorder %s163, 31
      %s165 = scalar_select %p164, %s163, 31
      %s166 = smul.addr %s165, 4
      %s167 = scalar_lea.vmem %s0, %s166
      %s168 = smul.u32 8, %s14
      %s169 = smul.u32 8, %s14
      %p170 = scmp.lt.s32.totalorder %s169, 31
      %s171 = scalar_select %p170, %s169, 31
      %s172 = smul.addr %s171, 2
      %s173 = smul.addr %s172, 4
      %s174 = scalar_lea.vmem %s3, %s173
      %s175 = smul.u32 8, %s14
      %v177 = vld [vmem:[%s167] sm:$0xf]
      %v178 = vld [vmem:[%s167 + $0x4] sm:$0xf]
      %v179 = vld [vmem:[%s167 + $0x8] sm:$0xf]
      %v180 = vld [vmem:[%s167 + $0xc] sm:$0xf]
      %v181 = vld [vmem:[%s167 + $0x10] sm:$0xf]
      %v182 = vld [vmem:[%s167 + $0x14] sm:$0xf]
      %v183 = vld [vmem:[%s167 + $0x18] sm:$0xf]
      %v184 = vld [vmem:[%s167 + $0x1c] sm:$0xf]
      %v185 = vld [vmem:[%s1] sm:$0xff]
      %v186 = vld [vmem:[%s1 + $0x8] sm:$0xff]
      %v187 = vld [vmem:[%s1 + $0x10] sm:$0xff]
      %v188 = vld [vmem:[%s1 + $0x18] sm:$0xff]
      %v189 = vld [vmem:[%s1 + $0x20] sm:$0xff]
      %v190 = vld [vmem:[%s1 + $0x28] sm:$0xff]
      %v191 = vld [vmem:[%s1 + $0x30] sm:$0xff]
      %v192 = vld [vmem:[%s1 + $0x38] sm:$0xff]
      %v193 = vld [vmem:[%s2] sm:$0x3]
      %v195 = vperm.slane %v193, 0
      %v196 = vperm.slane %v193, 1
      %v207 = vunpack.c.l.b16 %v177
      %v208 = vunpack.c.l.b16 %v178
      %v209 = vunpack.c.l.b16 %v179
      %v210 = vunpack.c.l.b16 %v180
      %v211 = vunpack.c.l.b16 %v181
      %v212 = vunpack.c.l.b16 %v182
      %v213 = vunpack.c.l.b16 %v183
      %v214 = vunpack.c.l.b16 %v184
      %v215 = vpack.c.b16 %v208, %v207
      %v216 = vpack.c.b16 %v210, %v209
      %v217 = vpack.c.b16 %v212, %v211
      %v218 = vpack.c.b16 %v214, %v213
      %v227 = vunpack.c.l.b16 %v185
      %v228 = vunpack.c.h.b16 %v185
      %v229 = vunpack.c.l.b16 %v186
      %v230 = vunpack.c.h.b16 %v186
      %v231 = vunpack.c.l.b16 %v187
      %v232 = vunpack.c.h.b16 %v187
      %v233 = vunpack.c.l.b16 %v188
      %v234 = vunpack.c.h.b16 %v188
      %v235 = vunpack.c.l.b16 %v189
      %v236 = vunpack.c.h.b16 %v189
      %v237 = vunpack.c.l.b16 %v190
      %v238 = vunpack.c.h.b16 %v190
      %v239 = vunpack.c.l.b16 %v191
      %v240 = vunpack.c.h.b16 %v191
      %v241 = vunpack.c.l.b16 %v192
      %v242 = vunpack.c.h.b16 %v192
      %v243 = vpack.c.b16 %v229, %v227
      %v244 = vpack.c.b16 %v230, %v228
      %v245 = vpack.c.b16 %v233, %v231
      %v246 = vpack.c.b16 %v234, %v232
      %v247 = vpack.c.b16 %v237, %v235
      %v248 = vpack.c.b16 %v238, %v236
      %v249 = vpack.c.b16 %v241, %v239
      %v250 = vpack.c.b16 %v242, %v240
      %vm259 = vcmask 523264
      %v261 = vsel %vm259, %v215, 0
      %v264 = vsel %vm259, %v216, 0
      %v267 = vsel %vm259, %v217, 0
      %v270 = vsel %vm259, %v218, 0
      %272 = vmatpush.bf16.msra.mxu0 0
      %273 = vmatpush.bf16.msra.mxu0 0
      %274 = vmatpush.bf16.msra.mxu0 0
      %275 = vmatpush.bf16.msra.mxu0 0
      %276 = vmatpush.bf16.msra.mxu0 %v249
      %277 = vmatpush.bf16.msra.mxu0 %v247
      %278 = vmatpush.bf16.msra.mxu0 %v245
      %279 = vmatpush.bf16.msra.mxu0 %v243
      %280 = vmatmul.bf16.gmra.mxu0 %v261
      %v281 = vpop.f32.mrf.mxu0
      %v282 = vadd.f32 %v195, %v281
      %v283 = vpop.f32.mrf.mxu0
      %v284 = vadd.f32 %v195, %v283
      %285 = vmatmul.bf16.gmra.mxu0 %v264
      %v286 = vpop.f32.mrf.mxu0
      %v287 = vadd.f32 %v195, %v286
      %v288 = vpop.f32.mrf.mxu0
      %v289 = vadd.f32 %v195, %v288
      %290 = vmatmul.bf16.gmra.mxu0 %v267
      %v291 = vpop.f32.mrf.mxu0
      %v292 = vadd.f32 %v195, %v291
      %v293 = vpop.f32.mrf.mxu0
      %v294 = vadd.f32 %v195, %v293
      %295 = vmatmul.bf16.gmra.mxu0 %v270
      %v296 = vpop.f32.mrf.mxu0
      %v297 = vadd.f32 %v195, %v296
      %v298 = vpop.f32.mrf.mxu0
      %v299 = vadd.f32 %v195, %v298
      %300 = vdwg.mxu0
      %301 = vmatpush.bf16.msra.mxu0 0
      %302 = vmatpush.bf16.msra.mxu0 0
      %303 = vmatpush.bf16.msra.mxu0 0
      %304 = vmatpush.bf16.msra.mxu0 0
      %305 = vmatpush.bf16.msra.mxu0 %v250
      %306 = vmatpush.bf16.msra.mxu0 %v248
      %307 = vmatpush.bf16.msra.mxu0 %v246
      %308 = vmatpush.bf16.msra.mxu0 %v244
      %309 = vmatmul.bf16.gmra.mxu0 %v261
      %v310 = vpop.f32.mrf.mxu0
      %v311 = vadd.f32 %v196, %v310
      %v312 = vpop.f32.mrf.mxu0
      %v313 = vadd.f32 %v196, %v312
      %314 = vmatmul.bf16.gmra.mxu0 %v264
      %v315 = vpop.f32.mrf.mxu0
      %v316 = vadd.f32 %v196, %v315
      %v317 = vpop.f32.mrf.mxu0
      %v318 = vadd.f32 %v196, %v317
      %319 = vmatmul.bf16.gmra.mxu0 %v267
      %v320 = vpop.f32.mrf.mxu0
      %v321 = vadd.f32 %v196, %v320
      %v322 = vpop.f32.mrf.mxu0
      %v323 = vadd.f32 %v196, %v322
      %324 = vmatmul.bf16.gmra.mxu0 %v270
      %v325 = vpop.f32.mrf.mxu0
      %v326 = vadd.f32 %v196, %v325
      %v327 = vpop.f32.mrf.mxu0
      %v328 = vadd.f32 %v196, %v327
      %329 = vdwg.mxu0
      %v330 = vpack.c.bf16 %v311, %v282
      %v331 = vpack.c.bf16 %v313, %v284
      %v332 = vpack.c.bf16 %v316, %v287
      %v333 = vpack.c.bf16 %v318, %v289
      %v334 = vpack.c.bf16 %v321, %v292
      %v335 = vpack.c.bf16 %v323, %v294
      %v336 = vpack.c.bf16 %v326, %v297
      %v337 = vpack.c.bf16 %v328, %v299
      %vm338 = vcmask 1043456
      %vm339 = vcmask 523268
      %vm340 = vmor %vm339, %vm338
      %341 = vst.msk [vmem:[%s174] sm:$0xff] %vm340, %v330
      %342 = vst.msk [vmem:[%s174 + $0x8] sm:$0xff] %vm340, %v331
      %343 = vst.msk [vmem:[%s174 + $0x10] sm:$0xff] %vm340, %v332
      %344 = vst.msk [vmem:[%s174 + $0x18] sm:$0xff] %vm340, %v333
      %345 = vst.msk [vmem:[%s174 + $0x20] sm:$0xff] %vm340, %v334
      %346 = vst.msk [vmem:[%s174 + $0x28] sm:$0xff] %vm340, %v335
      %347 = vst.msk [vmem:[%s174 + $0x30] sm:$0xff] %vm340, %v336
      %348 = vst.msk [vmem:[%s174 + $0x38] sm:$0xff] %vm340, %v337
      %s349 = smul.u32 8, %s14
      %p350 = scmp.lt.s32.totalorder %s349, 31
      %s351 = scalar_select %p350, %s349, 31
      %s352 = smul.addr %s351, 2
      %s353 = smul.addr %s352, 4
      %s354 = scalar_lea.vmem %s3, %s353
      // Predicated region
      $region33: #{up_forward.2} parent=31 // pred_check
        %p355 = pneg %p100
      $region34: #{up_forward.2} parent=31 // pred_check_branch
        %357 = sbr.rel (%p355) target = $region36
      $region35: #{up_forward.2} parent=31 // pred_region
        %s358 = smul.u32 8, %s14
      $region36: #{up_forward.2} parent=31 // pred_fallthru
        _
    $region32: #{up_forward.2} parent=5 // pred_fallthru
      _
    %p359 = scmp.le.s32.totalorder 2, %s9
    // Predicated region
    $region37: #{up_forward.2} parent=5 // pred_check
      %p360 = pneg %p359
    $region38: #{up_forward.2} parent=5 // pred_check_branch
      %362 = sbr.rel (%p360) target = $region40
    $region39: #{up_forward.2} parent=5 // pred_region
      %s363 = ssub.s32 %s9, 2
      // Predicated region
      $region41: #{up_forward.2} parent=39 // pred_check
        %p364 = pneg %p106
      $region42: #{up_forward.2} parent=39 // pred_check_branch
        %366 = sbr.rel (%p364) target = $region44
      $region43: #{up_forward.2} parent=39 // pred_region
        %s367 = smul.u32 8, %s15
        %p368 = scmp.lt.s32.totalorder %s367, 31
        %s369 = scalar_select %p368, %s367, 31
        %s370 = smul.addr %s369, 2
        %s371 = smul.addr %s370, 4
        %s372 = scalar_lea.vmem %s3, %s371
      $region44: #{up_forward.2} parent=39 // pred_fallthru
        _
    $region40: #{up_forward.2} parent=5 // pred_fallthru
      _
  $region6: #{up_forward.2} parent=0 // loop_footer
    %s13 = sadd.s32 1, %s9
  $region7: #{up_forward.2} parent=0 // loop_footer_branch
    %8 = sbr.rel target = $region3
  $region8: #{up_forward.2} parent=0 // loop_exit
    _

// kernel: up_forward.3
$region0: #{up_forward.3}
  #allocation0 [shape = 'u32[]', space=smem, size = 0x4, offset = 0x4, fixed_abs, tag = 'smem constant byte address 0x4 - core index']
  #allocation1 [shape = 'u32[72,128]{1,0:T(1,128)}', space=vmem, size = 0x9000, scoped, tag = 'internal scratch']
  #allocation2 [shape = 'bf16[32,384]{1,0:T(8,128)(2,1)}', space=vmem, size = 0x6000, scoped, tag = 'scratch operand']
  %s0 = inlined_call_operand.vmem [shape: bf16[4,64,384], index: 0, kind: input, shape index: {}]
  %s1 = inlined_call_operand.vmem [shape: bf16[9,32,64], index: 1, kind: input, shape index: {}]
  %s2 = inlined_call_operand.vmem [shape: bf16[9,32,32], index: 2, kind: input, shape index: {}]
  %s3 = inlined_call_operand.vmem [shape: f32[1,288], index: 3, kind: input, shape index: {}]
  %s4 = inlined_call_operand.vmem [shape: f32[32,1], index: 4, kind: input, shape index: {}]
  %s5 = inlined_call_operand.vmem [shape: f32[32,1], index: 5, kind: input, shape index: {}]
  %s6 = inlined_call_operand.vmem [shape: f32[32,1], index: 6, kind: input, shape index: {}]
  %s7 = inlined_call_operand.vmem [shape: f32[32,1], index: 7, kind: input, shape index: {}]
  %s8 = inlined_call_operand.vmem [shape: f32[4,32,288], index: 8, kind: output, shape index: {}]
  %s9 = sld [smem:[#allocation0]]
  $region65: #{up_forward.3} parent=0
    _
  %s11 = ssub.s32 1, %s9
  %s12 = scalar_select 0, %s11, %s9
  loop: start=0, step=1, limit=6
  $region2: #{up_forward.3} parent=0 // loop_pre_header
    _
  $region3: #{up_forward.3} parent=0 // loop_header
    %s14 = sphi 0, %s18
    %p15 = scmp.ge.s32.totalorder %s14, 6
    %s24 = sphi 0, %s26
    %s27 = sphi 0, %s24
    %s28 = sphi 0, %s27
    %s44 = sphi 0, %s28
    %s48 = sphi 0, %s48
    %s50 = sphi 0, %s48
    %s51 = sphi 0, %s50
    %s65 = sphi 0, %s51
    %s69 = sphi 0, %s69
    %s71 = sphi 0, %s69
    %s72 = sphi 0, %s71
    %s86 = sphi 0, %s72
    %s90 = sphi 0, %s90
    %s92 = sphi 0, %s90
    %s93 = sphi 0, %s92
    %s107 = sphi 0, %s93
    %s111 = sphi 0, %s111
    %s113 = sphi 0, %s111
    %s114 = sphi 0, %s113
    %s128 = sphi 0, %s114
    %s132 = sphi 0, %s132
    %s134 = sphi 0, %s132
    %s135 = sphi 0, %s134
    %s149 = sphi 0, %s135
    %s153 = sphi 0, %s153
    %s155 = sphi 0, %s153
    %s156 = sphi 0, %s155
    %s170 = sphi 0, %s156
    %s174 = sphi 0, %s174
    %s176 = sphi 0, %s174
    %s177 = sphi 0, %s176
    %s191 = sphi 0, %s177
    %s197 = sphi 0, %s199
    %s200 = sphi 0, %s197
    %s201 = sphi 0, %s200
    %s217 = sphi 0, %s201
  $region4: #{up_forward.3} parent=0 // loop_header_branch
    %17 = sbr.rel (%p15) target = $region8
  $region5: #{up_forward.3} parent=0 // loop_body
    %s19 = ssub.s32 %s14, 1
    %s20 = ssub.s32 %s14, 2
    %s21 = sadd.s32 %s14, 1
    %s22 = ssub.s32 %s14, %s21
    %p23 = scmp.eq.s32.totalorder %s22, 0
    %s25 = sadd.s32 %s24, 1
    %s26 = scalar_select %p23, %s24, %s25
    %p29 = pneg %p23
    %p30 = scmp.eq.s32.totalorder %s14, 3
    %p31 = por %p29, %p30
    %p32 = scmp.ne.s32.totalorder %s24, %s27
    %p33 = scmp.eq.s32.totalorder %s14, 0
    %p34 = por %p32, %p33
    %p35 = scmp.ne.s32.totalorder %s24, %s27
    %p36 = scmp.eq.s32.totalorder %s19, 3
    %p37 = por %p35, %p36
    %p38 = scmp.ne.s32.totalorder %s27, %s28
    %p39 = scmp.eq.s32.totalorder %s19, 0
    %p40 = por %p38, %p39
    %p41 = scmp.ne.s32.totalorder %s27, %s28
    %p42 = scmp.eq.s32.totalorder %s20, 3
    %p43 = por %p41, %p42
    %p45 = scmp.ne.s32.totalorder %s28, %s44
    %p46 = scmp.eq.s32.totalorder %s20, 0
    %p47 = por %p45, %p46
    %s49 = sadd.s32 %s48, 1
    %p52 = scmp.eq.s32.totalorder %s14, 3
    %p53 = scmp.ne.s32.totalorder %s48, %s50
    %p54 = scmp.eq.s32.totalorder %s14, 0
    %p55 = por %p53, %p54
    %p56 = scmp.ne.s32.totalorder %s48, %s50
    %p57 = scmp.eq.s32.totalorder %s19, 3
    %p58 = por %p56, %p57
    %p59 = scmp.ne.s32.totalorder %s50, %s51
    %p60 = scmp.eq.s32.totalorder %s19, 0
    %p61 = por %p59, %p60
    %p62 = scmp.ne.s32.totalorder %s50, %s51
    %p63 = scmp.eq.s32.totalorder %s20, 3
    %p64 = por %p62, %p63
    %p66 = scmp.ne.s32.totalorder %s51, %s65
    %p67 = scmp.eq.s32.totalorder %s20, 0
    %p68 = por %p66, %p67
    %s70 = sadd.s32 %s69, 1
    %p73 = scmp.eq.s32.totalorder %s14, 3
    %p74 = scmp.ne.s32.totalorder %s69, %s71
    %p75 = scmp.eq.s32.totalorder %s14, 0
    %p76 = por %p74, %p75
    %p77 = scmp.ne.s32.totalorder %s69, %s71
    %p78 = scmp.eq.s32.totalorder %s19, 3
    %p79 = por %p77, %p78
    %p80 = scmp.ne.s32.totalorder %s71, %s72
    %p81 = scmp.eq.s32.totalorder %s19, 0
    %p82 = por %p80, %p81
    %p83 = scmp.ne.s32.totalorder %s71, %s72
    %p84 = scmp.eq.s32.totalorder %s20, 3
    %p85 = por %p83, %p84
    %p87 = scmp.ne.s32.totalorder %s72, %s86
    %p88 = scmp.eq.s32.totalorder %s20, 0
    %p89 = por %p87, %p88
    %s91 = sadd.s32 %s90, 1
    %p94 = scmp.eq.s32.totalorder %s14, 3
    %p95 = scmp.ne.s32.totalorder %s90, %s92
    %p96 = scmp.eq.s32.totalorder %s14, 0
    %p97 = por %p95, %p96
    %p98 = scmp.ne.s32.totalorder %s90, %s92
    %p99 = scmp.eq.s32.totalorder %s19, 3
    %p100 = por %p98, %p99
    %p101 = scmp.ne.s32.totalorder %s92, %s93
    %p102 = scmp.eq.s32.totalorder %s19, 0
    %p103 = por %p101, %p102
    %p104 = scmp.ne.s32.totalorder %s92, %s93
    %p105 = scmp.eq.s32.totalorder %s20, 3
    %p106 = por %p104, %p105
    %p108 = scmp.ne.s32.totalorder %s93, %s107
    %p109 = scmp.eq.s32.totalorder %s20, 0
    %p110 = por %p108, %p109
    %s112 = sadd.s32 %s111, 1
    %p115 = scmp.eq.s32.totalorder %s14, 3
    %p116 = scmp.ne.s32.totalorder %s111, %s113
    %p117 = scmp.eq.s32.totalorder %s14, 0
    %p118 = por %p116, %p117
    %p119 = scmp.ne.s32.totalorder %s111, %s113
    %p120 = scmp.eq.s32.totalorder %s19, 3
    %p121 = por %p119, %p120
    %p122 = scmp.ne.s32.totalorder %s113, %s114
    %p123 = scmp.eq.s32.totalorder %s19, 0
    %p124 = por %p122, %p123
    %p125 = scmp.ne.s32.totalorder %s113, %s114
    %p126 = scmp.eq.s32.totalorder %s20, 3
    %p127 = por %p125, %p126
    %p129 = scmp.ne.s32.totalorder %s114, %s128
    %p130 = scmp.eq.s32.totalorder %s20, 0
    %p131 = por %p129, %p130
    %s133 = sadd.s32 %s132, 1
    %p136 = scmp.eq.s32.totalorder %s14, 3
    %p137 = scmp.ne.s32.totalorder %s132, %s134
    %p138 = scmp.eq.s32.totalorder %s14, 0
    %p139 = por %p137, %p138
    %p140 = scmp.ne.s32.totalorder %s132, %s134
    %p141 = scmp.eq.s32.totalorder %s19, 3
    %p142 = por %p140, %p141
    %p143 = scmp.ne.s32.totalorder %s134, %s135
    %p144 = scmp.eq.s32.totalorder %s19, 0
    %p145 = por %p143, %p144
    %p146 = scmp.ne.s32.totalorder %s134, %s135
    %p147 = scmp.eq.s32.totalorder %s20, 3
    %p148 = por %p146, %p147
    %p150 = scmp.ne.s32.totalorder %s135, %s149
    %p151 = scmp.eq.s32.totalorder %s20, 0
    %p152 = por %p150, %p151
    %s154 = sadd.s32 %s153, 1
    %p157 = scmp.eq.s32.totalorder %s14, 3
    %p158 = scmp.ne.s32.totalorder %s153, %s155
    %p159 = scmp.eq.s32.totalorder %s14, 0
    %p160 = por %p158, %p159
    %p161 = scmp.ne.s32.totalorder %s153, %s155
    %p162 = scmp.eq.s32.totalorder %s19, 3
    %p163 = por %p161, %p162
    %p164 = scmp.ne.s32.totalorder %s155, %s156
    %p165 = scmp.eq.s32.totalorder %s19, 0
    %p166 = por %p164, %p165
    %p167 = scmp.ne.s32.totalorder %s155, %s156
    %p168 = scmp.eq.s32.totalorder %s20, 3
    %p169 = por %p167, %p168
    %p171 = scmp.ne.s32.totalorder %s156, %s170
    %p172 = scmp.eq.s32.totalorder %s20, 0
    %p173 = por %p171, %p172
    %s175 = sadd.s32 %s174, 1
    %p178 = scmp.eq.s32.totalorder %s14, 3
    %p179 = scmp.ne.s32.totalorder %s174, %s176
    %p180 = scmp.eq.s32.totalorder %s14, 0
    %p181 = por %p179, %p180
    %p182 = scmp.ne.s32.totalorder %s174, %s176
    %p183 = scmp.eq.s32.totalorder %s19, 3
    %p184 = por %p182, %p183
    %p185 = scmp.ne.s32.totalorder %s176, %s177
    %p186 = scmp.eq.s32.totalorder %s19, 0
    %p187 = por %p185, %p186
    %p188 = scmp.ne.s32.totalorder %s176, %s177
    %p189 = scmp.eq.s32.totalorder %s20, 3
    %p190 = por %p188, %p189
    %p192 = scmp.ne.s32.totalorder %s177, %s191
    %p193 = scmp.eq.s32.totalorder %s20, 0
    %p194 = por %p192, %p193
    %s195 = ssub.s32 %s14, %s21
    %p196 = scmp.eq.s32.totalorder %s195, 0
    %s198 = sadd.s32 %s197, 1
    %s199 = scalar_select %p196, %s197, %s198
    %p202 = pneg %p196
    %p203 = scmp.eq.s32.totalorder %s14, 3
    %p204 = por %p202, %p203
    %p205 = scmp.ne.s32.totalorder %s197, %s200
    %p206 = scmp.eq.s32.totalorder %s14, 0
    %p207 = por %p205, %p206
    %p208 = scmp.ne.s32.totalorder %s197, %s200
    %p209 = scmp.eq.s32.totalorder %s19, 3
    %p210 = por %p208, %p209
    %p211 = scmp.ne.s32.totalorder %s200, %s201
    %p212 = scmp.eq.s32.totalorder %s19, 0
    %p213 = por %p211, %p212
    %p214 = scmp.ne.s32.totalorder %s200, %s201
    %p215 = scmp.eq.s32.totalorder %s20, 3
    %p216 = por %p214, %p215
    %p218 = scmp.ne.s32.totalorder %s201, %s217
    %p219 = scmp.eq.s32.totalorder %s20, 0
    %p220 = por %p218, %p219
    %p221 = scmp.le.s32.totalorder 1, %s14
    %p222 = scmp.lt.s32.totalorder %s14, 5
    %p223 = pnand %p221, %p222
    %p224 = pneg %p223
    // Predicated region
    $region9: #{up_forward.3} parent=5 // pred_check
      _
    $region10: #{up_forward.3} parent=5 // pred_check_branch
      %226 = sbr.rel (%p223) target = $region12
    $region11: #{up_forward.3} parent=5 // pred_region
      %s227 = ssub.s32 %s14, 1
      // Predicated region
      $region13: #{up_forward.3} parent=11 // pred_check
        %p228 = pneg %p61
      $region14: #{up_forward.3} parent=11 // pred_check_branch
        %230 = sbr.rel (%p228) target = $region16
      $region15: #{up_forward.3} parent=11 // pred_region
        _
      $region16: #{up_forward.3} parent=11 // pred_fallthru
        _
      // Predicated region
      $region17: #{up_forward.3} parent=11 // pred_check
        %p231 = pneg %p82
      $region18: #{up_forward.3} parent=11 // pred_check_branch
        %233 = sbr.rel (%p231) target = $region20
      $region19: #{up_forward.3} parent=11 // pred_region
        _
      $region20: #{up_forward.3} parent=11 // pred_fallthru
        _
      // Predicated region
      $region21: #{up_forward.3} parent=11 // pred_check
        %p234 = pneg %p103
      $region22: #{up_forward.3} parent=11 // pred_check_branch
        %236 = sbr.rel (%p234) target = $region24
      $region23: #{up_forward.3} parent=11 // pred_region
        _
      $region24: #{up_forward.3} parent=11 // pred_fallthru
        _
      // Predicated region
      $region25: #{up_forward.3} parent=11 // pred_check
        %p237 = pneg %p124
      $region26: #{up_forward.3} parent=11 // pred_check_branch
        %239 = sbr.rel (%p237) target = $region28
      $region27: #{up_forward.3} parent=11 // pred_region
        _
      $region28: #{up_forward.3} parent=11 // pred_fallthru
        _
      // Predicated region
      $region29: #{up_forward.3} parent=11 // pred_check
        %p240 = pneg %p145
      $region30: #{up_forward.3} parent=11 // pred_check_branch
        %242 = sbr.rel (%p240) target = $region32
      $region31: #{up_forward.3} parent=11 // pred_region
        _
      $region32: #{up_forward.3} parent=11 // pred_fallthru
        _
      // Predicated region
      $region33: #{up_forward.3} parent=11 // pred_check
        %p243 = pneg %p166
      $region34: #{up_forward.3} parent=11 // pred_check_branch
        %245 = sbr.rel (%p243) target = $region36
      $region35: #{up_forward.3} parent=11 // pred_region
        _
      $region36: #{up_forward.3} parent=11 // pred_fallthru
        _
      // Predicated region
      $region37: #{up_forward.3} parent=11 // pred_check
        %p246 = pneg %p187
      $region38: #{up_forward.3} parent=11 // pred_check_branch
        %248 = sbr.rel (%p246) target = $region40
      $region39: #{up_forward.3} parent=11 // pred_region
        _
      $region40: #{up_forward.3} parent=11 // pred_fallthru
        _
    $region12: #{up_forward.3} parent=5 // pred_fallthru
      _
    %p249 = scmp.lt.s32.totalorder %s14, 4
    // Predicated region
    $region41: #{up_forward.3} parent=5 // pred_check
      %p250 = pneg %p249
    $region42: #{up_forward.3} parent=5 // pred_check_branch
      %252 = sbr.rel (%p250) target = $region44
    $region43: #{up_forward.3} parent=5 // pred_region
      // Predicated region
      $region45: #{up_forward.3} parent=43 // pred_check
        %p253 = pneg %p34
      $region46: #{up_forward.3} parent=43 // pred_check_branch
        %255 = sbr.rel (%p253) target = $region48
      $region47: #{up_forward.3} parent=43 // pred_region
        %p256 = scmp.lt.s32.totalorder %s14, 3
        %s257 = scalar_select %p256, %s14, 3
        %s258 = smul.addr %s257, 24
        %s259 = smul.addr %s258, 4
        %s260 = scalar_lea.vmem %s0, %s259
      $region48: #{up_forward.3} parent=43 // pred_fallthru
        _
    $region44: #{up_forward.3} parent=5 // pred_fallthru
      _
    %p261 = scmp.le.s32.totalorder 1, %s14
    %p262 = scmp.lt.s32.totalorder %s14, 5
    %p263 = pnand %p261, %p262
    %p264 = pneg %p263
    // Predicated region
    $region49: #{up_forward.3} parent=5 // pred_check
      _
    $region50: #{up_forward.3} parent=5 // pred_check_branch
      %266 = sbr.rel (%p263) target = $region52
    $region51: #{up_forward.3} parent=5 // pred_region
      %s267 = ssub.s32 %s14, 1
      %p268 = scmp.lt.s32.totalorder %s19, 3
      %s269 = scalar_select %p268, %s19, 3
      %s270 = smul.addr %s269, 24
      %s271 = smul.addr %s270, 4
      %s272 = scalar_lea.vmem %s0, %s271
      %p273 = pneg %p40
      %p274 = pneg %p37
      %p275 = pneg %p61
      %p276 = pneg %p58
      %p277 = pneg %p82
      %p278 = pneg %p79
      %p279 = pneg %p103
      %p280 = pneg %p100
      %p281 = pneg %p124
      %p282 = pneg %p121
      %p283 = pneg %p145
      %p284 = pneg %p142
      %p285 = pneg %p166
      %p286 = pneg %p163
      %p287 = pneg %p187
      %p288 = pneg %p184
      %p289 = pneg %p213
      %p290 = pneg %p210
      %p291 = scmp.lt.s32.totalorder %s19, 3
      %s292 = scalar_select %p291, %s19, 3
      %s293 = smul.addr %s292, 12
      %s294 = smul.addr %s293, 8
      %s295 = scalar_lea.vmem %s8, %s294
      %p296 = scmp.lt.s32.totalorder %s19, 3
      %s297 = scalar_select %p296, %s19, 3
      %s298 = smul.addr %s297, 24
      %s299 = smul.addr %s298, 4
      %s300 = scalar_lea.vmem %s0, %s299
      %p301 = scmp.lt.s32.totalorder %s19, 3
      %s302 = scalar_select %p301, %s19, 3
      %s303 = smul.addr %s302, 12
      %s304 = smul.addr %s303, 8
      %s305 = scalar_lea.vmem %s8, %s304
      %v307 = vld [vmem:[%s3] sm:$0x7]
      %v308 = vld [vmem:[%s1] sm:$0xf]
      %v309 = vld [vmem:[%s1 + $0x4] sm:$0xf]
      %v310 = vld [vmem:[%s1 + $0x8] sm:$0xf]
      %v311 = vld [vmem:[%s1 + $0xc] sm:$0xf]
      %v312 = vld [vmem:[%s300] sm:$0xff]
      %v313 = vld [vmem:[%s300 + $0x8] sm:$0xf]
      %v314 = vld [vmem:[%s300 + $0xc] sm:$0xff]
      %v315 = vld [vmem:[%s300 + $0x14] sm:$0xf]
      %v316 = vld [vmem:[%s300 + $0x18] sm:$0xff]
      %v317 = vld [vmem:[%s300 + $0x20] sm:$0xf]
      %v318 = vld [vmem:[%s300 + $0x24] sm:$0xff]
      %v319 = vld [vmem:[%s300 + $0x2c] sm:$0xf]
      %v320 = vld [vmem:[%s300 + $0x30] sm:$0xff]
      %v321 = vld [vmem:[%s300 + $0x38] sm:$0xf]
      %v322 = vld [vmem:[%s300 + $0x3c] sm:$0xff]
      %v323 = vld [vmem:[%s300 + $0x44] sm:$0xf]
      %v324 = vld [vmem:[%s300 + $0x48] sm:$0xff]
      %v325 = vld [vmem:[%s300 + $0x50] sm:$0xf]
      %v326 = vld [vmem:[%s300 + $0x54] sm:$0xff]
      %v327 = vld [vmem:[%s300 + $0x5c] sm:$0xf]
      %s328 = scalar_lea.vmem %s1, 16
      %v329 = vld [vmem:[%s328] sm:$0xf]
      %v330 = vld [vmem:[%s328 + $0x4] sm:$0xf]
      %v331 = vld [vmem:[%s328 + $0x8] sm:$0xf]
      %v332 = vld [vmem:[%s328 + $0xc] sm:$0xf]
      %v337 = vunpack.c.l.b16 %v329
      %v338 = vunpack.c.l.b16 %v330
      %v339 = vunpack.c.l.b16 %v331
      %v340 = vunpack.c.l.b16 %v332
      %v341 = vpack.c.b16 %v338, %v337
      %v342 = vpack.c.b16 %v340, %v339
      %v359 = vunpack.c.l.b16 %v312
      %v360 = vunpack.c.h.b16 %v312
      %v361 = vunpack.c.l.b16 %v313
      %v362 = vunpack.c.l.b16 %v314
      %v363 = vunpack.c.h.b16 %v314
      %v364 = vunpack.c.l.b16 %v315
      %v365 = vunpack.c.l.b16 %v316
      %v366 = vunpack.c.h.b16 %v316
      %v367 = vunpack.c.l.b16 %v317
      %v368 = vunpack.c.l.b16 %v318
      %v369 = vunpack.c.h.b16 %v318
      %v370 = vunpack.c.l.b16 %v319
      %v371 = vunpack.c.l.b16 %v320
      %v372 = vunpack.c.h.b16 %v320
      %v373 = vunpack.c.l.b16 %v321
      %v374 = vunpack.c.l.b16 %v322
      %v375 = vunpack.c.h.b16 %v322
      %v376 = vunpack.c.l.b16 %v323
      %v377 = vunpack.c.l.b16 %v324
      %v378 = vunpack.c.h.b16 %v324
      %v379 = vunpack.c.l.b16 %v325
      %v380 = vunpack.c.l.b16 %v326
      %v381 = vunpack.c.h.b16 %v326
      %v382 = vunpack.c.l.b16 %v327
      %v383 = vpack.c.b16 %v362, %v359
      %v384 = vpack.c.b16 %v363, %v360
      %v385 = vpack.c.b16 %v364, %v361
      %v386 = vpack.c.b16 %v368, %v365
      %v387 = vpack.c.b16 %v369, %v366
      %v388 = vpack.c.b16 %v370, %v367
      %v389 = vpack.c.b16 %v374, %v371
      %v390 = vpack.c.b16 %v375, %v372
      %v391 = vpack.c.b16 %v376, %v373
      %v392 = vpack.c.b16 %v380, %v377
      %v393 = vpack.c.b16 %v381, %v378
      %v394 = vpack.c.b16 %v382, %v379
      %395 = vrot.lane.b32.xlu0 %v383, 127
      %v396 = vpop.permute.xlu0 %395
      %397 = vrot.lane.b32.xlu0 %v384, 127
      %v398 = vpop.permute.xlu0 %397
      %399 = vrot.lane.b32.xlu0 %v385, 127
      %v400 = vpop.permute.xlu0 %399
      %401 = vrot.lane.b32.xlu0 %v386, 127
      %v402 = vpop.permute.xlu0 %401
      %403 = vrot.lane.b32.xlu0 %v387, 127
      %v404 = vpop.permute.xlu0 %403
      %405 = vrot.lane.b32.xlu0 %v388, 127
      %v406 = vpop.permute.xlu0 %405
      %407 = vrot.lane.b32.xlu0 %v389, 127
      %v408 = vpop.permute.xlu0 %407
      %409 = vrot.lane.b32.xlu0 %v390, 127
      %v410 = vpop.permute.xlu0 %409
      %411 = vrot.lane.b32.xlu0 %v391, 127
      %v412 = vpop.permute.xlu0 %411
      %413 = vrot.lane.b32.xlu0 %v392, 127
      %v414 = vpop.permute.xlu0 %413
      %415 = vrot.lane.b32.xlu0 %v393, 127
      %v416 = vpop.permute.xlu0 %415
      %417 = vrot.lane.b32.xlu0 %v394, 127
      %v418 = vpop.permute.xlu0 %417
      %vm419 = vcmask 1039360
      %v420 = vsel %vm419, %v396, %v398
      %v421 = vsel %vm419, %v398, %v400
      %v422 = vsel %vm419, %v402, %v404
      %v423 = vsel %vm419, %v404, %v406
      %v424 = vsel %vm419, %v408, %v410
      %v425 = vsel %vm419, %v410, %v412
      %v426 = vsel %vm419, %v414, %v416
      %v427 = vsel %vm419, %v416, %v418
      %vm440 = vcmask 523264
      %v442 = vsel %vm440, %v341, 0
      %v445 = vsel %vm440, %v342, 0
      %447 = vmatpush.bf16.msra.mxu0 0
      %448 = vmatpush.bf16.msra.mxu0 0
      %449 = vmatpush.bf16.msra.mxu0 0
      %450 = vmatpush.bf16.msra.mxu0 0
      %451 = vmatpush.bf16.msra.mxu0 %v426
      %452 = vmatpush.bf16.msra.mxu0 %v424
      %453 = vmatpush.bf16.msra.mxu0 %v422
      %454 = vmatpush.bf16.msra.mxu0 %v420
      %455 = vmatmul.bf16.gmra.mxu0 %v442
      %v456 = vpop.f32.mrf.mxu0
      %v457 = vadd.f32 0.0, %v456
      %v458 = vpop.f32.mrf.mxu0
      %v459 = vadd.f32 0.0, %v458
      %460 = vmatmul.bf16.gmra.mxu0 %v445
      %v461 = vpop.f32.mrf.mxu0
      %v462 = vadd.f32 0.0, %v461
      %v463 = vpop.f32.mrf.mxu0
      %v464 = vadd.f32 0.0, %v463
      %465 = vdwg.mxu0
      %466 = vmatpush.bf16.msra.mxu0 0
      %467 = vmatpush.bf16.msra.mxu0 0
      %468 = vmatpush.bf16.msra.mxu0 0
      %469 = vmatpush.bf16.msra.mxu0 0
      %470 = vmatpush.bf16.msra.mxu0 %v427
      %471 = vmatpush.bf16.msra.mxu0 %v425
      %472 = vmatpush.bf16.msra.mxu0 %v423
      %473 = vmatpush.bf16.msra.mxu0 %v421
      %474 = vmatmul.bf16.gmra.mxu0 %v442
      %v475 = vpop.f32.mrf.mxu0
      %v476 = vadd.f32 0.0, %v475
      %v477 = vpop.f32.mrf.mxu0
      %v478 = vadd.f32 0.0, %v477
      %479 = vmatmul.bf16.gmra.mxu0 %v445
      %v480 = vpop.f32.mrf.mxu0
      %v481 = vadd.f32 0.0, %v480
      %v482 = vpop.f32.mrf.mxu0
      %v483 = vadd.f32 0.0, %v482
      %484 = vdwg.mxu0
      %485 = vmatpush.bf16.msra.mxu0 0
      %486 = vmatpush.bf16.msra.mxu0 0
      %487 = vmatpush.bf16.msra.mxu0 0
      %488 = vmatpush.bf16.msra.mxu0 0
      %489 = vmatpush.bf16.msra.mxu0 %v418
      %490 = vmatpush.bf16.msra.mxu0 %v412
      %491 = vmatpush.bf16.msra.mxu0 %v406
      %492 = vmatpush.bf16.msra.mxu0 %v400
      %493 = vmatmul.bf16.gmra.mxu0 %v442
      %v494 = vpop.f32.mrf.mxu0
      %v495 = vadd.f32 0.0, %v494
      %v496 = vpop.f32.mrf.mxu0
      %v497 = vadd.f32 0.0, %v496
      %498 = vmatmul.bf16.gmra.mxu0 %v445
      %v499 = vpop.f32.mrf.mxu0
      %v500 = vadd.f32 0.0, %v499
      %v501 = vpop.f32.mrf.mxu0
      %v502 = vadd.f32 0.0, %v501
      %503 = vdwg.mxu0
      %v508 = vunpack.c.l.b16 %v308
      %v509 = vunpack.c.l.b16 %v309
      %v510 = vunpack.c.l.b16 %v310
      %v511 = vunpack.c.l.b16 %v311
      %v512 = vpack.c.b16 %v509, %v508
      %v513 = vpack.c.b16 %v511, %v510
      %v527 = vsel %vm440, %v512, 0
      %v530 = vsel %vm440, %v513, 0
      %532 = vmatpush.bf16.msra.mxu0 0
      %533 = vmatpush.bf16.msra.mxu0 0
      %534 = vmatpush.bf16.msra.mxu0 0
      %535 = vmatpush.bf16.msra.mxu0 0
      %536 = vmatpush.bf16.msra.mxu0 %v392
      %537 = vmatpush.bf16.msra.mxu0 %v389
      %538 = vmatpush.bf16.msra.mxu0 %v386
      %539 = vmatpush.bf16.msra.mxu0 %v383
      %540 = vmatmul.bf16.gmra.mxu0 %v527
      %v541 = vpop.f32.mrf.mxu0
      %v542 = vadd.f32 %v457, %v541
      %v543 = vpop.f32.mrf.mxu0
      %v544 = vadd.f32 %v459, %v543
      %545 = vmatmul.bf16.gmra.mxu0 %v530
      %v546 = vpop.f32.mrf.mxu0
      %v547 = vadd.f32 %v462, %v546
      %v548 = vpop.f32.mrf.mxu0
      %v549 = vadd.f32 %v464, %v548
      %550 = vdwg.mxu0
      %551 = vmatpush.bf16.msra.mxu0 0
      %552 = vmatpush.bf16.msra.mxu0 0
      %553 = vmatpush.bf16.msra.mxu0 0
      %554 = vmatpush.bf16.msra.mxu0 0
      %555 = vmatpush.bf16.msra.mxu0 %v393
      %556 = vmatpush.bf16.msra.mxu0 %v390
      %557 = vmatpush.bf16.msra.mxu0 %v387
      %558 = vmatpush.bf16.msra.mxu0 %v384
      %559 = vmatmul.bf16.gmra.mxu0 %v527
      %v560 = vpop.f32.mrf.mxu0
      %v561 = vadd.f32 %v476, %v560
      %v562 = vpop.f32.mrf.mxu0
      %v563 = vadd.f32 %v478, %v562
      %564 = vmatmul.bf16.gmra.mxu0 %v530
      %v565 = vpop.f32.mrf.mxu0
      %v566 = vadd.f32 %v481, %v565
      %v567 = vpop.f32.mrf.mxu0
      %v568 = vadd.f32 %v483, %v567
      %569 = vdwg.mxu0
      %570 = vmatpush.bf16.msra.mxu0 0
      %571 = vmatpush.bf16.msra.mxu0 0
      %572 = vmatpush.bf16.msra.mxu0 0
      %573 = vmatpush.bf16.msra.mxu0 0
      %574 = vmatpush.bf16.msra.mxu0 %v394
      %575 = vmatpush.bf16.msra.mxu0 %v391
      %576 = vmatpush.bf16.msra.mxu0 %v388
      %577 = vmatpush.bf16.msra.mxu0 %v385
      %578 = vmatmul.bf16.gmra.mxu0 %v527
      %v579 = vpop.f32.mrf.mxu0
      %v580 = vadd.f32 %v495, %v579
      %v581 = vpop.f32.mrf.mxu0
      %v582 = vadd.f32 %v497, %v581
      %583 = vmatmul.bf16.gmra.mxu0 %v530
      %v584 = vpop.f32.mrf.mxu0
      %v585 = vadd.f32 %v500, %v584
      %v586 = vpop.f32.mrf.mxu0
      %v587 = vadd.f32 %v502, %v586
      %588 = vdwg.mxu0
      %s589 = scalar_lea.vmem %s1, 32
      %v590 = vld [vmem:[%s589] sm:$0xf]
      %v591 = vld [vmem:[%s589 + $0x4] sm:$0xf]
      %v592 = vld [vmem:[%s589 + $0x8] sm:$0xf]
      %v593 = vld [vmem:[%s589 + $0xc] sm:$0xf]
      %v598 = vunpack.c.l.b16 %v590
      %v599 = vunpack.c.l.b16 %v591
      %v600 = vunpack.c.l.b16 %v592
      %v601 = vunpack.c.l.b16 %v593
      %v602 = vpack.c.b16 %v599, %v598
      %v603 = vpack.c.b16 %v601, %v600
      %604 = vrot.lane.b32.xlu0 %v383, 126
      %v605 = vpop.permute.xlu0 %604
      %606 = vrot.lane.b32.xlu0 %v384, 126
      %v607 = vpop.permute.xlu0 %606
      %608 = vrot.lane.b32.xlu0 %v385, 126
      %v609 = vpop.permute.xlu0 %608
      %610 = vrot.lane.b32.xlu0 %v386, 126
      %v611 = vpop.permute.xlu0 %610
      %612 = vrot.lane.b32.xlu0 %v387, 126
      %v613 = vpop.permute.xlu0 %612
      %614 = vrot.lane.b32.xlu0 %v388, 126
      %v615 = vpop.permute.xlu0 %614
      %616 = vrot.lane.b32.xlu0 %v389, 126
      %v617 = vpop.permute.xlu0 %616
      %618 = vrot.lane.b32.xlu0 %v390, 126
      %v619 = vpop.permute.xlu0 %618
      %620 = vrot.lane.b32.xlu0 %v391, 126
      %v621 = vpop.permute.xlu0 %620
      %622 = vrot.lane.b32.xlu0 %v392, 126
      %v623 = vpop.permute.xlu0 %622
      %624 = vrot.lane.b32.xlu0 %v393, 126
      %v625 = vpop.permute.xlu0 %624
      %626 = vrot.lane.b32.xlu0 %v394, 126
      %v627 = vpop.permute.xlu0 %626
      %vm628 = vcmask 1031168
      %v629 = vsel %vm628, %v605, %v607
      %v630 = vsel %vm628, %v607, %v609
      %v631 = vsel %vm628, %v611, %v613
      %v632 = vsel %vm628, %v613, %v615
      %v633 = vsel %vm628, %v617, %v619
      %v634 = vsel %vm628, %v619, %v621
      %v635 = vsel %vm628, %v623, %v625
      %v636 = vsel %vm628, %v625, %v627
      %v650 = vsel %vm440, %v602, 0
      %v653 = vsel %vm440, %v603, 0
      %655 = vmatpush.bf16.msra.mxu0 0
      %656 = vmatpush.bf16.msra.mxu0 0
      %657 = vmatpush.bf16.msra.mxu0 0
      %658 = vmatpush.bf16.msra.mxu0 0
      %659 = vmatpush.bf16.msra.mxu0 %v635
      %660 = vmatpush.bf16.msra.mxu0 %v633
      %661 = vmatpush.bf16.msra.mxu0 %v631
      %662 = vmatpush.bf16.msra.mxu0 %v629
      %663 = vmatmul.bf16.gmra.mxu0 %v650
      %v664 = vpop.f32.mrf.mxu0
      %v665 = vadd.f32 0.0, %v664
      %v666 = vpop.f32.mrf.mxu0
      %v667 = vadd.f32 0.0, %v666
      %668 = vmatmul.bf16.gmra.mxu0 %v653
      %v669 = vpop.f32.mrf.mxu0
      %v670 = vadd.f32 0.0, %v669
      %v671 = vpop.f32.mrf.mxu0
      %v672 = vadd.f32 0.0, %v671
      %673 = vdwg.mxu0
      %674 = vmatpush.bf16.msra.mxu0 0
      %675 = vmatpush.bf16.msra.mxu0 0
      %676 = vmatpush.bf16.msra.mxu0 0
      %677 = vmatpush.bf16.msra.mxu0 0
      %678 = vmatpush.bf16.msra.mxu0 %v636
      %679 = vmatpush.bf16.msra.mxu0 %v634
      %680 = vmatpush.bf16.msra.mxu0 %v632
      %681 = vmatpush.bf16.msra.mxu0 %v630
      %682 = vmatmul.bf16.gmra.mxu0 %v650
      %v683 = vpop.f32.mrf.mxu0
      %v684 = vadd.f32 0.0, %v683
      %v685 = vpop.f32.mrf.mxu0
      %v686 = vadd.f32 0.0, %v685
      %687 = vmatmul.bf16.gmra.mxu0 %v653
      %v688 = vpop.f32.mrf.mxu0
      %v689 = vadd.f32 0.0, %v688
      %v690 = vpop.f32.mrf.mxu0
      %v691 = vadd.f32 0.0, %v690
      %692 = vdwg.mxu0
      %693 = vmatpush.bf16.msra.mxu0 0
      %694 = vmatpush.bf16.msra.mxu0 0
      %695 = vmatpush.bf16.msra.mxu0 0
      %696 = vmatpush.bf16.msra.mxu0 0
      %697 = vmatpush.bf16.msra.mxu0 %v627
      %698 = vmatpush.bf16.msra.mxu0 %v621
      %699 = vmatpush.bf16.msra.mxu0 %v615
      %700 = vmatpush.bf16.msra.mxu0 %v609
      %701 = vmatmul.bf16.gmra.mxu0 %v650
      %v702 = vpop.f32.mrf.mxu0
      %v703 = vadd.f32 0.0, %v702
      %v704 = vpop.f32.mrf.mxu0
      %v705 = vadd.f32 0.0, %v704
      %706 = vmatmul.bf16.gmra.mxu0 %v653
      %v707 = vpop.f32.mrf.mxu0
      %v708 = vadd.f32 0.0, %v707
      %v709 = vpop.f32.mrf.mxu0
      %v710 = vadd.f32 0.0, %v709
      %711 = vdwg.mxu0
      %v712 = vadd.f32 %v542, %v665
      %v713 = vadd.f32 %v561, %v684
      %v714 = vadd.f32 %v580, %v703
      %v715 = vadd.f32 %v544, %v667
      %v716 = vadd.f32 %v563, %v686
      %v717 = vadd.f32 %v582, %v705
      %v718 = vadd.f32 %v547, %v670
      %v719 = vadd.f32 %v566, %v689
      %v720 = vadd.f32 %v585, %v708
      %v721 = vadd.f32 %v549, %v672
      %v722 = vadd.f32 %v568, %v691
      %v723 = vadd.f32 %v587, %v710
      %s724 = scalar_lea.vmem %s1, 48
      %v725 = vld [vmem:[%s724] sm:$0xf]
      %v726 = vld [vmem:[%s724 + $0x4] sm:$0xf]
      %v727 = vld [vmem:[%s724 + $0x8] sm:$0xf]
      %v728 = vld [vmem:[%s724 + $0xc] sm:$0xf]
      %v733 = vunpack.c.l.b16 %v725
      %v734 = vunpack.c.l.b16 %v726
      %v735 = vunpack.c.l.b16 %v727
      %v736 = vunpack.c.l.b16 %v728
      %v737 = vpack.c.b16 %v734, %v733
      %v738 = vpack.c.b16 %v736, %v735
      %739 = vrot.lane.b32.xlu0 %v383, 110
      %v740 = vpop.permute.xlu0 %739
      %741 = vrot.lane.b32.xlu0 %v384, 110
      %v742 = vpop.permute.xlu0 %741
      %743 = vrot.lane.b32.xlu0 %v385, 110
      %v744 = vpop.permute.xlu0 %743
      %745 = vrot.lane.b32.xlu0 %v386, 110
      %v746 = vpop.permute.xlu0 %745
      %747 = vrot.lane.b32.xlu0 %v387, 110
      %v748 = vpop.permute.xlu0 %747
      %749 = vrot.lane.b32.xlu0 %v388, 110
      %v750 = vpop.permute.xlu0 %749
      %751 = vrot.lane.b32.xlu0 %v389, 110
      %v752 = vpop.permute.xlu0 %751
      %753 = vrot.lane.b32.xlu0 %v390, 110
      %v754 = vpop.permute.xlu0 %753
      %755 = vrot.lane.b32.xlu0 %v391, 110
      %v756 = vpop.permute.xlu0 %755
      %757 = vrot.lane.b32.xlu0 %v392, 110
      %v758 = vpop.permute.xlu0 %757
      %759 = vrot.lane.b32.xlu0 %v393, 110
      %v760 = vpop.permute.xlu0 %759
      %761 = vrot.lane.b32.xlu0 %v394, 110
      %v762 = vpop.permute.xlu0 %761
      %vm763 = vcmask 900096
      %v764 = vsel %vm763, %v740, %v742
      %v765 = vsel %vm763, %v742, %v744
      %v766 = vsel %vm763, %v746, %v748
      %v767 = vsel %vm763, %v748, %v750
      %v768 = vsel %vm763, %v752, %v754
      %v769 = vsel %vm763, %v754, %v756
      %v770 = vsel %vm763, %v758, %v760
      %v771 = vsel %vm763, %v760, %v762
      %v785 = vsel %vm440, %v737, 0
      %v788 = vsel %vm440, %v738, 0
      %790 = vmatpush.bf16.msra.mxu0 0
      %791 = vmatpush.bf16.msra.mxu0 0
      %792 = vmatpush.bf16.msra.mxu0 0
      %793 = vmatpush.bf16.msra.mxu0 0
      %794 = vmatpush.bf16.msra.mxu0 %v770
      %795 = vmatpush.bf16.msra.mxu0 %v768
      %796 = vmatpush.bf16.msra.mxu0 %v766
      %797 = vmatpush.bf16.msra.mxu0 %v764
      %798 = vmatmul.bf16.gmra.mxu0 %v785
      %v799 = vpop.f32.mrf.mxu0
      %v800 = vadd.f32 0.0, %v799
      %v801 = vpop.f32.mrf.mxu0
      %v802 = vadd.f32 0.0, %v801
      %803 = vmatmul.bf16.gmra.mxu0 %v788
      %v804 = vpop.f32.mrf.mxu0
      %v805 = vadd.f32 0.0, %v804
      %v806 = vpop.f32.mrf.mxu0
      %v807 = vadd.f32 0.0, %v806
      %808 = vdwg.mxu0
      %809 = vmatpush.bf16.msra.mxu0 0
      %810 = vmatpush.bf16.msra.mxu0 0
      %811 = vmatpush.bf16.msra.mxu0 0
      %812 = vmatpush.bf16.msra.mxu0 0
      %813 = vmatpush.bf16.msra.mxu0 %v771
      %814 = vmatpush.bf16.msra.mxu0 %v769
      %815 = vmatpush.bf16.msra.mxu0 %v767
      %816 = vmatpush.bf16.msra.mxu0 %v765
      %817 = vmatmul.bf16.gmra.mxu0 %v785
      %v818 = vpop.f32.mrf.mxu0
      %v819 = vadd.f32 0.0, %v818
      %v820 = vpop.f32.mrf.mxu0
      %v821 = vadd.f32 0.0, %v820
      %822 = vmatmul.bf16.gmra.mxu0 %v788
      %v823 = vpop.f32.mrf.mxu0
      %v824 = vadd.f32 0.0, %v823
      %v825 = vpop.f32.mrf.mxu0
      %v826 = vadd.f32 0.0, %v825
      %827 = vdwg.mxu0
      %828 = vmatpush.bf16.msra.mxu0 0
      %829 = vmatpush.bf16.msra.mxu0 0
      %830 = vmatpush.bf16.msra.mxu0 0
      %831 = vmatpush.bf16.msra.mxu0 0
      %832 = vmatpush.bf16.msra.mxu0 %v762
      %833 = vmatpush.bf16.msra.mxu0 %v756
      %834 = vmatpush.bf16.msra.mxu0 %v750
      %835 = vmatpush.bf16.msra.mxu0 %v744
      %836 = vmatmul.bf16.gmra.mxu0 %v785
      %v837 = vpop.f32.mrf.mxu0
      %v838 = vadd.f32 0.0, %v837
      %v839 = vpop.f32.mrf.mxu0
      %v840 = vadd.f32 0.0, %v839
      %841 = vmatmul.bf16.gmra.mxu0 %v788
      %v842 = vpop.f32.mrf.mxu0
      %v843 = vadd.f32 0.0, %v842
      %v844 = vpop.f32.mrf.mxu0
      %v845 = vadd.f32 0.0, %v844
      %846 = vdwg.mxu0
      %v847 = vadd.f32 %v712, %v800
      %v848 = vadd.f32 %v713, %v819
      %v849 = vadd.f32 %v714, %v838
      %v850 = vadd.f32 %v715, %v802
      %v851 = vadd.f32 %v716, %v821
      %v852 = vadd.f32 %v717, %v840
      %v853 = vadd.f32 %v718, %v805
      %v854 = vadd.f32 %v719, %v824
      %v855 = vadd.f32 %v720, %v843
      %v856 = vadd.f32 %v721, %v807
      %v857 = vadd.f32 %v722, %v826
      %v858 = vadd.f32 %v723, %v845
      %s859 = scalar_lea.vmem %s1, 64
      %v860 = vld [vmem:[%s859] sm:$0xf]
      %v861 = vld [vmem:[%s859 + $0x4] sm:$0xf]
      %v862 = vld [vmem:[%s859 + $0x8] sm:$0xf]
      %v863 = vld [vmem:[%s859 + $0xc] sm:$0xf]
      %v868 = vunpack.c.l.b16 %v860
      %v869 = vunpack.c.l.b16 %v861
      %v870 = vunpack.c.l.b16 %v862
      %v871 = vunpack.c.l.b16 %v863
      %v872 = vpack.c.b16 %v869, %v868
      %v873 = vpack.c.b16 %v871, %v870
      %874 = vrot.lane.b32.xlu0 %v383, 109
      %v875 = vpop.permute.xlu0 %874
      %876 = vrot.lane.b32.xlu0 %v384, 109
      %v877 = vpop.permute.xlu0 %876
      %878 = vrot.lane.b32.xlu0 %v385, 109
      %v879 = vpop.permute.xlu0 %878
      %880 = vrot.lane.b32.xlu0 %v386, 109
      %v881 = vpop.permute.xlu0 %880
      %882 = vrot.lane.b32.xlu0 %v387, 109
      %v883 = vpop.permute.xlu0 %882
      %884 = vrot.lane.b32.xlu0 %v388, 109
      %v885 = vpop.permute.xlu0 %884
      %886 = vrot.lane.b32.xlu0 %v389, 109
      %v887 = vpop.permute.xlu0 %886
      %888 = vrot.lane.b32.xlu0 %v390, 109
      %v889 = vpop.permute.xlu0 %888
      %890 = vrot.lane.b32.xlu0 %v391, 109
      %v891 = vpop.permute.xlu0 %890
      %892 = vrot.lane.b32.xlu0 %v392, 109
      %v893 = vpop.permute.xlu0 %892
      %894 = vrot.lane.b32.xlu0 %v393, 109
      %v895 = vpop.permute.xlu0 %894
      %896 = vrot.lane.b32.xlu0 %v394, 109
      %v897 = vpop.permute.xlu0 %896
      %vm898 = vcmask 891904
      %v899 = vsel %vm898, %v875, %v877
      %v900 = vsel %vm898, %v877, %v879
      %v901 = vsel %vm898, %v881, %v883
      %v902 = vsel %vm898, %v883, %v885
      %v903 = vsel %vm898, %v887, %v889
      %v904 = vsel %vm898, %v889, %v891
      %v905 = vsel %vm898, %v893, %v895
      %v906 = vsel %vm898, %v895, %v897
      %v920 = vsel %vm440, %v872, 0
      %v923 = vsel %vm440, %v873, 0
      %925 = vmatpush.bf16.msra.mxu0 0
      %926 = vmatpush.bf16.msra.mxu0 0
      %927 = vmatpush.bf16.msra.mxu0 0
      %928 = vmatpush.bf16.msra.mxu0 0
      %929 = vmatpush.bf16.msra.mxu0 %v905
      %930 = vmatpush.bf16.msra.mxu0 %v903
      %931 = vmatpush.bf16.msra.mxu0 %v901
      %932 = vmatpush.bf16.msra.mxu0 %v899
      %933 = vmatmul.bf16.gmra.mxu0 %v920
      %v934 = vpop.f32.mrf.mxu0
      %v935 = vadd.f32 0.0, %v934
      %v936 = vpop.f32.mrf.mxu0
      %v937 = vadd.f32 0.0, %v936
      %938 = vmatmul.bf16.gmra.mxu0 %v923
      %v939 = vpop.f32.mrf.mxu0
      %v940 = vadd.f32 0.0, %v939
      %v941 = vpop.f32.mrf.mxu0
      %v942 = vadd.f32 0.0, %v941
      %943 = vdwg.mxu0
      %944 = vmatpush.bf16.msra.mxu0 0
      %945 = vmatpush.bf16.msra.mxu0 0
      %946 = vmatpush.bf16.msra.mxu0 0
      %947 = vmatpush.bf16.msra.mxu0 0
      %948 = vmatpush.bf16.msra.mxu0 %v906
      %949 = vmatpush.bf16.msra.mxu0 %v904
      %950 = vmatpush.bf16.msra.mxu0 %v902
      %951 = vmatpush.bf16.msra.mxu0 %v900
      %952 = vmatmul.bf16.gmra.mxu0 %v920
      %v953 = vpop.f32.mrf.mxu0
      %v954 = vadd.f32 0.0, %v953
      %v955 = vpop.f32.mrf.mxu0
      %v956 = vadd.f32 0.0, %v955
      %957 = vmatmul.bf16.gmra.mxu0 %v923
      %v958 = vpop.f32.mrf.mxu0
      %v959 = vadd.f32 0.0, %v958
      %v960 = vpop.f32.mrf.mxu0
      %v961 = vadd.f32 0.0, %v960
      %962 = vdwg.mxu0
      %963 = vmatpush.bf16.msra.mxu0 0
      %964 = vmatpush.bf16.msra.mxu0 0
      %965 = vmatpush.bf16.msra.mxu0 0
      %966 = vmatpush.bf16.msra.mxu0 0
      %967 = vmatpush.bf16.msra.mxu0 %v897
      %968 = vmatpush.bf16.msra.mxu0 %v891
      %969 = vmatpush.bf16.msra.mxu0 %v885
      %970 = vmatpush.bf16.msra.mxu0 %v879
      %971 = vmatmul.bf16.gmra.mxu0 %v920
      %v972 = vpop.f32.mrf.mxu0
      %v973 = vadd.f32 0.0, %v972
      %v974 = vpop.f32.mrf.mxu0
      %v975 = vadd.f32 0.0, %v974
      %976 = vmatmul.bf16.gmra.mxu0 %v923
      %v977 = vpop.f32.mrf.mxu0
      %v978 = vadd.f32 0.0, %v977
      %v979 = vpop.f32.mrf.mxu0
      %v980 = vadd.f32 0.0, %v979
      %981 = vdwg.mxu0
      %v982 = vadd.f32 %v847, %v935
      %v983 = vadd.f32 %v848, %v954
      %v984 = vadd.f32 %v849, %v973
      %v985 = vadd.f32 %v850, %v937
      %v986 = vadd.f32 %v851, %v956
      %v987 = vadd.f32 %v852, %v975
      %v988 = vadd.f32 %v853, %v940
      %v989 = vadd.f32 %v854, %v959
      %v990 = vadd.f32 %v855, %v978
      %v991 = vadd.f32 %v856, %v942
      %v992 = vadd.f32 %v857, %v961
      %v993 = vadd.f32 %v858, %v980
      %s994 = scalar_lea.vmem %s1, 80
      %v995 = vld [vmem:[%s994] sm:$0xf]
      %v996 = vld [vmem:[%s994 + $0x4] sm:$0xf]
      %v997 = vld [vmem:[%s994 + $0x8] sm:$0xf]
      %v998 = vld [vmem:[%s994 + $0xc] sm:$0xf]
      %v1003 = vunpack.c.l.b16 %v995
      %v1004 = vunpack.c.l.b16 %v996
      %v1005 = vunpack.c.l.b16 %v997
      %v1006 = vunpack.c.l.b16 %v998
      %v1007 = vpack.c.b16 %v1004, %v1003
      %v1008 = vpack.c.b16 %v1006, %v1005
      %1009 = vrot.lane.b32.xlu0 %v383, 108
      %v1010 = vpop.permute.xlu0 %1009
      %1011 = vrot.lane.b32.xlu0 %v384, 108
      %v1012 = vpop.permute.xlu0 %1011
      %1013 = vrot.lane.b32.xlu0 %v385, 108
      %v1014 = vpop.permute.xlu0 %1013
      %1015 = vrot.lane.b32.xlu0 %v386, 108
      %v1016 = vpop.permute.xlu0 %1015
      %1017 = vrot.lane.b32.xlu0 %v387, 108
      %v1018 = vpop.permute.xlu0 %1017
      %1019 = vrot.lane.b32.xlu0 %v388, 108
      %v1020 = vpop.permute.xlu0 %1019
      %1021 = vrot.lane.b32.xlu0 %v389, 108
      %v1022 = vpop.permute.xlu0 %1021
      %1023 = vrot.lane.b32.xlu0 %v390, 108
      %v1024 = vpop.permute.xlu0 %1023
      %1025 = vrot.lane.b32.xlu0 %v391, 108
      %v1026 = vpop.permute.xlu0 %1025
      %1027 = vrot.lane.b32.xlu0 %v392, 108
      %v1028 = vpop.permute.xlu0 %1027
      %1029 = vrot.lane.b32.xlu0 %v393, 108
      %v1030 = vpop.permute.xlu0 %1029
      %1031 = vrot.lane.b32.xlu0 %v394, 108
      %v1032 = vpop.permute.xlu0 %1031
      %vm1033 = vcmask 883712
      %v1034 = vsel %vm1033, %v1010, %v1012
      %v1035 = vsel %vm1033, %v1012, %v1014
      %v1036 = vsel %vm1033, %v1016, %v1018
      %v1037 = vsel %vm1033, %v1018, %v1020
      %v1038 = vsel %vm1033, %v1022, %v1024
      %v1039 = vsel %vm1033, %v1024, %v1026
      %v1040 = vsel %vm1033, %v1028, %v1030
      %v1041 = vsel %vm1033, %v1030, %v1032
      %v1055 = vsel %vm440, %v1007, 0
      %v1058 = vsel %vm440, %v1008, 0
      %1060 = vmatpush.bf16.msra.mxu0 0
      %1061 = vmatpush.bf16.msra.mxu0 0
      %1062 = vmatpush.bf16.msra.mxu0 0
      %1063 = vmatpush.bf16.msra.mxu0 0
      %1064 = vmatpush.bf16.msra.mxu0 %v1040
      %1065 = vmatpush.bf16.msra.mxu0 %v1038
      %1066 = vmatpush.bf16.msra.mxu0 %v1036
      %1067 = vmatpush.bf16.msra.mxu0 %v1034
      %1068 = vmatmul.bf16.gmra.mxu0 %v1055
      %v1069 = vpop.f32.mrf.mxu0
      %v1070 = vadd.f32 0.0, %v1069
      %v1071 = vpop.f32.mrf.mxu0
      %v1072 = vadd.f32 0.0, %v1071
      %1073 = vmatmul.bf16.gmra.mxu0 %v1058
      %v1074 = vpop.f32.mrf.mxu0
      %v1075 = vadd.f32 0.0, %v1074
      %v1076 = vpop.f32.mrf.mxu0
      %v1077 = vadd.f32 0.0, %v1076
      %1078 = vdwg.mxu0
      %1079 = vmatpush.bf16.msra.mxu0 0
      %1080 = vmatpush.bf16.msra.mxu0 0
      %1081 = vmatpush.bf16.msra.mxu0 0
      %1082 = vmatpush.bf16.msra.mxu0 0
      %1083 = vmatpush.bf16.msra.mxu0 %v1041
      %1084 = vmatpush.bf16.msra.mxu0 %v1039
      %1085 = vmatpush.bf16.msra.mxu0 %v1037
      %1086 = vmatpush.bf16.msra.mxu0 %v1035
      %1087 = vmatmul.bf16.gmra.mxu0 %v1055
      %v1088 = vpop.f32.mrf.mxu0
      %v1089 = vadd.f32 0.0, %v1088
      %v1090 = vpop.f32.mrf.mxu0
      %v1091 = vadd.f32 0.0, %v1090
      %1092 = vmatmul.bf16.gmra.mxu0 %v1058
      %v1093 = vpop.f32.mrf.mxu0
      %v1094 = vadd.f32 0.0, %v1093
      %v1095 = vpop.f32.mrf.mxu0
      %v1096 = vadd.f32 0.0, %v1095
      %1097 = vdwg.mxu0
      %1098 = vmatpush.bf16.msra.mxu0 0
      %1099 = vmatpush.bf16.msra.mxu0 0
      %1100 = vmatpush.bf16.msra.mxu0 0
      %1101 = vmatpush.bf16.msra.mxu0 0
      %1102 = vmatpush.bf16.msra.mxu0 %v1032
      %1103 = vmatpush.bf16.msra.mxu0 %v1026
      %1104 = vmatpush.bf16.msra.mxu0 %v1020
      %1105 = vmatpush.bf16.msra.mxu0 %v1014
      %1106 = vmatmul.bf16.gmra.mxu0 %v1055
      %v1107 = vpop.f32.mrf.mxu0
      %v1108 = vadd.f32 0.0, %v1107
      %v1109 = vpop.f32.mrf.mxu0
      %v1110 = vadd.f32 0.0, %v1109
      %1111 = vmatmul.bf16.gmra.mxu0 %v1058
      %v1112 = vpop.f32.mrf.mxu0
      %v1113 = vadd.f32 0.0, %v1112
      %v1114 = vpop.f32.mrf.mxu0
      %v1115 = vadd.f32 0.0, %v1114
      %1116 = vdwg.mxu0
      %v1117 = vadd.f32 %v982, %v1070
      %v1118 = vadd.f32 %v983, %v1089
      %v1119 = vadd.f32 %v984, %v1108
      %v1120 = vadd.f32 %v985, %v1072
      %v1121 = vadd.f32 %v986, %v1091
      %v1122 = vadd.f32 %v987, %v1110
      %v1123 = vadd.f32 %v988, %v1075
      %v1124 = vadd.f32 %v989, %v1094
      %v1125 = vadd.f32 %v990, %v1113
      %v1126 = vadd.f32 %v991, %v1077
      %v1127 = vadd.f32 %v992, %v1096
      %v1128 = vadd.f32 %v993, %v1115
      %s1129 = scalar_lea.vmem %s1, 96
      %v1130 = vld [vmem:[%s1129] sm:$0xf]
      %v1131 = vld [vmem:[%s1129 + $0x4] sm:$0xf]
      %v1132 = vld [vmem:[%s1129 + $0x8] sm:$0xf]
      %v1133 = vld [vmem:[%s1129 + $0xc] sm:$0xf]
      %v1138 = vunpack.c.l.b16 %v1130
      %v1139 = vunpack.c.l.b16 %v1131
      %v1140 = vunpack.c.l.b16 %v1132
      %v1141 = vunpack.c.l.b16 %v1133
      %v1142 = vpack.c.b16 %v1139, %v1138
      %v1143 = vpack.c.b16 %v1141, %v1140
      %1144 = vrot.lane.b32.xlu0 %v383, 92
      %v1145 = vpop.permute.xlu0 %1144
      %1146 = vrot.lane.b32.xlu0 %v384, 92
      %v1147 = vpop.permute.xlu0 %1146
      %1148 = vrot.lane.b32.xlu0 %v385, 92
      %v1149 = vpop.permute.xlu0 %1148
      %1150 = vrot.lane.b32.xlu0 %v386, 92
      %v1151 = vpop.permute.xlu0 %1150
      %1152 = vrot.lane.b32.xlu0 %v387, 92
      %v1153 = vpop.permute.xlu0 %1152
      %1154 = vrot.lane.b32.xlu0 %v388, 92
      %v1155 = vpop.permute.xlu0 %1154
      %1156 = vrot.lane.b32.xlu0 %v389, 92
      %v1157 = vpop.permute.xlu0 %1156
      %1158 = vrot.lane.b32.xlu0 %v390, 92
      %v1159 = vpop.permute.xlu0 %1158
      %1160 = vrot.lane.b32.xlu0 %v391, 92
      %v1161 = vpop.permute.xlu0 %1160
      %1162 = vrot.lane.b32.xlu0 %v392, 92
      %v1163 = vpop.permute.xlu0 %1162
      %1164 = vrot.lane.b32.xlu0 %v393, 92
      %v1165 = vpop.permute.xlu0 %1164
      %1166 = vrot.lane.b32.xlu0 %v394, 92
      %v1167 = vpop.permute.xlu0 %1166
      %vm1168 = vcmask 752640
      %v1169 = vsel %vm1168, %v1145, %v1147
      %v1170 = vsel %vm1168, %v1147, %v1149
      %v1171 = vsel %vm1168, %v1151, %v1153
      %v1172 = vsel %vm1168, %v1153, %v1155
      %v1173 = vsel %vm1168, %v1157, %v1159
      %v1174 = vsel %vm1168, %v1159, %v1161
      %v1175 = vsel %vm1168, %v1163, %v1165
      %v1176 = vsel %vm1168, %v1165, %v1167
      %v1190 = vsel %vm440, %v1142, 0
      %v1193 = vsel %vm440, %v1143, 0
      %1195 = vmatpush.bf16.msra.mxu0 0
      %1196 = vmatpush.bf16.msra.mxu0 0
      %1197 = vmatpush.bf16.msra.mxu0 0
      %1198 = vmatpush.bf16.msra.mxu0 0
      %1199 = vmatpush.bf16.msra.mxu0 %v1175
      %1200 = vmatpush.bf16.msra.mxu0 %v1173
      %1201 = vmatpush.bf16.msra.mxu0 %v1171
      %1202 = vmatpush.bf16.msra.mxu0 %v1169
      %1203 = vmatmul.bf16.gmra.mxu0 %v1190
      %v1204 = vpop.f32.mrf.mxu0
      %v1205 = vadd.f32 0.0, %v1204
      %v1206 = vpop.f32.mrf.mxu0
      %v1207 = vadd.f32 0.0, %v1206
      %1208 = vmatmul.bf16.gmra.mxu0 %v1193
      %v1209 = vpop.f32.mrf.mxu0
      %v1210 = vadd.f32 0.0, %v1209
      %v1211 = vpop.f32.mrf.mxu0
      %v1212 = vadd.f32 0.0, %v1211
      %1213 = vdwg.mxu0
      %1214 = vmatpush.bf16.msra.mxu0 0
      %1215 = vmatpush.bf16.msra.mxu0 0
      %1216 = vmatpush.bf16.msra.mxu0 0
      %1217 = vmatpush.bf16.msra.mxu0 0
      %1218 = vmatpush.bf16.msra.mxu0 %v1176
      %1219 = vmatpush.bf16.msra.mxu0 %v1174
      %1220 = vmatpush.bf16.msra.mxu0 %v1172
      %1221 = vmatpush.bf16.msra.mxu0 %v1170
      %1222 = vmatmul.bf16.gmra.mxu0 %v1190
      %v1223 = vpop.f32.mrf.mxu0
      %v1224 = vadd.f32 0.0, %v1223
      %v1225 = vpop.f32.mrf.mxu0
      %v1226 = vadd.f32 0.0, %v1225
      %1227 = vmatmul.bf16.gmra.mxu0 %v1193
      %v1228 = vpop.f32.mrf.mxu0
      %v1229 = vadd.f32 0.0, %v1228
      %v1230 = vpop.f32.mrf.mxu0
      %v1231 = vadd.f32 0.0, %v1230
      %1232 = vdwg.mxu0
      %1233 = vmatpush.bf16.msra.mxu0 0
      %1234 = vmatpush.bf16.msra.mxu0 0
      %1235 = vmatpush.bf16.msra.mxu0 0
      %1236 = vmatpush.bf16.msra.mxu0 0
      %1237 = vmatpush.bf16.msra.mxu0 %v1167
      %1238 = vmatpush.bf16.msra.mxu0 %v1161
      %1239 = vmatpush.bf16.msra.mxu0 %v1155
      %1240 = vmatpush.bf16.msra.mxu0 %v1149
      %1241 = vmatmul.bf16.gmra.mxu0 %v1190
      %v1242 = vpop.f32.mrf.mxu0
      %v1243 = vadd.f32 0.0, %v1242
      %v1244 = vpop.f32.mrf.mxu0
      %v1245 = vadd.f32 0.0, %v1244
      %1246 = vmatmul.bf16.gmra.mxu0 %v1193
      %v1247 = vpop.f32.mrf.mxu0
      %v1248 = vadd.f32 0.0, %v1247
      %v1249 = vpop.f32.mrf.mxu0
      %v1250 = vadd.f32 0.0, %v1249
      %1251 = vdwg.mxu0
      %v1252 = vadd.f32 %v1117, %v1205
      %v1253 = vadd.f32 %v1118, %v1224
      %v1254 = vadd.f32 %v1119, %v1243
      %v1255 = vadd.f32 %v1120, %v1207
      %v1256 = vadd.f32 %v1121, %v1226
      %v1257 = vadd.f32 %v1122, %v1245
      %v1258 = vadd.f32 %v1123, %v1210
      %v1259 = vadd.f32 %v1124, %v1229
      %v1260 = vadd.f32 %v1125, %v1248
      %v1261 = vadd.f32 %v1126, %v1212
      %v1262 = vadd.f32 %v1127, %v1231
      %v1263 = vadd.f32 %v1128, %v1250
      %s1264 = scalar_lea.vmem %s1, 112
      %v1265 = vld [vmem:[%s1264] sm:$0xf]
      %v1266 = vld [vmem:[%s1264 + $0x4] sm:$0xf]
      %v1267 = vld [vmem:[%s1264 + $0x8] sm:$0xf]
      %v1268 = vld [vmem:[%s1264 + $0xc] sm:$0xf]
      %v1273 = vunpack.c.l.b16 %v1265
      %v1274 = vunpack.c.l.b16 %v1266
      %v1275 = vunpack.c.l.b16 %v1267
      %v1276 = vunpack.c.l.b16 %v1268
      %v1277 = vpack.c.b16 %v1274, %v1273
      %v1278 = vpack.c.b16 %v1276, %v1275
      %1279 = vrot.lane.b32.xlu0 %v383, 91
      %v1280 = vpop.permute.xlu0 %1279
      %1281 = vrot.lane.b32.xlu0 %v384, 91
      %v1282 = vpop.permute.xlu0 %1281
      %1283 = vrot.lane.b32.xlu0 %v385, 91
      %v1284 = vpop.permute.xlu0 %1283
      %1285 = vrot.lane.b32.xlu0 %v386, 91
      %v1286 = vpop.permute.xlu0 %1285
      %1287 = vrot.lane.b32.xlu0 %v387, 91
      %v1288 = vpop.permute.xlu0 %1287
      %1289 = vrot.lane.b32.xlu0 %v388, 91
      %v1290 = vpop.permute.xlu0 %1289
      %1291 = vrot.lane.b32.xlu0 %v389, 91
      %v1292 = vpop.permute.xlu0 %1291
      %1293 = vrot.lane.b32.xlu0 %v390, 91
      %v1294 = vpop.permute.xlu0 %1293
      %1295 = vrot.lane.b32.xlu0 %v391, 91
      %v1296 = vpop.permute.xlu0 %1295
      %1297 = vrot.lane.b32.xlu0 %v392, 91
      %v1298 = vpop.permute.xlu0 %1297
      %1299 = vrot.lane.b32.xlu0 %v393, 91
      %v1300 = vpop.permute.xlu0 %1299
      %1301 = vrot.lane.b32.xlu0 %v394, 91
      %v1302 = vpop.permute.xlu0 %1301
      %vm1303 = vcmask 744448
      %v1304 = vsel %vm1303, %v1280, %v1282
      %v1305 = vsel %vm1303, %v1282, %v1284
      %v1306 = vsel %vm1303, %v1286, %v1288
      %v1307 = vsel %vm1303, %v1288, %v1290
      %v1308 = vsel %vm1303, %v1292, %v1294
      %v1309 = vsel %vm1303, %v1294, %v1296
      %v1310 = vsel %vm1303, %v1298, %v1300
      %v1311 = vsel %vm1303, %v1300, %v1302
      %v1325 = vsel %vm440, %v1277, 0
      %v1328 = vsel %vm440, %v1278, 0
      %1330 = vmatpush.bf16.msra.mxu0 0
      %1331 = vmatpush.bf16.msra.mxu0 0
      %1332 = vmatpush.bf16.msra.mxu0 0
      %1333 = vmatpush.bf16.msra.mxu0 0
      %1334 = vmatpush.bf16.msra.mxu0 %v1310
      %1335 = vmatpush.bf16.msra.mxu0 %v1308
      %1336 = vmatpush.bf16.msra.mxu0 %v1306
      %1337 = vmatpush.bf16.msra.mxu0 %v1304
      %1338 = vmatmul.bf16.gmra.mxu0 %v1325
      %v1339 = vpop.f32.mrf.mxu0
      %v1340 = vadd.f32 0.0, %v1339
      %v1341 = vpop.f32.mrf.mxu0
      %v1342 = vadd.f32 0.0, %v1341
      %1343 = vmatmul.bf16.gmra.mxu0 %v1328
      %v1344 = vpop.f32.mrf.mxu0
      %v1345 = vadd.f32 0.0, %v1344
      %v1346 = vpop.f32.mrf.mxu0
      %v1347 = vadd.f32 0.0, %v1346
      %1348 = vdwg.mxu0
      %1349 = vmatpush.bf16.msra.mxu0 0
      %1350 = vmatpush.bf16.msra.mxu0 0
      %1351 = vmatpush.bf16.msra.mxu0 0
      %1352 = vmatpush.bf16.msra.mxu0 0
      %1353 = vmatpush.bf16.msra.mxu0 %v1311
      %1354 = vmatpush.bf16.msra.mxu0 %v1309
      %1355 = vmatpush.bf16.msra.mxu0 %v1307
      %1356 = vmatpush.bf16.msra.mxu0 %v1305
      %1357 = vmatmul.bf16.gmra.mxu0 %v1325
      %v1358 = vpop.f32.mrf.mxu0
      %v1359 = vadd.f32 0.0, %v1358
      %v1360 = vpop.f32.mrf.mxu0
      %v1361 = vadd.f32 0.0, %v1360
      %1362 = vmatmul.bf16.gmra.mxu0 %v1328
      %v1363 = vpop.f32.mrf.mxu0
      %v1364 = vadd.f32 0.0, %v1363
      %v1365 = vpop.f32.mrf.mxu0
      %v1366 = vadd.f32 0.0, %v1365
      %1367 = vdwg.mxu0
      %1368 = vmatpush.bf16.msra.mxu0 0
      %1369 = vmatpush.bf16.msra.mxu0 0
      %1370 = vmatpush.bf16.msra.mxu0 0
      %1371 = vmatpush.bf16.msra.mxu0 0
      %1372 = vmatpush.bf16.msra.mxu0 %v1302
      %1373 = vmatpush.bf16.msra.mxu0 %v1296
      %1374 = vmatpush.bf16.msra.mxu0 %v1290
      %1375 = vmatpush.bf16.msra.mxu0 %v1284
      %1376 = vmatmul.bf16.gmra.mxu0 %v1325
      %v1377 = vpop.f32.mrf.mxu0
      %v1378 = vadd.f32 0.0, %v1377
      %v1379 = vpop.f32.mrf.mxu0
      %v1380 = vadd.f32 0.0, %v1379
      %1381 = vmatmul.bf16.gmra.mxu0 %v1328
      %v1382 = vpop.f32.mrf.mxu0
      %v1383 = vadd.f32 0.0, %v1382
      %v1384 = vpop.f32.mrf.mxu0
      %v1385 = vadd.f32 0.0, %v1384
      %1386 = vdwg.mxu0
      %v1387 = vadd.f32 %v1252, %v1340
      %v1388 = vadd.f32 %v1253, %v1359
      %v1389 = vadd.f32 %v1254, %v1378
      %v1390 = vadd.f32 %v1255, %v1342
      %v1391 = vadd.f32 %v1256, %v1361
      %v1392 = vadd.f32 %v1257, %v1380
      %v1393 = vadd.f32 %v1258, %v1345
      %v1394 = vadd.f32 %v1259, %v1364
      %v1395 = vadd.f32 %v1260, %v1383
      %v1396 = vadd.f32 %v1261, %v1347
      %v1397 = vadd.f32 %v1262, %v1366
      %v1398 = vadd.f32 %v1263, %v1385
      %s1399 = scalar_lea.vmem %s1, 128
      %v1400 = vld [vmem:[%s1399] sm:$0xf]
      %v1401 = vld [vmem:[%s1399 + $0x4] sm:$0xf]
      %v1402 = vld [vmem:[%s1399 + $0x8] sm:$0xf]
      %v1403 = vld [vmem:[%s1399 + $0xc] sm:$0xf]
      %v1408 = vunpack.c.l.b16 %v1400
      %v1409 = vunpack.c.l.b16 %v1401
      %v1410 = vunpack.c.l.b16 %v1402
      %v1411 = vunpack.c.l.b16 %v1403
      %v1412 = vpack.c.b16 %v1409, %v1408
      %v1413 = vpack.c.b16 %v1411, %v1410
      %1414 = vrot.lane.b32.xlu0 %v383, 90
      %v1415 = vpop.permute.xlu0 %1414
      %1416 = vrot.lane.b32.xlu0 %v384, 90
      %v1417 = vpop.permute.xlu0 %1416
      %1418 = vrot.lane.b32.xlu0 %v385, 90
      %v1419 = vpop.permute.xlu0 %1418
      %1420 = vrot.lane.b32.xlu0 %v386, 90
      %v1421 = vpop.permute.xlu0 %1420
      %1422 = vrot.lane.b32.xlu0 %v387, 90
      %v1423 = vpop.permute.xlu0 %1422
      %1424 = vrot.lane.b32.xlu0 %v388, 90
      %v1425 = vpop.permute.xlu0 %1424
      %1426 = vrot.lane.b32.xlu0 %v389, 90
      %v1427 = vpop.permute.xlu0 %1426
      %1428 = vrot.lane.b32.xlu0 %v390, 90
      %v1429 = vpop.permute.xlu0 %1428
      %1430 = vrot.lane.b32.xlu0 %v391, 90
      %v1431 = vpop.permute.xlu0 %1430
      %1432 = vrot.lane.b32.xlu0 %v392, 90
      %v1433 = vpop.permute.xlu0 %1432
      %1434 = vrot.lane.b32.xlu0 %v393, 90
      %v1435 = vpop.permute.xlu0 %1434
      %1436 = vrot.lane.b32.xlu0 %v394, 90
      %v1437 = vpop.permute.xlu0 %1436
      %vm1438 = vcmask 736256
      %v1439 = vsel %vm1438, %v1415, %v1417
      %v1440 = vsel %vm1438, %v1417, %v1419
      %v1441 = vsel %vm1438, %v1421, %v1423
      %v1442 = vsel %vm1438, %v1423, %v1425
      %v1443 = vsel %vm1438, %v1427, %v1429
      %v1444 = vsel %vm1438, %v1429, %v1431
      %v1445 = vsel %vm1438, %v1433, %v1435
      %v1446 = vsel %vm1438, %v1435, %v1437
      %v1460 = vsel %vm440, %v1412, 0
      %v1463 = vsel %vm440, %v1413, 0
      %1465 = vmatpush.bf16.msra.mxu0 0
      %1466 = vmatpush.bf16.msra.mxu0 0
      %1467 = vmatpush.bf16.msra.mxu0 0
      %1468 = vmatpush.bf16.msra.mxu0 0
      %1469 = vmatpush.bf16.msra.mxu0 %v1445
      %1470 = vmatpush.bf16.msra.mxu0 %v1443
      %1471 = vmatpush.bf16.msra.mxu0 %v1441
      %1472 = vmatpush.bf16.msra.mxu0 %v1439
      %1473 = vmatmul.bf16.gmra.mxu0 %v1460
      %v1474 = vpop.f32.mrf.mxu0
      %v1475 = vadd.f32 0.0, %v1474
      %v1476 = vpop.f32.mrf.mxu0
      %v1477 = vadd.f32 0.0, %v1476
      %1478 = vmatmul.bf16.gmra.mxu0 %v1463
      %v1479 = vpop.f32.mrf.mxu0
      %v1480 = vadd.f32 0.0, %v1479
      %v1481 = vpop.f32.mrf.mxu0
      %v1482 = vadd.f32 0.0, %v1481
      %1483 = vdwg.mxu0
      %1484 = vmatpush.bf16.msra.mxu0 0
      %1485 = vmatpush.bf16.msra.mxu0 0
      %1486 = vmatpush.bf16.msra.mxu0 0
      %1487 = vmatpush.bf16.msra.mxu0 0
      %1488 = vmatpush.bf16.msra.mxu0 %v1446
      %1489 = vmatpush.bf16.msra.mxu0 %v1444
      %1490 = vmatpush.bf16.msra.mxu0 %v1442
      %1491 = vmatpush.bf16.msra.mxu0 %v1440
      %1492 = vmatmul.bf16.gmra.mxu0 %v1460
      %v1493 = vpop.f32.mrf.mxu0
      %v1494 = vadd.f32 0.0, %v1493
      %v1495 = vpop.f32.mrf.mxu0
      %v1496 = vadd.f32 0.0, %v1495
      %1497 = vmatmul.bf16.gmra.mxu0 %v1463
      %v1498 = vpop.f32.mrf.mxu0
      %v1499 = vadd.f32 0.0, %v1498
      %v1500 = vpop.f32.mrf.mxu0
      %v1501 = vadd.f32 0.0, %v1500
      %1502 = vdwg.mxu0
      %1503 = vmatpush.bf16.msra.mxu0 0
      %1504 = vmatpush.bf16.msra.mxu0 0
      %1505 = vmatpush.bf16.msra.mxu0 0
      %1506 = vmatpush.bf16.msra.mxu0 0
      %1507 = vmatpush.bf16.msra.mxu0 %v1437
      %1508 = vmatpush.bf16.msra.mxu0 %v1431
      %1509 = vmatpush.bf16.msra.mxu0 %v1425
      %1510 = vmatpush.bf16.msra.mxu0 %v1419
      %1511 = vmatmul.bf16.gmra.mxu0 %v1460
      %v1512 = vpop.f32.mrf.mxu0
      %v1513 = vadd.f32 0.0, %v1512
      %v1514 = vpop.f32.mrf.mxu0
      %v1515 = vadd.f32 0.0, %v1514
      %1516 = vmatmul.bf16.gmra.mxu0 %v1463
      %v1517 = vpop.f32.mrf.mxu0
      %v1518 = vadd.f32 0.0, %v1517
      %v1519 = vpop.f32.mrf.mxu0
      %v1520 = vadd.f32 0.0, %v1519
      %1521 = vdwg.mxu0
      %v1522 = vadd.f32 %v1387, %v1475
      %v1523 = vadd.f32 %v1388, %v1494
      %v1524 = vadd.f32 %v1389, %v1513
      %v1525 = vadd.f32 %v1390, %v1477
      %v1526 = vadd.f32 %v1391, %v1496
      %v1527 = vadd.f32 %v1392, %v1515
      %v1528 = vadd.f32 %v1393, %v1480
      %v1529 = vadd.f32 %v1394, %v1499
      %v1530 = vadd.f32 %v1395, %v1518
      %v1531 = vadd.f32 %v1396, %v1482
      %v1532 = vadd.f32 %v1397, %v1501
      %v1533 = vadd.f32 %v1398, %v1520
      %1534 = vst [vmem:[#allocation2] sm:$0xff] 0
      %1535 = vst [vmem:[#allocation2 + $0x8] sm:$0xf] 0
      %1536 = vst [vmem:[#allocation2 + $0xc] sm:$0xff] 0
      %1537 = vst [vmem:[#allocation2 + $0x14] sm:$0xf] 0
      %1538 = vst [vmem:[#allocation2 + $0x18] sm:$0xff] 0
      %1539 = vst [vmem:[#allocation2 + $0x20] sm:$0xf] 0
      %1540 = vst [vmem:[#allocation2 + $0x24] sm:$0xff] 0
      %1541 = vst [vmem:[#allocation2 + $0x2c] sm:$0xf] 0
      %v1543 = vperm.slane %v307, 0
      %v1544 = vperm.slane %v307, 1
      %v1545 = vperm.slane %v307, 2
      %v1549 = vmul.f32 %v1522, %v1543
      %v1550 = vmul.f32 %v1523, %v1544
      %v1551 = vmul.f32 %v1524, %v1545
      %v1552 = vmul.f32 %v1525, %v1543
      %v1553 = vmul.f32 %v1526, %v1544
      %v1554 = vmul.f32 %v1527, %v1545
      %v1555 = vadd.f32 %v1549, %v1550
      %vm1556 = vcmask 261120
      %v1557 = vsel %vm1556, %v1551, 0.0
      %v1558 = vadd.f32 %v1555, %v1557
      %v1559 = vadd.f32 %v1558, %v1552
      %v1560 = vadd.f32 %v1559, %v1553
      %v1561 = vsel %vm1556, %v1554, 0.0
      %v1562 = vadd.f32 %v1560, %v1561
      %1563 = vadd.xlane.f32.xlu0 %v1562
      %v1564 = vpop.xlane.xlu0 %1563
      %v1565 = vrot.slane %v1564, 4
      %v1566 = vadd.f32 %v1564, %v1565
      %v1567 = vrot.slane %v1566, 2
      %v1568 = vadd.f32 %v1566, %v1567
      %v1569 = vrot.slane %v1568, 1
      %v1570 = vadd.f32 %v1568, %v1569
      %s1571 = vtos %v1570
      %s1572 = smul.f32 %s1571, 0.00024414063
      %v1573 = vstv %s1572
      %v1574 = vsub.f32 %v1522, %v1573
      %v1575 = vsub.f32 %v1523, %v1573
      %v1576 = vsub.f32 %v1524, %v1573
      %v1577 = vsub.f32 %v1525, %v1573
      %v1578 = vsub.f32 %v1526, %v1573
      %v1579 = vsub.f32 %v1527, %v1573
      %v1580 = vmul.f32 %v1574, %v1574
      %v1581 = vmul.f32 %v1575, %v1575
      %v1582 = vmul.f32 %v1576, %v1576
      %v1583 = vmul.f32 %v1577, %v1577
      %v1584 = vmul.f32 %v1578, %v1578
      %v1585 = vmul.f32 %v1579, %v1579
      %v1586 = vmul.f32 %v1580, %v1543
      %v1587 = vmul.f32 %v1581, %v1544
      %v1588 = vmul.f32 %v1582, %v1545
      %v1589 = vmul.f32 %v1583, %v1543
      %v1590 = vmul.f32 %v1584, %v1544
      %v1591 = vmul.f32 %v1585, %v1545
      %v1592 = vadd.f32 %v1586, %v1587
      %v1593 = vsel %vm1556, %v1588, 0.0
      %v1594 = vadd.f32 %v1592, %v1593
      %v1595 = vadd.f32 %v1594, %v1589
      %v1596 = vadd.f32 %v1595, %v1590
      %v1597 = vsel %vm1556, %v1591, 0.0
      %v1598 = vadd.f32 %v1596, %v1597
      %1599 = vadd.xlane.f32.xlu0 %v1598
      %v1600 = vpop.xlane.xlu0 %1599
      %v1601 = vrot.slane %v1600, 4
      %v1602 = vadd.f32 %v1600, %v1601
      %v1603 = vrot.slane %v1602, 2
      %v1604 = vadd.f32 %v1602, %v1603
      %v1605 = vrot.slane %v1604, 1
      %v1606 = vadd.f32 %v1604, %v1605
      %s1607 = vtos %v1606
      %s1608 = smul.f32 %s1607, 0.00024414063
      %s1609 = sadd.f32 %s1608, 1e-05
      %v1610 = vstv %s1609
      %v1611 = vrsqrt.pop %v1610
      %v1612 = vmul.f32 %v1611, %v1610
      %v1613 = vmul.f32 %v1612, %v1611
      %v1614 = vmul.f32 0.5, %v1613
      %v1615 = vsub.f32 1.5, %v1614
      %v1616 = vmul.f32 %v1611, %v1615
      %vm1617 = vweird.f32 %v1610
      %vm1618 = vweird.f32 %v1611
      %vm1619 = vmor %vm1617, %vm1618
      %v1620 = vsel %vm1619, %v1611, %v1616
      %s1621 = vtos %v1620
      %v1622 = vstv %s1621
      %v1623 = vmul.f32 %v1574, %v1622
      %v1624 = vmul.f32 %v1575, %v1622
      %v1625 = vmul.f32 %v1576, %v1622
      %v1626 = vmul.f32 %v1577, %v1622
      %v1627 = vmul.f32 %v1578, %v1622
      %v1628 = vmul.f32 %v1579, %v1622
      %v1629 = vld [vmem:[%s4] sm:$0xff]
      %v1630 = vld [vmem:[%s4 + $0x8] sm:$0xff]
      %1632 = vset.pattern.permute.xlu0 0
      %1633 = vperm.xlu0 %1632, %v1629
      %v1634 = vpop.permute.xlu0 %1633
      %1637 = vset.pattern.permute.xlu0 0
      %1638 = vperm.xlu0 %1637, %v1630
      %v1639 = vpop.permute.xlu0 %1638
      %v1641 = vmul.f32 %v1623, %v1634
      %v1642 = vmul.f32 %v1624, %v1634
      %v1643 = vmul.f32 %v1625, %v1634
      %v1644 = vmul.f32 %v1626, %v1639
      %v1645 = vmul.f32 %v1627, %v1639
      %v1646 = vmul.f32 %v1628, %v1639
      %v1647 = vld [vmem:[%s5] sm:$0xff]
      %v1648 = vld [vmem:[%s5 + $0x8] sm:$0xff]
      %1650 = vset.pattern.permute.xlu0 0
      %1651 = vperm.xlu0 %1650, %v1647
      %v1652 = vpop.permute.xlu0 %1651
      %1655 = vset.pattern.permute.xlu0 0
      %1656 = vperm.xlu0 %1655, %v1648
      %v1657 = vpop.permute.xlu0 %1656
      %v1659 = vadd.f32 %v1641, %v1652
      %v1660 = vadd.f32 %v1642, %v1652
      %v1661 = vadd.f32 %v1643, %v1652
      %v1662 = vadd.f32 %v1644, %v1657
      %v1663 = vadd.f32 %v1645, %v1657
      %v1664 = vadd.f32 %v1646, %v1657
      %v1665 = vmax.f32 %v1659, 0.0
      %v1666 = vmax.f32 %v1660, 0.0
      %v1667 = vmax.f32 %v1661, 0.0
      %v1668 = vmax.f32 %v1662, 0.0
      %v1669 = vmax.f32 %v1663, 0.0
      %v1670 = vmax.f32 %v1664, 0.0
      %v1671 = vmul.f32 %v1665, %v1543
      %v1672 = vmul.f32 %v1666, %v1544
      %v1673 = vmul.f32 %v1667, %v1545
      %v1674 = vmul.f32 %v1668, %v1543
      %v1675 = vmul.f32 %v1669, %v1544
      %v1676 = vmul.f32 %v1670, %v1545
      %v1677 = vpack.c.bf16 %v1672, %v1671
      %v1678 = vpack.c.bf16 %v1673, %v1673
      %v1679 = vpack.c.bf16 %v1675, %v1674
      %v1680 = vpack.c.bf16 %v1676, %v1676
      %1685 = vrot.lane.b32.xlu0 %v1677, 19
      %v1686 = vpop.permute.xlu0 %1685
      %1687 = vrot.lane.b32.xlu0 %v1678, 19
      %v1688 = vpop.permute.xlu0 %1687
      %1689 = vrot.lane.b32.xlu0 %v1679, 19
      %v1690 = vpop.permute.xlu0 %1689
      %1691 = vrot.lane.b32.xlu0 %v1680, 19
      %v1692 = vpop.permute.xlu0 %1691
      %v1693 = vrot.slane %v1686, 4
      %v1694 = vrot.slane %v1690, 4
      %vm1695 = vcmask 154624
      %v1696 = vsel %vm1695, %v1693, %v1686
      %v1697 = vsel %vm1695, %v1693, %v1688
      %v1698 = vsel %vm1695, %v1694, %v1690
      %v1699 = vsel %vm1695, %v1694, %v1692
      %vm1704 = vcmask 1043608
      %vm1705 = vcmask 1047556
      %vm1706 = vmor %vm1705, %vm1704
      %1707 = vst.msk [vmem:[#allocation2] sm:$0xff] %vm1706, %v1696
      %vm1708 = vcmask 412672
      %1709 = vst.msk [vmem:[#allocation2 + $0x8] sm:$0xf] %vm1708, %v1697
      %1710 = vst.msk [vmem:[#allocation2 + $0xc] sm:$0xff] %vm1706, %v1698
      %1711 = vst.msk [vmem:[#allocation2 + $0x14] sm:$0xf] %vm1708, %v1699
      %v1712 = vmul.f32 %v1528, %v1543
      %v1713 = vmul.f32 %v1529, %v1544
      %v1714 = vmul.f32 %v1530, %v1545
      %v1715 = vmul.f32 %v1531, %v1543
      %v1716 = vmul.f32 %v1532, %v1544
      %v1717 = vmul.f32 %v1533, %v1545
      %v1718 = vadd.f32 %v1712, %v1713
      %v1719 = vsel %vm1556, %v1714, 0.0
      %v1720 = vadd.f32 %v1718, %v1719
      %v1721 = vadd.f32 %v1720, %v1715
      %v1722 = vadd.f32 %v1721, %v1716
      %v1723 = vsel %vm1556, %v1717, 0.0
      %v1724 = vadd.f32 %v1722, %v1723
      %1725 = vadd.xlane.f32.xlu0 %v1724
      %v1726 = vpop.xlane.xlu0 %1725
      %v1727 = vrot.slane %v1726, 4
      %v1728 = vadd.f32 %v1726, %v1727
      %v1729 = vrot.slane %v1728, 2
      %v1730 = vadd.f32 %v1728, %v1729
      %v1731 = vrot.slane %v1730, 1
      %v1732 = vadd.f32 %v1730, %v1731
      %s1733 = vtos %v1732
      %s1734 = smul.f32 %s1733, 0.00024414063
      %v1735 = vstv %s1734
      %v1736 = vsub.f32 %v1528, %v1735
      %v1737 = vsub.f32 %v1529, %v1735
      %v1738 = vsub.f32 %v1530, %v1735
      %v1739 = vsub.f32 %v1531, %v1735
      %v1740 = vsub.f32 %v1532, %v1735
      %v1741 = vsub.f32 %v1533, %v1735
      %v1742 = vmul.f32 %v1736, %v1736
      %v1743 = vmul.f32 %v1737, %v1737
      %v1744 = vmul.f32 %v1738, %v1738
      %v1745 = vmul.f32 %v1739, %v1739
      %v1746 = vmul.f32 %v1740, %v1740
      %v1747 = vmul.f32 %v1741, %v1741
      %v1748 = vmul.f32 %v1742, %v1543
      %v1749 = vmul.f32 %v1743, %v1544
      %v1750 = vmul.f32 %v1744, %v1545
      %v1751 = vmul.f32 %v1745, %v1543
      %v1752 = vmul.f32 %v1746, %v1544
      %v1753 = vmul.f32 %v1747, %v1545
      %v1754 = vadd.f32 %v1748, %v1749
      %v1755 = vsel %vm1556, %v1750, 0.0
      %v1756 = vadd.f32 %v1754, %v1755
      %v1757 = vadd.f32 %v1756, %v1751
      %v1758 = vadd.f32 %v1757, %v1752
      %v1759 = vsel %vm1556, %v1753, 0.0
      %v1760 = vadd.f32 %v1758, %v1759
      %1761 = vadd.xlane.f32.xlu0 %v1760
      %v1762 = vpop.xlane.xlu0 %1761
      %v1763 = vrot.slane %v1762, 4
      %v1764 = vadd.f32 %v1762, %v1763
      %v1765 = vrot.slane %v1764, 2
      %v1766 = vadd.f32 %v1764, %v1765
      %v1767 = vrot.slane %v1766, 1
      %v1768 = vadd.f32 %v1766, %v1767
      %s1769 = vtos %v1768
      %s1770 = smul.f32 %s1769, 0.00024414063
      %s1771 = sadd.f32 %s1770, 1e-05
      %v1772 = vstv %s1771
      %v1773 = vrsqrt.pop %v1772
      %v1774 = vmul.f32 %v1773, %v1772
      %v1775 = vmul.f32 %v1774, %v1773
      %v1776 = vmul.f32 0.5, %v1775
      %v1777 = vsub.f32 1.5, %v1776
      %v1778 = vmul.f32 %v1773, %v1777
      %vm1779 = vweird.f32 %v1772
      %vm1780 = vweird.f32 %v1773
      %vm1781 = vmor %vm1779, %vm1780
      %v1782 = vsel %vm1781, %v1773, %v1778
      %s1783 = vtos %v1782
      %v1784 = vstv %s1783
      %v1785 = vmul.f32 %v1736, %v1784
      %v1786 = vmul.f32 %v1737, %v1784
      %v1787 = vmul.f32 %v1738, %v1784
      %v1788 = vmul.f32 %v1739, %v1784
      %v1789 = vmul.f32 %v1740, %v1784
      %v1790 = vmul.f32 %v1741, %v1784
      %v1791 = vld [vmem:[%s4 + $0x10] sm:$0xff]
      %v1792 = vld [vmem:[%s4 + $0x18] sm:$0xff]
      %1794 = vset.pattern.permute.xlu0 0
      %1795 = vperm.xlu0 %1794, %v1791
      %v1796 = vpop.permute.xlu0 %1795
      %1799 = vset.pattern.permute.xlu0 0
      %1800 = vperm.xlu0 %1799, %v1792
      %v1801 = vpop.permute.xlu0 %1800
      %v1803 = vmul.f32 %v1785, %v1796
      %v1804 = vmul.f32 %v1786, %v1796
      %v1805 = vmul.f32 %v1787, %v1796
      %v1806 = vmul.f32 %v1788, %v1801
      %v1807 = vmul.f32 %v1789, %v1801
      %v1808 = vmul.f32 %v1790, %v1801
      %v1809 = vld [vmem:[%s5 + $0x10] sm:$0xff]
      %v1810 = vld [vmem:[%s5 + $0x18] sm:$0xff]
      %1812 = vset.pattern.permute.xlu0 0
      %1813 = vperm.xlu0 %1812, %v1809
      %v1814 = vpop.permute.xlu0 %1813
      %1817 = vset.pattern.permute.xlu0 0
      %1818 = vperm.xlu0 %1817, %v1810
      %v1819 = vpop.permute.xlu0 %1818
      %v1821 = vadd.f32 %v1803, %v1814
      %v1822 = vadd.f32 %v1804, %v1814
      %v1823 = vadd.f32 %v1805, %v1814
      %v1824 = vadd.f32 %v1806, %v1819
      %v1825 = vadd.f32 %v1807, %v1819
      %v1826 = vadd.f32 %v1808, %v1819
      %v1827 = vmax.f32 %v1821, 0.0
      %v1828 = vmax.f32 %v1822, 0.0
      %v1829 = vmax.f32 %v1823, 0.0
      %v1830 = vmax.f32 %v1824, 0.0
      %v1831 = vmax.f32 %v1825, 0.0
      %v1832 = vmax.f32 %v1826, 0.0
      %v1833 = vmul.f32 %v1827, %v1543
      %v1834 = vmul.f32 %v1828, %v1544
      %v1835 = vmul.f32 %v1829, %v1545
      %v1836 = vmul.f32 %v1830, %v1543
      %v1837 = vmul.f32 %v1831, %v1544
      %v1838 = vmul.f32 %v1832, %v1545
      %v1839 = vpack.c.bf16 %v1834, %v1833
      %v1840 = vpack.c.bf16 %v1835, %v1835
      %v1841 = vpack.c.bf16 %v1837, %v1836
      %v1842 = vpack.c.bf16 %v1838, %v1838
      %1847 = vrot.lane.b32.xlu0 %v1839, 19
      %v1848 = vpop.permute.xlu0 %1847
      %1849 = vrot.lane.b32.xlu0 %v1840, 19
      %v1850 = vpop.permute.xlu0 %1849
      %1851 = vrot.lane.b32.xlu0 %v1841, 19
      %v1852 = vpop.permute.xlu0 %1851
      %1853 = vrot.lane.b32.xlu0 %v1842, 19
      %v1854 = vpop.permute.xlu0 %1853
      %v1855 = vrot.slane %v1848, 4
      %v1856 = vrot.slane %v1852, 4
      %v1857 = vsel %vm1695, %v1855, %v1848
      %v1858 = vsel %vm1695, %v1855, %v1850
      %v1859 = vsel %vm1695, %v1856, %v1852
      %v1860 = vsel %vm1695, %v1856, %v1854
      %1865 = vst.msk [vmem:[#allocation2 + $0x18] sm:$0xff] %vm1706, %v1857
      %1866 = vst.msk [vmem:[#allocation2 + $0x20] sm:$0xf] %vm1708, %v1858
      %1867 = vst.msk [vmem:[#allocation2 + $0x24] sm:$0xff] %vm1706, %v1859
      %1868 = vst.msk [vmem:[#allocation2 + $0x2c] sm:$0xf] %vm1708, %v1860
      %v1869 = vld [vmem:[%s2] sm:$0xf]
      %v1870 = vld [vmem:[%s2 + $0x4] sm:$0xf]
      %v1871 = vld [vmem:[%s2 + $0x8] sm:$0xf]
      %v1872 = vld [vmem:[%s2 + $0xc] sm:$0xf]
      %v1873 = vld [vmem:[#allocation2] sm:$0xff]
      %v1874 = vld [vmem:[#allocation2 + $0x8] sm:$0xf]
      %v1875 = vld [vmem:[#allocation2 + $0xc] sm:$0xff]
      %v1876 = vld [vmem:[#allocation2 + $0x14] sm:$0xf]
      %v1877 = vld [vmem:[#allocation2 + $0x18] sm:$0xff]
      %v1878 = vld [vmem:[#allocation2 + $0x20] sm:$0xf]
      %v1879 = vld [vmem:[#allocation2 + $0x24] sm:$0xff]
      %v1880 = vld [vmem:[#allocation2 + $0x2c] sm:$0xf]
      %s1881 = scalar_lea.vmem %s2, 16
      %v1882 = vld [vmem:[%s1881] sm:$0xf]
      %v1883 = vld [vmem:[%s1881 + $0x4] sm:$0xf]
      %v1884 = vld [vmem:[%s1881 + $0x8] sm:$0xf]
      %v1885 = vld [vmem:[%s1881 + $0xc] sm:$0xf]
      %v1890 = vunpack.c.l.b16 %v1882
      %v1891 = vunpack.c.l.b16 %v1883
      %v1892 = vunpack.c.l.b16 %v1884
      %v1893 = vunpack.c.l.b16 %v1885
      %v1894 = vpack.c.b16 %v1891, %v1890
      %v1895 = vpack.c.b16 %v1893, %v1892
      %v1904 = vunpack.c.l.b16 %v1873
      %v1905 = vunpack.c.h.b16 %v1873
      %v1906 = vunpack.c.l.b16 %v1874
      %v1907 = vunpack.c.l.b16 %v1875
      %v1908 = vunpack.c.h.b16 %v1875
      %v1909 = vunpack.c.l.b16 %v1876
      %v1910 = vunpack.c.l.b16 %v1877
      %v1911 = vunpack.c.h.b16 %v1877
      %v1912 = vunpack.c.l.b16 %v1878
      %v1913 = vunpack.c.l.b16 %v1879
      %v1914 = vunpack.c.h.b16 %v1879
      %v1915 = vunpack.c.l.b16 %v1880
      %v1916 = vpack.c.b16 %v1907, %v1904
      %v1917 = vpack.c.b16 %v1908, %v1905
      %v1918 = vpack.c.b16 %v1909, %v1906
      %v1919 = vpack.c.b16 %v1913, %v1910
      %v1920 = vpack.c.b16 %v1914, %v1911
      %v1921 = vpack.c.b16 %v1915, %v1912
      %1922 = vrot.lane.b32.xlu0 %v1916, 127
      %v1923 = vpop.permute.xlu0 %1922
      %1924 = vrot.lane.b32.xlu0 %v1917, 127
      %v1925 = vpop.permute.xlu0 %1924
      %1926 = vrot.lane.b32.xlu0 %v1918, 127
      %v1927 = vpop.permute.xlu0 %1926
      %1928 = vrot.lane.b32.xlu0 %v1919, 127
      %v1929 = vpop.permute.xlu0 %1928
      %1930 = vrot.lane.b32.xlu0 %v1920, 127
      %v1931 = vpop.permute.xlu0 %1930
      %1932 = vrot.lane.b32.xlu0 %v1921, 127
      %v1933 = vpop.permute.xlu0 %1932
      %v1934 = vsel %vm419, %v1923, %v1925
      %v1935 = vsel %vm419, %v1925, %v1927
      %v1936 = vsel %vm419, %v1929, %v1931
      %v1937 = vsel %vm419, %v1931, %v1933
      %v1945 = vsel %vm1556, %v1894, 0
      %v1948 = vsel %vm1556, %v1895, 0
      %1950 = vmatpush.bf16.msra.mxu0 0
      %1951 = vmatpush.bf16.msra.mxu0 0
      %1952 = vmatpush.bf16.msra.mxu0 0
      %1953 = vmatpush.bf16.msra.mxu0 0
      %1954 = vmatpush.bf16.msra.mxu0 0
      %1955 = vmatpush.bf16.msra.mxu0 0
      %1956 = vmatpush.bf16.msra.mxu0 %v1936
      %1957 = vmatpush.bf16.msra.mxu0 %v1934
      %1958 = vmatmul.bf16.gmra.mxu0 %v1945
      %v1959 = vpop.f32.mrf.mxu0
      %v1960 = vadd.f32 0.0, %v1959
      %v1961 = vpop.f32.mrf.mxu0
      %v1962 = vadd.f32 0.0, %v1961
      %1963 = vmatmul.bf16.gmra.mxu0 %v1948
      %v1964 = vpop.f32.mrf.mxu0
      %v1965 = vadd.f32 0.0, %v1964
      %v1966 = vpop.f32.mrf.mxu0
      %v1967 = vadd.f32 0.0, %v1966
      %1968 = vdwg.mxu0
      %1969 = vmatpush.bf16.msra.mxu0 0
      %1970 = vmatpush.bf16.msra.mxu0 0
      %1971 = vmatpush.bf16.msra.mxu0 0
      %1972 = vmatpush.bf16.msra.mxu0 0
      %1973 = vmatpush.bf16.msra.mxu0 0
      %1974 = vmatpush.bf16.msra.mxu0 0
      %1975 = vmatpush.bf16.msra.mxu0 %v1937
      %1976 = vmatpush.bf16.msra.mxu0 %v1935
      %1977 = vmatmul.bf16.gmra.mxu0 %v1945
      %v1978 = vpop.f32.mrf.mxu0
      %v1979 = vadd.f32 0.0, %v1978
      %v1980 = vpop.f32.mrf.mxu0
      %v1981 = vadd.f32 0.0, %v1980
      %1982 = vmatmul.bf16.gmra.mxu0 %v1948
      %v1983 = vpop.f32.mrf.mxu0
      %v1984 = vadd.f32 0.0, %v1983
      %v1985 = vpop.f32.mrf.mxu0
      %v1986 = vadd.f32 0.0, %v1985
      %1987 = vdwg.mxu0
      %1988 = vmatpush.bf16.msra.mxu0 0
      %1989 = vmatpush.bf16.msra.mxu0 0
      %1990 = vmatpush.bf16.msra.mxu0 0
      %1991 = vmatpush.bf16.msra.mxu0 0
      %1992 = vmatpush.bf16.msra.mxu0 0
      %1993 = vmatpush.bf16.msra.mxu0 0
      %1994 = vmatpush.bf16.msra.mxu0 %v1933
      %1995 = vmatpush.bf16.msra.mxu0 %v1927
      %1996 = vmatmul.bf16.gmra.mxu0 %v1945
      %v1997 = vpop.f32.mrf.mxu0
      %v1998 = vadd.f32 0.0, %v1997
      %v1999 = vpop.f32.mrf.mxu0
      %v2000 = vadd.f32 0.0, %v1999
      %2001 = vmatmul.bf16.gmra.mxu0 %v1948
      %v2002 = vpop.f32.mrf.mxu0
      %v2003 = vadd.f32 0.0, %v2002
      %v2004 = vpop.f32.mrf.mxu0
      %v2005 = vadd.f32 0.0, %v2004
      %2006 = vdwg.mxu0
      %v2011 = vunpack.c.l.b16 %v1869
      %v2012 = vunpack.c.l.b16 %v1870
      %v2013 = vunpack.c.l.b16 %v1871
      %v2014 = vunpack.c.l.b16 %v1872
      %v2015 = vpack.c.b16 %v2012, %v2011
      %v2016 = vpack.c.b16 %v2014, %v2013
      %v2024 = vsel %vm1556, %v2015, 0
      %v2027 = vsel %vm1556, %v2016, 0
      %2029 = vmatpush.bf16.msra.mxu0 0
      %2030 = vmatpush.bf16.msra.mxu0 0
      %2031 = vmatpush.bf16.msra.mxu0 0
      %2032 = vmatpush.bf16.msra.mxu0 0
      %2033 = vmatpush.bf16.msra.mxu0 0
      %2034 = vmatpush.bf16.msra.mxu0 0
      %2035 = vmatpush.bf16.msra.mxu0 %v1919
      %2036 = vmatpush.bf16.msra.mxu0 %v1916
      %2037 = vmatmul.bf16.gmra.mxu0 %v2024
      %v2038 = vpop.f32.mrf.mxu0
      %v2039 = vadd.f32 %v1960, %v2038
      %v2040 = vpop.f32.mrf.mxu0
      %v2041 = vadd.f32 %v1962, %v2040
      %2042 = vmatmul.bf16.gmra.mxu0 %v2027
      %v2043 = vpop.f32.mrf.mxu0
      %v2044 = vadd.f32 %v1965, %v2043
      %v2045 = vpop.f32.mrf.mxu0
      %v2046 = vadd.f32 %v1967, %v2045
      %2047 = vdwg.mxu0
      %2048 = vmatpush.bf16.msra.mxu0 0
      %2049 = vmatpush.bf16.msra.mxu0 0
      %2050 = vmatpush.bf16.msra.mxu0 0
      %2051 = vmatpush.bf16.msra.mxu0 0
      %2052 = vmatpush.bf16.msra.mxu0 0
      %2053 = vmatpush.bf16.msra.mxu0 0
      %2054 = vmatpush.bf16.msra.mxu0 %v1920
      %2055 = vmatpush.bf16.msra.mxu0 %v1917
      %2056 = vmatmul.bf16.gmra.mxu0 %v2024
      %v2057 = vpop.f32.mrf.mxu0
      %v2058 = vadd.f32 %v1979, %v2057
      %v2059 = vpop.f32.mrf.mxu0
      %v2060 = vadd.f32 %v1981, %v2059
      %2061 = vmatmul.bf16.gmra.mxu0 %v2027
      %v2062 = vpop.f32.mrf.mxu0
      %v2063 = vadd.f32 %v1984, %v2062
      %v2064 = vpop.f32.mrf.mxu0
      %v2065 = vadd.f32 %v1986, %v2064
      %2066 = vdwg.mxu0
      %2067 = vmatpush.bf16.msra.mxu0 0
      %2068 = vmatpush.bf16.msra.mxu0 0
      %2069 = vmatpush.bf16.msra.mxu0 0
      %2070 = vmatpush.bf16.msra.mxu0 0
      %2071 = vmatpush.bf16.msra.mxu0 0
      %2072 = vmatpush.bf16.msra.mxu0 0
      %2073 = vmatpush.bf16.msra.mxu0 %v1921
      %2074 = vmatpush.bf16.msra.mxu0 %v1918
      %2075 = vmatmul.bf16.gmra.mxu0 %v2024
      %v2076 = vpop.f32.mrf.mxu0
      %v2077 = vadd.f32 %v1998, %v2076
      %v2078 = vpop.f32.mrf.mxu0
      %v2079 = vadd.f32 %v2000, %v2078
      %2080 = vmatmul.bf16.gmra.mxu0 %v2027
      %v2081 = vpop.f32.mrf.mxu0
      %v2082 = vadd.f32 %v2003, %v2081
      %v2083 = vpop.f32.mrf.mxu0
      %v2084 = vadd.f32 %v2005, %v2083
      %2085 = vdwg.mxu0
      %s2086 = scalar_lea.vmem %s2, 32
      %v2087 = vld [vmem:[%s2086] sm:$0xf]
      %v2088 = vld [vmem:[%s2086 + $0x4] sm:$0xf]
      %v2089 = vld [vmem:[%s2086 + $0x8] sm:$0xf]
      %v2090 = vld [vmem:[%s2086 + $0xc] sm:$0xf]
      %v2095 = vunpack.c.l.b16 %v2087
      %v2096 = vunpack.c.l.b16 %v2088
      %v2097 = vunpack.c.l.b16 %v2089
      %v2098 = vunpack.c.l.b16 %v2090
      %v2099 = vpack.c.b16 %v2096, %v2095
      %v2100 = vpack.c.b16 %v2098, %v2097
      %2101 = vrot.lane.b32.xlu0 %v1916, 126
      %v2102 = vpop.permute.xlu0 %2101
      %2103 = vrot.lane.b32.xlu0 %v1917, 126
      %v2104 = vpop.permute.xlu0 %2103
      %2105 = vrot.lane.b32.xlu0 %v1918, 126
      %v2106 = vpop.permute.xlu0 %2105
      %2107 = vrot.lane.b32.xlu0 %v1919, 126
      %v2108 = vpop.permute.xlu0 %2107
      %2109 = vrot.lane.b32.xlu0 %v1920, 126
      %v2110 = vpop.permute.xlu0 %2109
      %2111 = vrot.lane.b32.xlu0 %v1921, 126
      %v2112 = vpop.permute.xlu0 %2111
      %v2113 = vsel %vm628, %v2102, %v2104
      %v2114 = vsel %vm628, %v2104, %v2106
      %v2115 = vsel %vm628, %v2108, %v2110
      %v2116 = vsel %vm628, %v2110, %v2112
      %v2124 = vsel %vm1556, %v2099, 0
      %v2127 = vsel %vm1556, %v2100, 0
      %2129 = vmatpush.bf16.msra.mxu0 0
      %2130 = vmatpush.bf16.msra.mxu0 0
      %2131 = vmatpush.bf16.msra.mxu0 0
      %2132 = vmatpush.bf16.msra.mxu0 0
      %2133 = vmatpush.bf16.msra.mxu0 0
      %2134 = vmatpush.bf16.msra.mxu0 0
      %2135 = vmatpush.bf16.msra.mxu0 %v2115
      %2136 = vmatpush.bf16.msra.mxu0 %v2113
      %2137 = vmatmul.bf16.gmra.mxu0 %v2124
      %v2138 = vpop.f32.mrf.mxu0
      %v2139 = vadd.f32 0.0, %v2138
      %v2140 = vpop.f32.mrf.mxu0
      %v2141 = vadd.f32 0.0, %v2140
      %2142 = vmatmul.bf16.gmra.mxu0 %v2127
      %v2143 = vpop.f32.mrf.mxu0
      %v2144 = vadd.f32 0.0, %v2143
      %v2145 = vpop.f32.mrf.mxu0
      %v2146 = vadd.f32 0.0, %v2145
      %2147 = vdwg.mxu0
      %2148 = vmatpush.bf16.msra.mxu0 0
      %2149 = vmatpush.bf16.msra.mxu0 0
      %2150 = vmatpush.bf16.msra.mxu0 0
      %2151 = vmatpush.bf16.msra.mxu0 0
      %2152 = vmatpush.bf16.msra.mxu0 0
      %2153 = vmatpush.bf16.msra.mxu0 0
      %2154 = vmatpush.bf16.msra.mxu0 %v2116
      %2155 = vmatpush.bf16.msra.mxu0 %v2114
      %2156 = vmatmul.bf16.gmra.mxu0 %v2124
      %v2157 = vpop.f32.mrf.mxu0
      %v2158 = vadd.f32 0.0, %v2157
      %v2159 = vpop.f32.mrf.mxu0
      %v2160 = vadd.f32 0.0, %v2159
      %2161 = vmatmul.bf16.gmra.mxu0 %v2127
      %v2162 = vpop.f32.mrf.mxu0
      %v2163 = vadd.f32 0.0, %v2162
      %v2164 = vpop.f32.mrf.mxu0
      %v2165 = vadd.f32 0.0, %v2164
      %2166 = vdwg.mxu0
      %2167 = vmatpush.bf16.msra.mxu0 0
      %2168 = vmatpush.bf16.msra.mxu0 0
      %2169 = vmatpush.bf16.msra.mxu0 0
      %2170 = vmatpush.bf16.msra.mxu0 0
      %2171 = vmatpush.bf16.msra.mxu0 0
      %2172 = vmatpush.bf16.msra.mxu0 0
      %2173 = vmatpush.bf16.msra.mxu0 %v2112
      %2174 = vmatpush.bf16.msra.mxu0 %v2106
      %2175 = vmatmul.bf16.gmra.mxu0 %v2124
      %v2176 = vpop.f32.mrf.mxu0
      %v2177 = vadd.f32 0.0, %v2176
      %v2178 = vpop.f32.mrf.mxu0
      %v2179 = vadd.f32 0.0, %v2178
      %2180 = vmatmul.bf16.gmra.mxu0 %v2127
      %v2181 = vpop.f32.mrf.mxu0
      %v2182 = vadd.f32 0.0, %v2181
      %v2183 = vpop.f32.mrf.mxu0
      %v2184 = vadd.f32 0.0, %v2183
      %2185 = vdwg.mxu0
      %v2186 = vadd.f32 %v2039, %v2139
      %v2187 = vadd.f32 %v2058, %v2158
      %v2188 = vadd.f32 %v2077, %v2177
      %v2189 = vadd.f32 %v2041, %v2141
      %v2190 = vadd.f32 %v2060, %v2160
      %v2191 = vadd.f32 %v2079, %v2179
      %v2192 = vadd.f32 %v2044, %v2144
      %v2193 = vadd.f32 %v2063, %v2163
      %v2194 = vadd.f32 %v2082, %v2182
      %v2195 = vadd.f32 %v2046, %v2146
      %v2196 = vadd.f32 %v2065, %v2165
      %v2197 = vadd.f32 %v2084, %v2184
      %s2198 = scalar_lea.vmem %s2, 48
      %v2199 = vld [vmem:[%s2198] sm:$0xf]
      %v2200 = vld [vmem:[%s2198 + $0x4] sm:$0xf]
      %v2201 = vld [vmem:[%s2198 + $0x8] sm:$0xf]
      %v2202 = vld [vmem:[%s2198 + $0xc] sm:$0xf]
      %v2207 = vunpack.c.l.b16 %v2199
      %v2208 = vunpack.c.l.b16 %v2200
      %v2209 = vunpack.c.l.b16 %v2201
      %v2210 = vunpack.c.l.b16 %v2202
      %v2211 = vpack.c.b16 %v2208, %v2207
      %v2212 = vpack.c.b16 %v2210, %v2209
      %2213 = vrot.lane.b32.xlu0 %v1916, 110
      %v2214 = vpop.permute.xlu0 %2213
      %2215 = vrot.lane.b32.xlu0 %v1917, 110
      %v2216 = vpop.permute.xlu0 %2215
      %2217 = vrot.lane.b32.xlu0 %v1918, 110
      %v2218 = vpop.permute.xlu0 %2217
      %2219 = vrot.lane.b32.xlu0 %v1919, 110
      %v2220 = vpop.permute.xlu0 %2219
      %2221 = vrot.lane.b32.xlu0 %v1920, 110
      %v2222 = vpop.permute.xlu0 %2221
      %2223 = vrot.lane.b32.xlu0 %v1921, 110
      %v2224 = vpop.permute.xlu0 %2223
      %v2225 = vsel %vm763, %v2214, %v2216
      %v2226 = vsel %vm763, %v2216, %v2218
      %v2227 = vsel %vm763, %v2220, %v2222
      %v2228 = vsel %vm763, %v2222, %v2224
      %v2236 = vsel %vm1556, %v2211, 0
      %v2239 = vsel %vm1556, %v2212, 0
      %2241 = vmatpush.bf16.msra.mxu0 0
      %2242 = vmatpush.bf16.msra.mxu0 0
      %2243 = vmatpush.bf16.msra.mxu0 0
      %2244 = vmatpush.bf16.msra.mxu0 0
      %2245 = vmatpush.bf16.msra.mxu0 0
      %2246 = vmatpush.bf16.msra.mxu0 0
      %2247 = vmatpush.bf16.msra.mxu0 %v2227
      %2248 = vmatpush.bf16.msra.mxu0 %v2225
      %2249 = vmatmul.bf16.gmra.mxu0 %v2236
      %v2250 = vpop.f32.mrf.mxu0
      %v2251 = vadd.f32 0.0, %v2250
      %v2252 = vpop.f32.mrf.mxu0
      %v2253 = vadd.f32 0.0, %v2252
      %2254 = vmatmul.bf16.gmra.mxu0 %v2239
      %v2255 = vpop.f32.mrf.mxu0
      %v2256 = vadd.f32 0.0, %v2255
      %v2257 = vpop.f32.mrf.mxu0
      %v2258 = vadd.f32 0.0, %v2257
      %2259 = vdwg.mxu0
      %2260 = vmatpush.bf16.msra.mxu0 0
      %2261 = vmatpush.bf16.msra.mxu0 0
      %2262 = vmatpush.bf16.msra.mxu0 0
      %2263 = vmatpush.bf16.msra.mxu0 0
      %2264 = vmatpush.bf16.msra.mxu0 0
      %2265 = vmatpush.bf16.msra.mxu0 0
      %2266 = vmatpush.bf16.msra.mxu0 %v2228
      %2267 = vmatpush.bf16.msra.mxu0 %v2226
      %2268 = vmatmul.bf16.gmra.mxu0 %v2236
      %v2269 = vpop.f32.mrf.mxu0
      %v2270 = vadd.f32 0.0, %v2269
      %v2271 = vpop.f32.mrf.mxu0
      %v2272 = vadd.f32 0.0, %v2271
      %2273 = vmatmul.bf16.gmra.mxu0 %v2239
      %v2274 = vpop.f32.mrf.mxu0
      %v2275 = vadd.f32 0.0, %v2274
      %v2276 = vpop.f32.mrf.mxu0
      %v2277 = vadd.f32 0.0, %v2276
      %2278 = vdwg.mxu0
      %2279 = vmatpush.bf16.msra.mxu0 0
      %2280 = vmatpush.bf16.msra.mxu0 0
      %2281 = vmatpush.bf16.msra.mxu0 0
      %2282 = vmatpush.bf16.msra.mxu0 0
      %2283 = vmatpush.bf16.msra.mxu0 0
      %2284 = vmatpush.bf16.msra.mxu0 0
      %2285 = vmatpush.bf16.msra.mxu0 %v2224
      %2286 = vmatpush.bf16.msra.mxu0 %v2218
      %2287 = vmatmul.bf16.gmra.mxu0 %v2236
      %v2288 = vpop.f32.mrf.mxu0
      %v2289 = vadd.f32 0.0, %v2288
      %v2290 = vpop.f32.mrf.mxu0
      %v2291 = vadd.f32 0.0, %v2290
      %2292 = vmatmul.bf16.gmra.mxu0 %v2239
      %v2293 = vpop.f32.mrf.mxu0
      %v2294 = vadd.f32 0.0, %v2293
      %v2295 = vpop.f32.mrf.mxu0
      %v2296 = vadd.f32 0.0, %v2295
      %2297 = vdwg.mxu0
      %v2298 = vadd.f32 %v2186, %v2251
      %v2299 = vadd.f32 %v2187, %v2270
      %v2300 = vadd.f32 %v2188, %v2289
      %v2301 = vadd.f32 %v2189, %v2253
      %v2302 = vadd.f32 %v2190, %v2272
      %v2303 = vadd.f32 %v2191, %v2291
      %v2304 = vadd.f32 %v2192, %v2256
      %v2305 = vadd.f32 %v2193, %v2275
      %v2306 = vadd.f32 %v2194, %v2294
      %v2307 = vadd.f32 %v2195, %v2258
      %v2308 = vadd.f32 %v2196, %v2277
      %v2309 = vadd.f32 %v2197, %v2296
      %s2310 = scalar_lea.vmem %s2, 64
      %v2311 = vld [vmem:[%s2310] sm:$0xf]
      %v2312 = vld [vmem:[%s2310 + $0x4] sm:$0xf]
      %v2313 = vld [vmem:[%s2310 + $0x8] sm:$0xf]
      %v2314 = vld [vmem:[%s2310 + $0xc] sm:$0xf]
      %v2319 = vunpack.c.l.b16 %v2311
      %v2320 = vunpack.c.l.b16 %v2312
      %v2321 = vunpack.c.l.b16 %v2313
      %v2322 = vunpack.c.l.b16 %v2314
      %v2323 = vpack.c.b16 %v2320, %v2319
      %v2324 = vpack.c.b16 %v2322, %v2321
      %2325 = vrot.lane.b32.xlu0 %v1916, 109
      %v2326 = vpop.permute.xlu0 %2325
      %2327 = vrot.lane.b32.xlu0 %v1917, 109
      %v2328 = vpop.permute.xlu0 %2327
      %2329 = vrot.lane.b32.xlu0 %v1918, 109
      %v2330 = vpop.permute.xlu0 %2329
      %2331 = vrot.lane.b32.xlu0 %v1919, 109
      %v2332 = vpop.permute.xlu0 %2331
      %2333 = vrot.lane.b32.xlu0 %v1920, 109
      %v2334 = vpop.permute.xlu0 %2333
      %2335 = vrot.lane.b32.xlu0 %v1921, 109
      %v2336 = vpop.permute.xlu0 %2335
      %v2337 = vsel %vm898, %v2326, %v2328
      %v2338 = vsel %vm898, %v2328, %v2330
      %v2339 = vsel %vm898, %v2332, %v2334
      %v2340 = vsel %vm898, %v2334, %v2336
      %v2348 = vsel %vm1556, %v2323, 0
      %v2351 = vsel %vm1556, %v2324, 0
      %2353 = vmatpush.bf16.msra.mxu0 0
      %2354 = vmatpush.bf16.msra.mxu0 0
      %2355 = vmatpush.bf16.msra.mxu0 0
      %2356 = vmatpush.bf16.msra.mxu0 0
      %2357 = vmatpush.bf16.msra.mxu0 0
      %2358 = vmatpush.bf16.msra.mxu0 0
      %2359 = vmatpush.bf16.msra.mxu0 %v2339
      %2360 = vmatpush.bf16.msra.mxu0 %v2337
      %2361 = vmatmul.bf16.gmra.mxu0 %v2348
      %v2362 = vpop.f32.mrf.mxu0
      %v2363 = vadd.f32 0.0, %v2362
      %v2364 = vpop.f32.mrf.mxu0
      %v2365 = vadd.f32 0.0, %v2364
      %2366 = vmatmul.bf16.gmra.mxu0 %v2351
      %v2367 = vpop.f32.mrf.mxu0
      %v2368 = vadd.f32 0.0, %v2367
      %v2369 = vpop.f32.mrf.mxu0
      %v2370 = vadd.f32 0.0, %v2369
      %2371 = vdwg.mxu0
      %2372 = vmatpush.bf16.msra.mxu0 0
      %2373 = vmatpush.bf16.msra.mxu0 0
      %2374 = vmatpush.bf16.msra.mxu0 0
      %2375 = vmatpush.bf16.msra.mxu0 0
      %2376 = vmatpush.bf16.msra.mxu0 0
      %2377 = vmatpush.bf16.msra.mxu0 0
      %2378 = vmatpush.bf16.msra.mxu0 %v2340
      %2379 = vmatpush.bf16.msra.mxu0 %v2338
      %2380 = vmatmul.bf16.gmra.mxu0 %v2348
      %v2381 = vpop.f32.mrf.mxu0
      %v2382 = vadd.f32 0.0, %v2381
      %v2383 = vpop.f32.mrf.mxu0
      %v2384 = vadd.f32 0.0, %v2383
      %2385 = vmatmul.bf16.gmra.mxu0 %v2351
      %v2386 = vpop.f32.mrf.mxu0
      %v2387 = vadd.f32 0.0, %v2386
      %v2388 = vpop.f32.mrf.mxu0
      %v2389 = vadd.f32 0.0, %v2388
      %2390 = vdwg.mxu0
      %2391 = vmatpush.bf16.msra.mxu0 0
      %2392 = vmatpush.bf16.msra.mxu0 0
      %2393 = vmatpush.bf16.msra.mxu0 0
      %2394 = vmatpush.bf16.msra.mxu0 0
      %2395 = vmatpush.bf16.msra.mxu0 0
      %2396 = vmatpush.bf16.msra.mxu0 0
      %2397 = vmatpush.bf16.msra.mxu0 %v2336
      %2398 = vmatpush.bf16.msra.mxu0 %v2330
      %2399 = vmatmul.bf16.gmra.mxu0 %v2348
      %v2400 = vpop.f32.mrf.mxu0
      %v2401 = vadd.f32 0.0, %v2400
      %v2402 = vpop.f32.mrf.mxu0
      %v2403 = vadd.f32 0.0, %v2402
      %2404 = vmatmul.bf16.gmra.mxu0 %v2351
      %v2405 = vpop.f32.mrf.mxu0
      %v2406 = vadd.f32 0.0, %v2405
      %v2407 = vpop.f32.mrf.mxu0
      %v2408 = vadd.f32 0.0, %v2407
      %2409 = vdwg.mxu0
      %v2410 = vadd.f32 %v2298, %v2363
      %v2411 = vadd.f32 %v2299, %v2382
      %v2412 = vadd.f32 %v2300, %v2401
      %v2413 = vadd.f32 %v2301, %v2365
      %v2414 = vadd.f32 %v2302, %v2384
      %v2415 = vadd.f32 %v2303, %v2403
      %v2416 = vadd.f32 %v2304, %v2368
      %v2417 = vadd.f32 %v2305, %v2387
      %v2418 = vadd.f32 %v2306, %v2406
      %v2419 = vadd.f32 %v2307, %v2370
      %v2420 = vadd.f32 %v2308, %v2389
      %v2421 = vadd.f32 %v2309, %v2408
      %s2422 = scalar_lea.vmem %s2, 80
      %v2423 = vld [vmem:[%s2422] sm:$0xf]
      %v2424 = vld [vmem:[%s2422 + $0x4] sm:$0xf]
      %v2425 = vld [vmem:[%s2422 + $0x8] sm:$0xf]
      %v2426 = vld [vmem:[%s2422 + $0xc] sm:$0xf]
      %v2431 = vunpack.c.l.b16 %v2423
      %v2432 = vunpack.c.l.b16 %v2424
      %v2433 = vunpack.c.l.b16 %v2425
      %v2434 = vunpack.c.l.b16 %v2426
      %v2435 = vpack.c.b16 %v2432, %v2431
      %v2436 = vpack.c.b16 %v2434, %v2433
      %2437 = vrot.lane.b32.xlu0 %v1916, 108
      %v2438 = vpop.permute.xlu0 %2437
      %2439 = vrot.lane.b32.xlu0 %v1917, 108
      %v2440 = vpop.permute.xlu0 %2439
      %2441 = vrot.lane.b32.xlu0 %v1918, 108
      %v2442 = vpop.permute.xlu0 %2441
      %2443 = vrot.lane.b32.xlu0 %v1919, 108
      %v2444 = vpop.permute.xlu0 %2443
      %2445 = vrot.lane.b32.xlu0 %v1920, 108
      %v2446 = vpop.permute.xlu0 %2445
      %2447 = vrot.lane.b32.xlu0 %v1921, 108
      %v2448 = vpop.permute.xlu0 %2447
      %v2449 = vsel %vm1033, %v2438, %v2440
      %v2450 = vsel %vm1033, %v2440, %v2442
      %v2451 = vsel %vm1033, %v2444, %v2446
      %v2452 = vsel %vm1033, %v2446, %v2448
      %v2460 = vsel %vm1556, %v2435, 0
      %v2463 = vsel %vm1556, %v2436, 0
      %2465 = vmatpush.bf16.msra.mxu0 0
      %2466 = vmatpush.bf16.msra.mxu0 0
      %2467 = vmatpush.bf16.msra.mxu0 0
      %2468 = vmatpush.bf16.msra.mxu0 0
      %2469 = vmatpush.bf16.msra.mxu0 0
      %2470 = vmatpush.bf16.msra.mxu0 0
      %2471 = vmatpush.bf16.msra.mxu0 %v2451
      %2472 = vmatpush.bf16.msra.mxu0 %v2449
      %2473 = vmatmul.bf16.gmra.mxu0 %v2460
      %v2474 = vpop.f32.mrf.mxu0
      %v2475 = vadd.f32 0.0, %v2474
      %v2476 = vpop.f32.mrf.mxu0
      %v2477 = vadd.f32 0.0, %v2476
      %2478 = vmatmul.bf16.gmra.mxu0 %v2463
      %v2479 = vpop.f32.mrf.mxu0
      %v2480 = vadd.f32 0.0, %v2479
      %v2481 = vpop.f32.mrf.mxu0
      %v2482 = vadd.f32 0.0, %v2481
      %2483 = vdwg.mxu0
      %2484 = vmatpush.bf16.msra.mxu0 0
      %2485 = vmatpush.bf16.msra.mxu0 0
      %2486 = vmatpush.bf16.msra.mxu0 0
      %2487 = vmatpush.bf16.msra.mxu0 0
      %2488 = vmatpush.bf16.msra.mxu0 0
      %2489 = vmatpush.bf16.msra.mxu0 0
      %2490 = vmatpush.bf16.msra.mxu0 %v2452
      %2491 = vmatpush.bf16.msra.mxu0 %v2450
      %2492 = vmatmul.bf16.gmra.mxu0 %v2460
      %v2493 = vpop.f32.mrf.mxu0
      %v2494 = vadd.f32 0.0, %v2493
      %v2495 = vpop.f32.mrf.mxu0
      %v2496 = vadd.f32 0.0, %v2495
      %2497 = vmatmul.bf16.gmra.mxu0 %v2463
      %v2498 = vpop.f32.mrf.mxu0
      %v2499 = vadd.f32 0.0, %v2498
      %v2500 = vpop.f32.mrf.mxu0
      %v2501 = vadd.f32 0.0, %v2500
      %2502 = vdwg.mxu0
      %2503 = vmatpush.bf16.msra.mxu0 0
      %2504 = vmatpush.bf16.msra.mxu0 0
      %2505 = vmatpush.bf16.msra.mxu0 0
      %2506 = vmatpush.bf16.msra.mxu0 0
      %2507 = vmatpush.bf16.msra.mxu0 0
      %2508 = vmatpush.bf16.msra.mxu0 0
      %2509 = vmatpush.bf16.msra.mxu0 %v2448
      %2510 = vmatpush.bf16.msra.mxu0 %v2442
      %2511 = vmatmul.bf16.gmra.mxu0 %v2460
      %v2512 = vpop.f32.mrf.mxu0
      %v2513 = vadd.f32 0.0, %v2512
      %v2514 = vpop.f32.mrf.mxu0
      %v2515 = vadd.f32 0.0, %v2514
      %2516 = vmatmul.bf16.gmra.mxu0 %v2463
      %v2517 = vpop.f32.mrf.mxu0
      %v2518 = vadd.f32 0.0, %v2517
      %v2519 = vpop.f32.mrf.mxu0
      %v2520 = vadd.f32 0.0, %v2519
      %2521 = vdwg.mxu0
      %v2522 = vadd.f32 %v2410, %v2475
      %v2523 = vadd.f32 %v2411, %v2494
      %v2524 = vadd.f32 %v2412, %v2513
      %v2525 = vadd.f32 %v2413, %v2477
      %v2526 = vadd.f32 %v2414, %v2496
      %v2527 = vadd.f32 %v2415, %v2515
      %v2528 = vadd.f32 %v2416, %v2480
      %v2529 = vadd.f32 %v2417, %v2499
      %v2530 = vadd.f32 %v2418, %v2518
      %v2531 = vadd.f32 %v2419, %v2482
      %v2532 = vadd.f32 %v2420, %v2501
      %v2533 = vadd.f32 %v2421, %v2520
      %s2534 = scalar_lea.vmem %s2, 96
      %v2535 = vld [vmem:[%s2534] sm:$0xf]
      %v2536 = vld [vmem:[%s2534 + $0x4] sm:$0xf]
      %v2537 = vld [vmem:[%s2534 + $0x8] sm:$0xf]
      %v2538 = vld [vmem:[%s2534 + $0xc] sm:$0xf]
      %v2543 = vunpack.c.l.b16 %v2535
      %v2544 = vunpack.c.l.b16 %v2536
      %v2545 = vunpack.c.l.b16 %v2537
      %v2546 = vunpack.c.l.b16 %v2538
      %v2547 = vpack.c.b16 %v2544, %v2543
      %v2548 = vpack.c.b16 %v2546, %v2545
      %2549 = vrot.lane.b32.xlu0 %v1916, 92
      %v2550 = vpop.permute.xlu0 %2549
      %2551 = vrot.lane.b32.xlu0 %v1917, 92
      %v2552 = vpop.permute.xlu0 %2551
      %2553 = vrot.lane.b32.xlu0 %v1918, 92
      %v2554 = vpop.permute.xlu0 %2553
      %2555 = vrot.lane.b32.xlu0 %v1919, 92
      %v2556 = vpop.permute.xlu0 %2555
      %2557 = vrot.lane.b32.xlu0 %v1920, 92
      %v2558 = vpop.permute.xlu0 %2557
      %2559 = vrot.lane.b32.xlu0 %v1921, 92
      %v2560 = vpop.permute.xlu0 %2559
      %v2561 = vsel %vm1168, %v2550, %v2552
      %v2562 = vsel %vm1168, %v2552, %v2554
      %v2563 = vsel %vm1168, %v2556, %v2558
      %v2564 = vsel %vm1168, %v2558, %v2560
      %v2572 = vsel %vm1556, %v2547, 0
      %v2575 = vsel %vm1556, %v2548, 0
      %2577 = vmatpush.bf16.msra.mxu0 0
      %2578 = vmatpush.bf16.msra.mxu0 0
      %2579 = vmatpush.bf16.msra.mxu0 0
      %2580 = vmatpush.bf16.msra.mxu0 0
      %2581 = vmatpush.bf16.msra.mxu0 0
      %2582 = vmatpush.bf16.msra.mxu0 0
      %2583 = vmatpush.bf16.msra.mxu0 %v2563
      %2584 = vmatpush.bf16.msra.mxu0 %v2561
      %2585 = vmatmul.bf16.gmra.mxu0 %v2572
      %v2586 = vpop.f32.mrf.mxu0
      %v2587 = vadd.f32 0.0, %v2586
      %v2588 = vpop.f32.mrf.mxu0
      %v2589 = vadd.f32 0.0, %v2588
      %2590 = vmatmul.bf16.gmra.mxu0 %v2575
      %v2591 = vpop.f32.mrf.mxu0
      %v2592 = vadd.f32 0.0, %v2591
      %v2593 = vpop.f32.mrf.mxu0
      %v2594 = vadd.f32 0.0, %v2593
      %2595 = vdwg.mxu0
      %2596 = vmatpush.bf16.msra.mxu0 0
      %2597 = vmatpush.bf16.msra.mxu0 0
      %2598 = vmatpush.bf16.msra.mxu0 0
      %2599 = vmatpush.bf16.msra.mxu0 0
      %2600 = vmatpush.bf16.msra.mxu0 0
      %2601 = vmatpush.bf16.msra.mxu0 0
      %2602 = vmatpush.bf16.msra.mxu0 %v2564
      %2603 = vmatpush.bf16.msra.mxu0 %v2562
      %2604 = vmatmul.bf16.gmra.mxu0 %v2572
      %v2605 = vpop.f32.mrf.mxu0
      %v2606 = vadd.f32 0.0, %v2605
      %v2607 = vpop.f32.mrf.mxu0
      %v2608 = vadd.f32 0.0, %v2607
      %2609 = vmatmul.bf16.gmra.mxu0 %v2575
      %v2610 = vpop.f32.mrf.mxu0
      %v2611 = vadd.f32 0.0, %v2610
      %v2612 = vpop.f32.mrf.mxu0
      %v2613 = vadd.f32 0.0, %v2612
      %2614 = vdwg.mxu0
      %2615 = vmatpush.bf16.msra.mxu0 0
      %2616 = vmatpush.bf16.msra.mxu0 0
      %2617 = vmatpush.bf16.msra.mxu0 0
      %2618 = vmatpush.bf16.msra.mxu0 0
      %2619 = vmatpush.bf16.msra.mxu0 0
      %2620 = vmatpush.bf16.msra.mxu0 0
      %2621 = vmatpush.bf16.msra.mxu0 %v2560
      %2622 = vmatpush.bf16.msra.mxu0 %v2554
      %2623 = vmatmul.bf16.gmra.mxu0 %v2572
      %v2624 = vpop.f32.mrf.mxu0
      %v2625 = vadd.f32 0.0, %v2624
      %v2626 = vpop.f32.mrf.mxu0
      %v2627 = vadd.f32 0.0, %v2626
      %2628 = vmatmul.bf16.gmra.mxu0 %v2575
      %v2629 = vpop.f32.mrf.mxu0
      %v2630 = vadd.f32 0.0, %v2629
      %v2631 = vpop.f32.mrf.mxu0
      %v2632 = vadd.f32 0.0, %v2631
      %2633 = vdwg.mxu0
      %v2634 = vadd.f32 %v2522, %v2587
      %v2635 = vadd.f32 %v2523, %v2606
      %v2636 = vadd.f32 %v2524, %v2625
      %v2637 = vadd.f32 %v2525, %v2589
      %v2638 = vadd.f32 %v2526, %v2608
      %v2639 = vadd.f32 %v2527, %v2627
      %v2640 = vadd.f32 %v2528, %v2592
      %v2641 = vadd.f32 %v2529, %v2611
      %v2642 = vadd.f32 %v2530, %v2630
      %v2643 = vadd.f32 %v2531, %v2594
      %v2644 = vadd.f32 %v2532, %v2613
      %v2645 = vadd.f32 %v2533, %v2632
      %s2646 = scalar_lea.vmem %s2, 112
      %v2647 = vld [vmem:[%s2646] sm:$0xf]
      %v2648 = vld [vmem:[%s2646 + $0x4] sm:$0xf]
      %v2649 = vld [vmem:[%s2646 + $0x8] sm:$0xf]
      %v2650 = vld [vmem:[%s2646 + $0xc] sm:$0xf]
      %v2655 = vunpack.c.l.b16 %v2647
      %v2656 = vunpack.c.l.b16 %v2648
      %v2657 = vunpack.c.l.b16 %v2649
      %v2658 = vunpack.c.l.b16 %v2650
      %v2659 = vpack.c.b16 %v2656, %v2655
      %v2660 = vpack.c.b16 %v2658, %v2657
      %2661 = vrot.lane.b32.xlu0 %v1916, 91
      %v2662 = vpop.permute.xlu0 %2661
      %2663 = vrot.lane.b32.xlu0 %v1917, 91
      %v2664 = vpop.permute.xlu0 %2663
      %2665 = vrot.lane.b32.xlu0 %v1918, 91
      %v2666 = vpop.permute.xlu0 %2665
      %2667 = vrot.lane.b32.xlu0 %v1919, 91
      %v2668 = vpop.permute.xlu0 %2667
      %2669 = vrot.lane.b32.xlu0 %v1920, 91
      %v2670 = vpop.permute.xlu0 %2669
      %2671 = vrot.lane.b32.xlu0 %v1921, 91
      %v2672 = vpop.permute.xlu0 %2671
      %v2673 = vsel %vm1303, %v2662, %v2664
      %v2674 = vsel %vm1303, %v2664, %v2666
      %v2675 = vsel %vm1303, %v2668, %v2670
      %v2676 = vsel %vm1303, %v2670, %v2672
      %v2684 = vsel %vm1556, %v2659, 0
      %v2687 = vsel %vm1556, %v2660, 0
      %2689 = vmatpush.bf16.msra.mxu0 0
      %2690 = vmatpush.bf16.msra.mxu0 0
      %2691 = vmatpush.bf16.msra.mxu0 0
      %2692 = vmatpush.bf16.msra.mxu0 0
      %2693 = vmatpush.bf16.msra.mxu0 0
      %2694 = vmatpush.bf16.msra.mxu0 0
      %2695 = vmatpush.bf16.msra.mxu0 %v2675
      %2696 = vmatpush.bf16.msra.mxu0 %v2673
      %2697 = vmatmul.bf16.gmra.mxu0 %v2684
      %v2698 = vpop.f32.mrf.mxu0
      %v2699 = vadd.f32 0.0, %v2698
      %v2700 = vpop.f32.mrf.mxu0
      %v2701 = vadd.f32 0.0, %v2700
      %2702 = vmatmul.bf16.gmra.mxu0 %v2687
      %v2703 = vpop.f32.mrf.mxu0
      %v2704 = vadd.f32 0.0, %v2703
      %v2705 = vpop.f32.mrf.mxu0
      %v2706 = vadd.f32 0.0, %v2705
      %2707 = vdwg.mxu0
      %2708 = vmatpush.bf16.msra.mxu0 0
      %2709 = vmatpush.bf16.msra.mxu0 0
      %2710 = vmatpush.bf16.msra.mxu0 0
      %2711 = vmatpush.bf16.msra.mxu0 0
      %2712 = vmatpush.bf16.msra.mxu0 0
      %2713 = vmatpush.bf16.msra.mxu0 0
      %2714 = vmatpush.bf16.msra.mxu0 %v2676
      %2715 = vmatpush.bf16.msra.mxu0 %v2674
      %2716 = vmatmul.bf16.gmra.mxu0 %v2684
      %v2717 = vpop.f32.mrf.mxu0
      %v2718 = vadd.f32 0.0, %v2717
      %v2719 = vpop.f32.mrf.mxu0
      %v2720 = vadd.f32 0.0, %v2719
      %2721 = vmatmul.bf16.gmra.mxu0 %v2687
      %v2722 = vpop.f32.mrf.mxu0
      %v2723 = vadd.f32 0.0, %v2722
      %v2724 = vpop.f32.mrf.mxu0
      %v2725 = vadd.f32 0.0, %v2724
      %2726 = vdwg.mxu0
      %2727 = vmatpush.bf16.msra.mxu0 0
      %2728 = vmatpush.bf16.msra.mxu0 0
      %2729 = vmatpush.bf16.msra.mxu0 0
      %2730 = vmatpush.bf16.msra.mxu0 0
      %2731 = vmatpush.bf16.msra.mxu0 0
      %2732 = vmatpush.bf16.msra.mxu0 0
      %2733 = vmatpush.bf16.msra.mxu0 %v2672
      %2734 = vmatpush.bf16.msra.mxu0 %v2666
      %2735 = vmatmul.bf16.gmra.mxu0 %v2684
      %v2736 = vpop.f32.mrf.mxu0
      %v2737 = vadd.f32 0.0, %v2736
      %v2738 = vpop.f32.mrf.mxu0
      %v2739 = vadd.f32 0.0, %v2738
      %2740 = vmatmul.bf16.gmra.mxu0 %v2687
      %v2741 = vpop.f32.mrf.mxu0
      %v2742 = vadd.f32 0.0, %v2741
      %v2743 = vpop.f32.mrf.mxu0
      %v2744 = vadd.f32 0.0, %v2743
      %2745 = vdwg.mxu0
      %v2746 = vadd.f32 %v2634, %v2699
      %v2747 = vadd.f32 %v2635, %v2718
      %v2748 = vadd.f32 %v2636, %v2737
      %v2749 = vadd.f32 %v2637, %v2701
      %v2750 = vadd.f32 %v2638, %v2720
      %v2751 = vadd.f32 %v2639, %v2739
      %v2752 = vadd.f32 %v2640, %v2704
      %v2753 = vadd.f32 %v2641, %v2723
      %v2754 = vadd.f32 %v2642, %v2742
      %v2755 = vadd.f32 %v2643, %v2706
      %v2756 = vadd.f32 %v2644, %v2725
      %v2757 = vadd.f32 %v2645, %v2744
      %s2758 = scalar_lea.vmem %s2, 128
      %v2759 = vld [vmem:[%s2758] sm:$0xf]
      %v2760 = vld [vmem:[%s2758 + $0x4] sm:$0xf]
      %v2761 = vld [vmem:[%s2758 + $0x8] sm:$0xf]
      %v2762 = vld [vmem:[%s2758 + $0xc] sm:$0xf]
      %v2767 = vunpack.c.l.b16 %v2759
      %v2768 = vunpack.c.l.b16 %v2760
      %v2769 = vunpack.c.l.b16 %v2761
      %v2770 = vunpack.c.l.b16 %v2762
      %v2771 = vpack.c.b16 %v2768, %v2767
      %v2772 = vpack.c.b16 %v2770, %v2769
      %2773 = vrot.lane.b32.xlu0 %v1916, 90
      %v2774 = vpop.permute.xlu0 %2773
      %2775 = vrot.lane.b32.xlu0 %v1917, 90
      %v2776 = vpop.permute.xlu0 %2775
      %2777 = vrot.lane.b32.xlu0 %v1918, 90
      %v2778 = vpop.permute.xlu0 %2777
      %2779 = vrot.lane.b32.xlu0 %v1919, 90
      %v2780 = vpop.permute.xlu0 %2779
      %2781 = vrot.lane.b32.xlu0 %v1920, 90
      %v2782 = vpop.permute.xlu0 %2781
      %2783 = vrot.lane.b32.xlu0 %v1921, 90
      %v2784 = vpop.permute.xlu0 %2783
      %v2785 = vsel %vm1438, %v2774, %v2776
      %v2786 = vsel %vm1438, %v2776, %v2778
      %v2787 = vsel %vm1438, %v2780, %v2782
      %v2788 = vsel %vm1438, %v2782, %v2784
      %v2796 = vsel %vm1556, %v2771, 0
      %v2799 = vsel %vm1556, %v2772, 0
      %2801 = vmatpush.bf16.msra.mxu0 0
      %2802 = vmatpush.bf16.msra.mxu0 0
      %2803 = vmatpush.bf16.msra.mxu0 0
      %2804 = vmatpush.bf16.msra.mxu0 0
      %2805 = vmatpush.bf16.msra.mxu0 0
      %2806 = vmatpush.bf16.msra.mxu0 0
      %2807 = vmatpush.bf16.msra.mxu0 %v2787
      %2808 = vmatpush.bf16.msra.mxu0 %v2785
      %2809 = vmatmul.bf16.gmra.mxu0 %v2796
      %v2810 = vpop.f32.mrf.mxu0
      %v2811 = vadd.f32 0.0, %v2810
      %v2812 = vpop.f32.mrf.mxu0
      %v2813 = vadd.f32 0.0, %v2812
      %2814 = vmatmul.bf16.gmra.mxu0 %v2799
      %v2815 = vpop.f32.mrf.mxu0
      %v2816 = vadd.f32 0.0, %v2815
      %v2817 = vpop.f32.mrf.mxu0
      %v2818 = vadd.f32 0.0, %v2817
      %2819 = vdwg.mxu0
      %2820 = vmatpush.bf16.msra.mxu0 0
      %2821 = vmatpush.bf16.msra.mxu0 0
      %2822 = vmatpush.bf16.msra.mxu0 0
      %2823 = vmatpush.bf16.msra.mxu0 0
      %2824 = vmatpush.bf16.msra.mxu0 0
      %2825 = vmatpush.bf16.msra.mxu0 0
      %2826 = vmatpush.bf16.msra.mxu0 %v2788
      %2827 = vmatpush.bf16.msra.mxu0 %v2786
      %2828 = vmatmul.bf16.gmra.mxu0 %v2796
      %v2829 = vpop.f32.mrf.mxu0
      %v2830 = vadd.f32 0.0, %v2829
      %v2831 = vpop.f32.mrf.mxu0
      %v2832 = vadd.f32 0.0, %v2831
      %2833 = vmatmul.bf16.gmra.mxu0 %v2799
      %v2834 = vpop.f32.mrf.mxu0
      %v2835 = vadd.f32 0.0, %v2834
      %v2836 = vpop.f32.mrf.mxu0
      %v2837 = vadd.f32 0.0, %v2836
      %2838 = vdwg.mxu0
      %2839 = vmatpush.bf16.msra.mxu0 0
      %2840 = vmatpush.bf16.msra.mxu0 0
      %2841 = vmatpush.bf16.msra.mxu0 0
      %2842 = vmatpush.bf16.msra.mxu0 0
      %2843 = vmatpush.bf16.msra.mxu0 0
      %2844 = vmatpush.bf16.msra.mxu0 0
      %2845 = vmatpush.bf16.msra.mxu0 %v2784
      %2846 = vmatpush.bf16.msra.mxu0 %v2778
      %2847 = vmatmul.bf16.gmra.mxu0 %v2796
      %v2848 = vpop.f32.mrf.mxu0
      %v2849 = vadd.f32 0.0, %v2848
      %v2850 = vpop.f32.mrf.mxu0
      %v2851 = vadd.f32 0.0, %v2850
      %2852 = vmatmul.bf16.gmra.mxu0 %v2799
      %v2853 = vpop.f32.mrf.mxu0
      %v2854 = vadd.f32 0.0, %v2853
      %v2855 = vpop.f32.mrf.mxu0
      %v2856 = vadd.f32 0.0, %v2855
      %2857 = vdwg.mxu0
      %v2858 = vadd.f32 %v2746, %v2811
      %v2859 = vadd.f32 %v2747, %v2830
      %v2860 = vadd.f32 %v2748, %v2849
      %v2861 = vadd.f32 %v2749, %v2813
      %v2862 = vadd.f32 %v2750, %v2832
      %v2863 = vadd.f32 %v2751, %v2851
      %v2864 = vadd.f32 %v2752, %v2816
      %v2865 = vadd.f32 %v2753, %v2835
      %v2866 = vadd.f32 %v2754, %v2854
      %v2867 = vadd.f32 %v2755, %v2818
      %v2868 = vadd.f32 %v2756, %v2837
      %v2869 = vadd.f32 %v2757, %v2856
      %v2870 = vmul.f32 %v2858, %v1543
      %v2871 = vmul.f32 %v2859, %v1544
      %v2872 = vmul.f32 %v2860, %v1545
      %v2873 = vmul.f32 %v2861, %v1543
      %v2874 = vmul.f32 %v2862, %v1544
      %v2875 = vmul.f32 %v2863, %v1545
      %v2876 = vadd.f32 %v2870, %v2871
      %v2877 = vsel %vm1556, %v2872, 0.0
      %v2878 = vadd.f32 %v2876, %v2877
      %v2879 = vadd.f32 %v2878, %v2873
      %v2880 = vadd.f32 %v2879, %v2874
      %v2881 = vsel %vm1556, %v2875, 0.0
      %v2882 = vadd.f32 %v2880, %v2881
      %2883 = vadd.xlane.f32.xlu0 %v2882
      %v2884 = vpop.xlane.xlu0 %2883
      %v2885 = vrot.slane %v2884, 4
      %v2886 = vadd.f32 %v2884, %v2885
      %v2887 = vrot.slane %v2886, 2
      %v2888 = vadd.f32 %v2886, %v2887
      %v2889 = vrot.slane %v2888, 1
      %v2890 = vadd.f32 %v2888, %v2889
      %s2891 = vtos %v2890
      %s2892 = smul.f32 %s2891, 0.00024414063
      %v2893 = vstv %s2892
      %v2894 = vsub.f32 %v2858, %v2893
      %v2895 = vsub.f32 %v2859, %v2893
      %v2896 = vsub.f32 %v2860, %v2893
      %v2897 = vsub.f32 %v2861, %v2893
      %v2898 = vsub.f32 %v2862, %v2893
      %v2899 = vsub.f32 %v2863, %v2893
      %v2900 = vmul.f32 %v2894, %v2894
      %v2901 = vmul.f32 %v2895, %v2895
      %v2902 = vmul.f32 %v2896, %v2896
      %v2903 = vmul.f32 %v2897, %v2897
      %v2904 = vmul.f32 %v2898, %v2898
      %v2905 = vmul.f32 %v2899, %v2899
      %v2906 = vmul.f32 %v2900, %v1543
      %v2907 = vmul.f32 %v2901, %v1544
      %v2908 = vmul.f32 %v2902, %v1545
      %v2909 = vmul.f32 %v2903, %v1543
      %v2910 = vmul.f32 %v2904, %v1544
      %v2911 = vmul.f32 %v2905, %v1545
      %v2912 = vadd.f32 %v2906, %v2907
      %v2913 = vsel %vm1556, %v2908, 0.0
      %v2914 = vadd.f32 %v2912, %v2913
      %v2915 = vadd.f32 %v2914, %v2909
      %v2916 = vadd.f32 %v2915, %v2910
      %v2917 = vsel %vm1556, %v2911, 0.0
      %v2918 = vadd.f32 %v2916, %v2917
      %2919 = vadd.xlane.f32.xlu0 %v2918
      %v2920 = vpop.xlane.xlu0 %2919
      %v2921 = vrot.slane %v2920, 4
      %v2922 = vadd.f32 %v2920, %v2921
      %v2923 = vrot.slane %v2922, 2
      %v2924 = vadd.f32 %v2922, %v2923
      %v2925 = vrot.slane %v2924, 1
      %v2926 = vadd.f32 %v2924, %v2925
      %s2927 = vtos %v2926
      %s2928 = smul.f32 %s2927, 0.00024414063
      %s2929 = sadd.f32 %s2928, 1e-05
      %v2930 = vstv %s2929
      %v2931 = vrsqrt.pop %v2930
      %v2932 = vmul.f32 %v2931, %v2930
      %v2933 = vmul.f32 %v2932, %v2931
      %v2934 = vmul.f32 0.5, %v2933
      %v2935 = vsub.f32 1.5, %v2934
      %v2936 = vmul.f32 %v2931, %v2935
      %vm2937 = vweird.f32 %v2930
      %vm2938 = vweird.f32 %v2931
      %vm2939 = vmor %vm2937, %vm2938
      %v2940 = vsel %vm2939, %v2931, %v2936
      %s2941 = vtos %v2940
      %v2942 = vstv %s2941
      %v2943 = vmul.f32 %v2894, %v2942
      %v2944 = vmul.f32 %v2895, %v2942
      %v2945 = vmul.f32 %v2896, %v2942
      %v2946 = vmul.f32 %v2897, %v2942
      %v2947 = vmul.f32 %v2898, %v2942
      %v2948 = vmul.f32 %v2899, %v2942
      %v2949 = vld [vmem:[%s6] sm:$0xff]
      %v2950 = vld [vmem:[%s6 + $0x8] sm:$0xff]
      %2952 = vset.pattern.permute.xlu0 0
      %2953 = vperm.xlu0 %2952, %v2949
      %v2954 = vpop.permute.xlu0 %2953
      %2957 = vset.pattern.permute.xlu0 0
      %2958 = vperm.xlu0 %2957, %v2950
      %v2959 = vpop.permute.xlu0 %2958
      %v2961 = vmul.f32 %v2943, %v2954
      %v2962 = vmul.f32 %v2944, %v2954
      %v2963 = vmul.f32 %v2945, %v2954
      %v2964 = vmul.f32 %v2946, %v2959
      %v2965 = vmul.f32 %v2947, %v2959
      %v2966 = vmul.f32 %v2948, %v2959
      %v2967 = vld [vmem:[%s7] sm:$0xff]
      %v2968 = vld [vmem:[%s7 + $0x8] sm:$0xff]
      %2970 = vset.pattern.permute.xlu0 0
      %2971 = vperm.xlu0 %2970, %v2967
      %v2972 = vpop.permute.xlu0 %2971
      %2975 = vset.pattern.permute.xlu0 0
      %2976 = vperm.xlu0 %2975, %v2968
      %v2977 = vpop.permute.xlu0 %2976
      %v2979 = vadd.f32 %v2961, %v2972
      %v2980 = vadd.f32 %v2962, %v2972
      %v2981 = vadd.f32 %v2963, %v2972
      %v2982 = vadd.f32 %v2964, %v2977
      %v2983 = vadd.f32 %v2965, %v2977
      %v2984 = vadd.f32 %v2966, %v2977
      %v2985 = vmax.f32 %v2979, 0.0
      %v2986 = vmax.f32 %v2980, 0.0
      %v2987 = vmax.f32 %v2981, 0.0
      %v2988 = vmax.f32 %v2982, 0.0
      %v2989 = vmax.f32 %v2983, 0.0
      %v2990 = vmax.f32 %v2984, 0.0
      %2991 = vst [vmem:[%s305] sm:$0xff] %v2985
      %2992 = vst [vmem:[%s305 + $0x8] sm:$0xff] %v2986
      %2993 = vst.msk [vmem:[%s305 + $0x10] sm:$0xff] %vm1556, %v2987
      %2994 = vst [vmem:[%s305 + $0x18] sm:$0xff] %v2988
      %2995 = vst [vmem:[%s305 + $0x20] sm:$0xff] %v2989
      %2996 = vst.msk [vmem:[%s305 + $0x28] sm:$0xff] %vm1556, %v2990
      %v2997 = vmul.f32 %v2864, %v1543
      %v2998 = vmul.f32 %v2865, %v1544
      %v2999 = vmul.f32 %v2866, %v1545
      %v3000 = vmul.f32 %v2867, %v1543
      %v3001 = vmul.f32 %v2868, %v1544
      %v3002 = vmul.f32 %v2869, %v1545
      %v3003 = vadd.f32 %v2997, %v2998
      %v3004 = vsel %vm1556, %v2999, 0.0
      %v3005 = vadd.f32 %v3003, %v3004
      %v3006 = vadd.f32 %v3005, %v3000
      %v3007 = vadd.f32 %v3006, %v3001
      %v3008 = vsel %vm1556, %v3002, 0.0
      %v3009 = vadd.f32 %v3007, %v3008
      %3010 = vadd.xlane.f32.xlu0 %v3009
      %v3011 = vpop.xlane.xlu0 %3010
      %v3012 = vrot.slane %v3011, 4
      %v3013 = vadd.f32 %v3011, %v3012
      %v3014 = vrot.slane %v3013, 2
      %v3015 = vadd.f32 %v3013, %v3014
      %v3016 = vrot.slane %v3015, 1
      %v3017 = vadd.f32 %v3015, %v3016
      %s3018 = vtos %v3017
      %s3019 = smul.f32 %s3018, 0.00024414063
      %v3020 = vstv %s3019
      %v3021 = vsub.f32 %v2864, %v3020
      %v3022 = vsub.f32 %v2865, %v3020
      %v3023 = vsub.f32 %v2866, %v3020
      %v3024 = vsub.f32 %v2867, %v3020
      %v3025 = vsub.f32 %v2868, %v3020
      %v3026 = vsub.f32 %v2869, %v3020
      %v3027 = vmul.f32 %v3021, %v3021
      %v3028 = vmul.f32 %v3022, %v3022
      %v3029 = vmul.f32 %v3023, %v3023
      %v3030 = vmul.f32 %v3024, %v3024
      %v3031 = vmul.f32 %v3025, %v3025
      %v3032 = vmul.f32 %v3026, %v3026
      %v3033 = vmul.f32 %v3027, %v1543
      %v3034 = vmul.f32 %v3028, %v1544
      %v3035 = vmul.f32 %v3029, %v1545
      %v3036 = vmul.f32 %v3030, %v1543
      %v3037 = vmul.f32 %v3031, %v1544
      %v3038 = vmul.f32 %v3032, %v1545
      %v3039 = vadd.f32 %v3033, %v3034
      %v3040 = vsel %vm1556, %v3035, 0.0
      %v3041 = vadd.f32 %v3039, %v3040
      %v3042 = vadd.f32 %v3041, %v3036
      %v3043 = vadd.f32 %v3042, %v3037
      %v3044 = vsel %vm1556, %v3038, 0.0
      %v3045 = vadd.f32 %v3043, %v3044
      %3046 = vadd.xlane.f32.xlu0 %v3045
      %v3047 = vpop.xlane.xlu0 %3046
      %v3048 = vrot.slane %v3047, 4
      %v3049 = vadd.f32 %v3047, %v3048
      %v3050 = vrot.slane %v3049, 2
      %v3051 = vadd.f32 %v3049, %v3050
      %v3052 = vrot.slane %v3051, 1
      %v3053 = vadd.f32 %v3051, %v3052
      %s3054 = vtos %v3053
      %s3055 = smul.f32 %s3054, 0.00024414063
      %s3056 = sadd.f32 %s3055, 1e-05
      %v3057 = vstv %s3056
      %v3058 = vrsqrt.pop %v3057
      %v3059 = vmul.f32 %v3058, %v3057
      %v3060 = vmul.f32 %v3059, %v3058
      %v3061 = vmul.f32 0.5, %v3060
      %v3062 = vsub.f32 1.5, %v3061
      %v3063 = vmul.f32 %v3058, %v3062
      %vm3064 = vweird.f32 %v3057
      %vm3065 = vweird.f32 %v3058
      %vm3066 = vmor %vm3064, %vm3065
      %v3067 = vsel %vm3066, %v3058, %v3063
      %s3068 = vtos %v3067
      %v3069 = vstv %s3068
      %v3070 = vmul.f32 %v3021, %v3069
      %v3071 = vmul.f32 %v3022, %v3069
      %v3072 = vmul.f32 %v3023, %v3069
      %v3073 = vmul.f32 %v3024, %v3069
      %v3074 = vmul.f32 %v3025, %v3069
      %v3075 = vmul.f32 %v3026, %v3069
      %v3076 = vld [vmem:[%s6 + $0x10] sm:$0xff]
      %v3077 = vld [vmem:[%s6 + $0x18] sm:$0xff]
      %3079 = vset.pattern.permute.xlu0 0
      %3080 = vperm.xlu0 %3079, %v3076
      %v3081 = vpop.permute.xlu0 %3080
      %3084 = vset.pattern.permute.xlu0 0
      %3085 = vperm.xlu0 %3084, %v3077
      %v3086 = vpop.permute.xlu0 %3085
      %v3088 = vmul.f32 %v3070, %v3081
      %v3089 = vmul.f32 %v3071, %v3081
      %v3090 = vmul.f32 %v3072, %v3081
      %v3091 = vmul.f32 %v3073, %v3086
      %v3092 = vmul.f32 %v3074, %v3086
      %v3093 = vmul.f32 %v3075, %v3086
      %v3094 = vld [vmem:[%s7 + $0x10] sm:$0xff]
      %v3095 = vld [vmem:[%s7 + $0x18] sm:$0xff]
      %3097 = vset.pattern.permute.xlu0 0
      %3098 = vperm.xlu0 %3097, %v3094
      %v3099 = vpop.permute.xlu0 %3098
      %3102 = vset.pattern.permute.xlu0 0
      %3103 = vperm.xlu0 %3102, %v3095
      %v3104 = vpop.permute.xlu0 %3103
      %v3106 = vadd.f32 %v3088, %v3099
      %v3107 = vadd.f32 %v3089, %v3099
      %v3108 = vadd.f32 %v3090, %v3099
      %v3109 = vadd.f32 %v3091, %v3104
      %v3110 = vadd.f32 %v3092, %v3104
      %v3111 = vadd.f32 %v3093, %v3104
      %v3112 = vmax.f32 %v3106, 0.0
      %v3113 = vmax.f32 %v3107, 0.0
      %v3114 = vmax.f32 %v3108, 0.0
      %v3115 = vmax.f32 %v3109, 0.0
      %v3116 = vmax.f32 %v3110, 0.0
      %v3117 = vmax.f32 %v3111, 0.0
      %3118 = vst [vmem:[%s305 + $0x30] sm:$0xff] %v3112
      %3119 = vst [vmem:[%s305 + $0x38] sm:$0xff] %v3113
      %3120 = vst.msk [vmem:[%s305 + $0x40] sm:$0xff] %vm1556, %v3114
      %3121 = vst [vmem:[%s305 + $0x48] sm:$0xff] %v3115
      %3122 = vst [vmem:[%s305 + $0x50] sm:$0xff] %v3116
      %3123 = vst.msk [vmem:[%s305 + $0x58] sm:$0xff] %vm1556, %v3117
      %p3124 = scmp.lt.s32.totalorder %s19, 3
      %s3125 = scalar_select %p3124, %s19, 3
      %s3126 = smul.addr %s3125, 12
      %s3127 = smul.addr %s3126, 8
      %s3128 = scalar_lea.vmem %s8, %s3127
      // Predicated region
      $region53: #{up_forward.3} parent=51 // pred_check
        %p3129 = pneg %p210
      $region54: #{up_forward.3} parent=51 // pred_check_branch
        %3131 = sbr.rel (%p3129) target = $region56
      $region55: #{up_forward.3} parent=51 // pred_region
        _
      $region56: #{up_forward.3} parent=51 // pred_fallthru
        _
    $region52: #{up_forward.3} parent=5 // pred_fallthru
      _
    %p3132 = scmp.le.s32.totalorder 2, %s14
    // Predicated region
    $region57: #{up_forward.3} parent=5 // pred_check
      %p3133 = pneg %p3132
    $region58: #{up_forward.3} parent=5 // pred_check_branch
      %3135 = sbr.rel (%p3133) target = $region60
    $region59: #{up_forward.3} parent=5 // pred_region
      %s3136 = ssub.s32 %s14, 2
      // Predicated region
      $region61: #{up_forward.3} parent=59 // pred_check
        %p3137 = pneg %p216
      $region62: #{up_forward.3} parent=59 // pred_check_branch
        %3139 = sbr.rel (%p3137) target = $region64
      $region63: #{up_forward.3} parent=59 // pred_region
        %p3140 = scmp.lt.s32.totalorder %s20, 3
        %s3141 = scalar_select %p3140, %s20, 3
        %s3142 = smul.addr %s3141, 12
        %s3143 = smul.addr %s3142, 8
        %s3144 = scalar_lea.vmem %s8, %s3143
      $region64: #{up_forward.3} parent=59 // pred_fallthru
        _
    $region60: #{up_forward.3} parent=5 // pred_fallthru
      _
  $region6: #{up_forward.3} parent=0 // loop_footer
    %s18 = sadd.s32 1, %s14
  $region7: #{up_forward.3} parent=0 // loop_footer_branch
    %13 = sbr.rel target = $region3
  $region8: #{up_forward.3} parent=0 // loop_exit
    _

</llo_original>
